<compile_context>
chip_gen: v5e
topology: v5e:2x2
jax: 0.10.0
libtpu: 0.0.40
codegen_flags: <defaults>
</compile_context>

<pallas_src>
import numpy as np
import jax
import jax.numpy as jnp
from jax.experimental import pallas as pl
from jax.experimental.pallas import tpu as pltpu


# ------------------------------ Pallas kernel -------------------------------

def _make_fused_kernel(T, BP, H, D, num_layers, CP, offs):
    """Kernel refs: x, wslab(bf16), bslab(f32), hc0(f32), out, gx_scratch."""
    G4, G8 = 4 * H, 8 * H
    B2 = 2 * BP
    bf16 = jnp.bfloat16

    def kernel(x_ref, w_ref, b_ref, hc0_ref, out_ref, gx_sc):

        def run_layer(l):
            # whh stays resident in vregs for the whole time loop.
            whh_off = offs["whh"][l]
            whh = w_ref[whh_off:whh_off + H, 0:G8]                 # (H, 8H) bf16
            h = hc0_ref[B2 * l:B2 * (l + 1), :]                    # (2BP, H) f32
            c = hc0_ref[B2 * (num_layers + l):B2 * (num_layers + l + 1), :]
            hs_f = [None] * T
            hs_b = [None] * T
            for s in range(T):                                     # static unroll
                tb = T - 1 - s
                # fused fwd+bwd hidden matmul (fills 256-wide MXU)
                m = jnp.dot(h.astype(bf16), whh,
                            preferred_element_type=jnp.float32)    # (2BP, 8H)
                gf = m[0:BP, 0:G4] + gx_sc[s * BP:(s + 1) * BP, 0:G4]
                gb = m[BP:B2, G4:G8] + gx_sc[tb * BP:(tb + 1) * BP, G4:G8]
                gates = jnp.concatenate([gf, gb], axis=0)          # (2BP, 4H)
                sig = jax.nn.sigmoid(gates)                        # EUP, f32
                th = jnp.tanh(gates)
                i = sig[:, 0:H]
                f = sig[:, H:2 * H]
                g = th[:, 2 * H:3 * H]
                o = sig[:, 3 * H:4 * H]
                c = f * c + i * g
                h = o * jnp.tanh(c)
                hs_f[s] = h[0:BP, :]                               # fwd @ time s
                hs_b[tb] = h[BP:B2, :]                             # bwd @ time tb
            return (jnp.concatenate(hs_f, axis=0),                 # (T*BP, H) f32
                    jnp.concatenate(hs_b, axis=0))

        # --------------- layer 0 input-side gates: one big matmul -----------
        wix0 = offs["wix"][0]
        gx_sc[...] = (jnp.dot(x_ref[...].astype(bf16),
                              w_ref[wix0:wix0 + D, 0:G8],
                              preferred_element_type=jnp.float32)
                      + b_ref[0:1, 0:G8])                          # (T*BP, 8H)
        out_f, out_b = run_layer(0)

        # --------------------------- higher layers ---------------------------
        for l in range(1, num_layers):
            wix = offs["wix"][l]
            gx_sc[...] = (jnp.dot(out_f.astype(bf16),
                                  w_ref[wix:wix + H, 0:G8],
                                  preferred_element_type=jnp.float32)
                          + jnp.dot(out_b.astype(bf16),
                                    w_ref[wix + H:wix + 2 * H, 0:G8],
                                    preferred_element_type=jnp.float32)
                          + b_ref[8 * l:8 * l + 1, 0:G8])
            out_f, out_b = run_layer(l)

        # ------------------------------- head --------------------------------
        x_all = x_ref[...]                                          # (T*BP, D) f32
        inv_d = 1.0 / D
        pos_m = jnp.sum(jnp.maximum(x_all, 0.0), axis=-1, keepdims=True) * inv_d
        neg_m = jnp.sum(jnp.minimum(x_all, 0.0), axis=-1, keepdims=True) * inv_d
        # mean_d relu(o*x) == relu(o)*mean_d relu(x) + min(o,0)*mean_d min(x,0)
        dense_f = jnp.maximum(out_f, 0.0) * pos_m + jnp.minimum(out_f, 0.0) * neg_m
        dense_b = jnp.maximum(out_b, 0.0) * pos_m + jnp.minimum(out_b, 0.0) * neg_m
        we = offs["w_emb"]
        emb = jnp.maximum(
            jnp.dot(dense_f.astype(bf16), w_ref[we:we + H, 0:2 * H],
                    preferred_element_type=jnp.float32)
            + jnp.dot(dense_b.astype(bf16), w_ref[we + H:we + 2 * H, 0:2 * H],
                      preferred_element_type=jnp.float32)
            + b_ref[8 * num_layers:8 * num_layers + 1, 0:2 * H], 0.0)
        wf = offs["w_fc"]
        logits = (jnp.dot(emb.astype(bf16), w_ref[wf:wf + 2 * H, 0:CP],
                          preferred_element_type=jnp.float32)
                  + b_ref[8 * (num_layers + 1):8 * (num_layers + 1) + 1, 0:CP])
        out_ref[...] = logits.astype(out_ref.dtype)                 # lane-dense

    return kernel


# --------------------------------- wrapper -----------------------------------

def lstm_module_forward(params, in_feature, state):
    """Equivalent of LSTM.forward(in_feature, state) at inference."""
    # TODO(synk): nn.LSTM inter-layer dropout (p=0.1) is train-only; it is a
    # no-op at inference so it is intentionally not implemented.
    h0s, c0s = state                                   # (num_layers*2, B, H)
    B, T, D = in_feature.shape
    H = h0s.shape[-1]
    num_layers = len(params["lstm"])
    C = params["w_fc"].shape[-1]
    BP = ((B + 7) // 8) * 8                            # batch -> sublane group
    CP = ((C + 127) // 128) * 128                      # classes -> lane group
    G8 = 8 * H
    WCOL = -(-max(G8, CP) // 128) * 128                # common slab width

    # time-major, batch-padded input -> (T*BP, D)
    x = jnp.transpose(in_feature, (1, 0, 2))
    x = jnp.pad(x, ((0, 0), (0, BP - B), (0, 0))).reshape(T * BP, D)

    # fuse the two directions of every layer along the gate (output) dim
    wix_l, whh_l, bias_l = [], [], []
    for (fwd, bwd) in params["lstm"]:
        (wix_f, whh_f, b_f), (wix_b, whh_b, b_b) = fwd, bwd
        wix_l.append(jnp.concatenate([wix_f, wix_b], axis=1))   # (Din, 8H)
        whh_l.append(jnp.concatenate([whh_f, whh_b], axis=1))   # (H,   8H)
        bias_l.append(jnp.concatenate([b_f, b_b], axis=1))      # (1,   8H)

    # ---- one bf16 weight slab (static, 16-aligned row offsets) ----
    parts = []
    offs = {"wix": [], "whh": []}

    def _add(w):
        off = sum(p.shape[0] for p in parts)
        r, c = w.shape
        rp = -(-r // 16) * 16
        parts.append(jnp.pad(w, ((0, rp - r), (0, WCOL - c))).astype(jnp.bfloat16))
        return off

    for l in range(num_layers):
        offs["wix"].append(_add(wix_l[l]))
        offs["whh"].append(_add(whh_l[l]))
    offs["w_emb"] = _add(params["w_emb"])
    offs["w_fc"] = _add(jnp.pad(params["w_fc"], ((0, 0), (0, CP - C))))
    wslab = jnp.concatenate(parts, axis=0)

    # ---- one f32 bias slab: every bias in its own 8-row group ----
    brows = []

    def _addb(b):
        brows.append(jnp.pad(b, ((0, 8 - b.shape[0]), (0, WCOL - b.shape[1]))))

    for l in range(num_layers):
        _addb(bias_l[l])
    _addb(params["b_emb"])
    _addb(jnp.pad(params["b_fc"], ((0, 0), (0, CP - C))))
    bslab = jnp.concatenate(brows, axis=0)              # (8*(L+2), WCOL)

    # ---- one f32 h0/c0 slab: per layer [fwd rows; bwd rows], batch padded ----
    h0p = jnp.pad(h0s, ((0, 0), (0, BP - B), (0, 0)))
    c0p = jnp.pad(c0s, ((0, 0), (0, BP - B), (0, 0)))
    hc0 = jnp.concatenate([h0p.reshape(num_layers * 2 * BP, H),
                           c0p.reshape(num_layers * 2 * BP, H)], axis=0)

    kernel = _make_fused_kernel(T, BP, H, D, num_layers, CP, offs)
    out = pl.pallas_call(
        kernel,
        out_shape=jax.ShapeDtypeStruct((T * BP, CP), jnp.float32),
        grid_spec=pltpu.PrefetchScalarGridSpec(
            num_scalar_prefetch=0,
            grid=(1,),
            in_specs=[pl.BlockSpec(x.shape, lambda i: (0, 0)),
                      pl.BlockSpec(wslab.shape, lambda i: (0, 0)),
                      pl.BlockSpec(bslab.shape, lambda i: (0, 0)),
                      pl.BlockSpec(hc0.shape, lambda i: (0, 0))],
            out_specs=pl.BlockSpec((T * BP, CP), lambda i: (0, 0)),
            scratch_shapes=[pltpu.VMEM((T * BP, G8), jnp.float32)],
        ),
        compiler_params=pltpu.CompilerParams(
            dimension_semantics=("arbitrary",)),
    )(x, wslab, bslab, hc0)

    out = out.reshape(T, BP, CP)[:, :B, :C]             # drop batch/class pad
    return jnp.transpose(out, (1, 0, 2))                # (B, T, n_classes)


# ----------------------------- parameter setup ------------------------------

def init_params(key, input_size, hidden_size, num_layers, n_classes):
    H = hidden_size
    bound = 1.0 / np.sqrt(H)

    def unif(k, shape):
        return jax.random.uniform(k, shape, jnp.float32, -bound, bound)

    params = {"lstm": []}
    for l in range(num_layers):
        d_in = input_size if l == 0 else 2 * H
        layer = []
        for _direction in range(2):
            key, k1, k2, k3, k4 = jax.random.split(key, 5)
            w_ih = unif(k1, (4 * H, d_in))            # PyTorch layout (4H, Din)
            w_hh = unif(k2, (4 * H, H))
            b_ih = unif(k3, (4 * H,))
            b_hh = unif(k4, (4 * H,))
            # stored transposed for x @ W; biases folded together
            layer.append((w_ih.T, w_hh.T, (b_ih + b_hh).reshape(1, 4 * H)))
        params["lstm"].append(tuple(layer))

    key, k1, k2, k3, k4 = jax.random.split(key, 5)
    params["w_emb"] = unif(k1, (2 * H, 2 * H))        # (in, out) layout
    params["b_emb"] = unif(k2, (1, 2 * H))
    params["w_fc"] = unif(k3, (2 * H, n_classes))
    params["b_fc"] = unif(k4, (1, n_classes))
    return params


# ---------------------------- pure-JAX reference ----------------------------

def reference_forward(params, in_feature, state):
    h0s, c0s = state
    x = jnp.transpose(in_feature, (1, 0, 2))          # (T, B, D)

    def run_dir(p, xs, h0, c0):
        w_ih, w_hh, b = p

        def step(carry, xt):
            h, c = carry
            g = xt @ w_ih + h @ w_hh + b[0]
            i, f, gg, o = jnp.split(g, 4, axis=-1)
            i = jax.nn.sigmoid(i)
            f = jax.nn.sigmoid(f)
            gg = jnp.tanh(gg)
            o = jax.nn.sigmoid(o)
            c = f * c + i * gg
            h = o * jnp.tanh(c)
            return (h, c), h

        _, hs = jax.lax.scan(step, (h0, c0), xs)
        return hs

    layer_in = x
    for l, (fwd, bwd) in enumerate(params["lstm"]):
        out_f = run_dir(fwd, layer_in, h0s[2 * l], c0s[2 * l])
        out_b = run_dir(bwd, layer_in[::-1], h0s[2 * l + 1], c0s[2 * l + 1])[::-1]
        layer_in = jnp.concatenate([out_f, out_b], axis=-1)

    out = layer_in                                    # (T, B, 2H)
    outer = out[..., :, None] * x[..., None, :]       # (T, B, 2H, D)
    dense = jnp.mean(jax.nn.relu(outer), axis=-1)
    emb = jax.nn.relu(dense @ params["w_emb"] + params["b_emb"][0])
    logits = emb @ params["w_fc"] + params["b_fc"][0]
    return jnp.transpose(logits, (1, 0, 2))


# ----------------------------------- main ------------------------------------

if __name__ == "__main__":
    INPUT_SIZE = 32
    HIDDEN = 32
    NUM_LAYERS = 2
    N_CLASSES = 5
    B, T = 2, 8

    key = jax.random.PRNGKey(0)
    key, pkey, xkey = jax.random.split(key, 3)
    params = init_params(pkey, INPUT_SIZE, HIDDEN, NUM_LAYERS, N_CLASSES)

    x = jax.random.normal(xkey, (B, T, INPUT_SIZE), jnp.float32)
    # init_hidden: zeros, shape (num_layers * num_directions, B, H)
    h0 = jnp.zeros((NUM_LAYERS * 2, B, HIDDEN), jnp.float32)
    c0 = jnp.zeros((NUM_LAYERS * 2, B, HIDDEN), jnp.float32)

    out = jax.jit(lstm_module_forward)(params, x, (h0, c0))
    out = jax.block_until_ready(out)
    assert out.shape == (B, T, N_CLASSES), out.shape

    ref = reference_forward(params, x, (h0, c0))
    np.testing.assert_allclose(np.asarray(out), np.asarray(ref),
                               rtol=5e-2, atol=5e-2)

    print("KERNEL_OK")
</pallas_src>

<mosaic_0001>
module attributes {stable_mosaic.version = 11 : i64} {
  func.func @kernel(%arg0: i32, %arg1: memref<64x32xf32, #tpu.memory_space<vmem>>, %arg2: memref<288x256xbf16, #tpu.memory_space<vmem>>, %arg3: memref<32x256xf32, #tpu.memory_space<vmem>>, %arg4: memref<64x32xf32, #tpu.memory_space<vmem>>, %arg5: memref<64x128xf32, #tpu.memory_space<vmem>>, %arg6: memref<64x256xf32, #tpu.memory_space<vmem>>) attributes {dimension_semantics = [#tpu.dimension_semantics<arbitrary>], iteration_bounds = array<i64: 1>, scalar_prefetch = 0 : i64, scratch_operands = 1 : i64, tpu.core_type = #tpu.core_type<tc>, window_params = [{pipeline_mode = #tpu.pipeline_mode<synchronous>, transform_indices = @transform_0, window_bounds = array<i64: 64, 32>}, {pipeline_mode = #tpu.pipeline_mode<synchronous>, transform_indices = @transform_1, window_bounds = array<i64: 288, 256>}, {pipeline_mode = #tpu.pipeline_mode<synchronous>, transform_indices = @transform_2, window_bounds = array<i64: 32, 256>}, {pipeline_mode = #tpu.pipeline_mode<synchronous>, transform_indices = @transform_3, window_bounds = array<i64: 64, 32>}, {pipeline_mode = #tpu.pipeline_mode<synchronous>, transform_indices = @transform_4, window_bounds = array<i64: 64, 128>}]} {
    %c0 = arith.constant 0 : index
    %c0_0 = arith.constant 0 : index
    %0 = vector.load %arg1[%c0, %c0_0] : memref<64x32xf32, #tpu.memory_space<vmem>>, vector<64x32xf32>
    %1 = arith.truncf %0 : vector<64x32xf32> to vector<64x32xbf16>
    %c0_1 = arith.constant 0 : index
    %c0_2 = arith.constant 0 : index
    %2 = vector.load %arg2[%c0_1, %c0_2] : memref<288x256xbf16, #tpu.memory_space<vmem>>, vector<32x256xbf16>
    %cst = arith.constant dense<0.000000e+00> : vector<64x256xf32>
    %3 = tpu.matmul %1, %2, %cst {dimension_numbers = #tpu.dot_dimension_numbers<[1], [0], [0], [1], [0, 0, 1, 1], [], []>} : vector<64x32xbf16>, vector<32x256xbf16>, vector<64x256xf32> -> vector<64x256xf32>
    %c0_3 = arith.constant 0 : index
    %c0_4 = arith.constant 0 : index
    %4 = vector.load %arg3[%c0_3, %c0_4] : memref<32x256xf32, #tpu.memory_space<vmem>>, vector<1x256xf32>
    %5 = vector.broadcast %4 : vector<1x256xf32> to vector<64x256xf32>
    %6 = arith.addf %3, %5 : vector<64x256xf32>
    %c0_5 = arith.constant 0 : index
    %c0_6 = arith.constant 0 : index
    %7 = vector.load %arg6[%c0_5, %c0_6] : memref<64x256xf32, #tpu.memory_space<vmem>>, vector<64x256xf32>
    tpu.vector_store %arg6[%c0_5, %c0_6], %6 {strides = array<i32>} : memref<64x256xf32, #tpu.memory_space<vmem>>, vector<64x256xf32>,
    %c32 = arith.constant 32 : index
    %c0_7 = arith.constant 0 : index
    %8 = vector.load %arg2[%c32, %c0_7] : memref<288x256xbf16, #tpu.memory_space<vmem>>, vector<32x256xbf16>
    %c0_8 = arith.constant 0 : index
    %c0_9 = arith.constant 0 : index
    %9 = vector.load %arg4[%c0_8, %c0_9] : memref<64x32xf32, #tpu.memory_space<vmem>>, vector<16x32xf32>
    %c32_10 = arith.constant 32 : index
    %c0_11 = arith.constant 0 : index
    %10 = vector.load %arg4[%c32_10, %c0_11] : memref<64x32xf32, #tpu.memory_space<vmem>>, vector<16x32xf32>
    %11 = arith.truncf %9 : vector<16x32xf32> to vector<16x32xbf16>
    %cst_12 = arith.constant dense<0.000000e+00> : vector<16x256xf32>
    %12 = tpu.matmul %11, %8, %cst_12 {dimension_numbers = #tpu.dot_dimension_numbers<[1], [0], [0], [1], [0, 0, 1, 1], [], []>} : vector<16x32xbf16>, vector<32x256xbf16>, vector<16x256xf32> -> vector<16x256xf32>
    %13 = vector.extract_strided_slice %12 {offsets = [0, 0], sizes = [8, 128], strides = [1, 1]} : vector<16x256xf32> to vector<8x128xf32>
    %c0_13 = arith.constant 0 : index
    %c0_14 = arith.constant 0 : index
    %14 = vector.load %arg6[%c0_13, %c0_14] : memref<64x256xf32, #tpu.memory_space<vmem>>, vector<8x128xf32>
    %15 = arith.addf %13, %14 : vector<8x128xf32>
    %16 = vector.extract_strided_slice %12 {offsets = [8, 128], sizes = [8, 128], strides = [1, 1]} : vector<16x256xf32> to vector<8x128xf32>
    %c56 = arith.constant 56 : index
    %c128 = arith.constant 128 : index
    %17 = vector.load %arg6[%c56, %c128] : memref<64x256xf32, #tpu.memory_space<vmem>>, vector<8x128xf32>
    %18 = arith.addf %16, %17 : vector<8x128xf32>
    %19 = tpu.concatenate %15, %18 in 0 : vector<8x128xf32>, vector<8x128xf32> -> vector<16x128xf32>
    %20 = arith.negf %19 : vector<16x128xf32>
    %21 = math.exp %20 : vector<16x128xf32>
    %cst_15 = arith.constant 1.000000e+00 : f32
    %22 = vector.broadcast %cst_15 : f32 to vector<16x128xf32>
    %23 = arith.addf %22, %21 : vector<16x128xf32>
    %24 = arith.divf %22, %23 : vector<16x128xf32>
    %25 = math.tanh %19 : vector<16x128xf32>
    %26 = vector.extract_strided_slice %24 {offsets = [0, 0], sizes = [16, 32], strides = [1, 1]} : vector<16x128xf32> to vector<16x32xf32>
    %27 = vector.extract_strided_slice %24 {offsets = [0, 32], sizes = [16, 32], strides = [1, 1]} : vector<16x128xf32> to vector<16x32xf32>
    %28 = vector.extract_strided_slice %25 {offsets = [0, 64], sizes = [16, 32], strides = [1, 1]} : vector<16x128xf32> to vector<16x32xf32>
    %29 = vector.extract_strided_slice %24 {offsets = [0, 96], sizes = [16, 32], strides = [1, 1]} : vector<16x128xf32> to vector<16x32xf32>
    %30 = arith.mulf %27, %10 : vector<16x32xf32>
    %31 = arith.mulf %26, %28 : vector<16x32xf32>
    %32 = arith.addf %30, %31 : vector<16x32xf32>
    %33 = math.tanh %32 : vector<16x32xf32>
    %34 = arith.mulf %29, %33 : vector<16x32xf32>
    %35 = vector.extract_strided_slice %34 {offsets = [0, 0], sizes = [8, 32], strides = [1, 1]} : vector<16x32xf32> to vector<8x32xf32>
    %36 = vector.extract_strided_slice %34 {offsets = [8, 0], sizes = [8, 32], strides = [1, 1]} : vector<16x32xf32> to vector<8x32xf32>
    %37 = arith.truncf %34 : vector<16x32xf32> to vector<16x32xbf16>
    %cst_16 = arith.constant dense<0.000000e+00> : vector<16x256xf32>
    %38 = tpu.matmul %37, %8, %cst_16 {dimension_numbers = #tpu.dot_dimension_numbers<[1], [0], [0], [1], [0, 0, 1, 1], [], []>} : vector<16x32xbf16>, vector<32x256xbf16>, vector<16x256xf32> -> vector<16x256xf32>
    %39 = vector.extract_strided_slice %38 {offsets = [0, 0], sizes = [8, 128], strides = [1, 1]} : vector<16x256xf32> to vector<8x128xf32>
    %c8 = arith.constant 8 : index
    %c0_17 = arith.constant 0 : index
    %40 = vector.load %arg6[%c8, %c0_17] : memref<64x256xf32, #tpu.memory_space<vmem>>, vector<8x128xf32>
    %41 = arith.addf %39, %40 : vector<8x128xf32>
    %42 = vector.extract_strided_slice %38 {offsets = [8, 128], sizes = [8, 128], strides = [1, 1]} : vector<16x256xf32> to vector<8x128xf32>
    %c48 = arith.constant 48 : index
    %c128_18 = arith.constant 128 : index
    %43 = vector.load %arg6[%c48, %c128_18] : memref<64x256xf32, #tpu.memory_space<vmem>>, vector<8x128xf32>
    %44 = arith.addf %42, %43 : vector<8x128xf32>
    %45 = tpu.concatenate %41, %44 in 0 : vector<8x128xf32>, vector<8x128xf32> -> vector<16x128xf32>
    %46 = arith.negf %45 : vector<16x128xf32>
    %47 = math.exp %46 : vector<16x128xf32>
    %cst_19 = arith.constant 1.000000e+00 : f32
    %48 = vector.broadcast %cst_19 : f32 to vector<16x128xf32>
    %49 = arith.addf %48, %47 : vector<16x128xf32>
    %50 = arith.divf %48, %49 : vector<16x128xf32>
    %51 = math.tanh %45 : vector<16x128xf32>
    %52 = vector.extract_strided_slice %50 {offsets = [0, 0], sizes = [16, 32], strides = [1, 1]} : vector<16x128xf32> to vector<16x32xf32>
    %53 = vector.extract_strided_slice %50 {offsets = [0, 32], sizes = [16, 32], strides = [1, 1]} : vector<16x128xf32> to vector<16x32xf32>
    %54 = vector.extract_strided_slice %51 {offsets = [0, 64], sizes = [16, 32], strides = [1, 1]} : vector<16x128xf32> to vector<16x32xf32>
    %55 = vector.extract_strided_slice %50 {offsets = [0, 96], sizes = [16, 32], strides = [1, 1]} : vector<16x128xf32> to vector<16x32xf32>
    %56 = arith.mulf %53, %32 : vector<16x32xf32>
    %57 = arith.mulf %52, %54 : vector<16x32xf32>
    %58 = arith.addf %56, %57 : vector<16x32xf32>
    %59 = math.tanh %58 : vector<16x32xf32>
    %60 = arith.mulf %55, %59 : vector<16x32xf32>
    %61 = vector.extract_strided_slice %60 {offsets = [0, 0], sizes = [8, 32], strides = [1, 1]} : vector<16x32xf32> to vector<8x32xf32>
    %62 = vector.extract_strided_slice %60 {offsets = [8, 0], sizes = [8, 32], strides = [1, 1]} : vector<16x32xf32> to vector<8x32xf32>
    %63 = arith.truncf %60 : vector<16x32xf32> to vector<16x32xbf16>
    %cst_20 = arith.constant dense<0.000000e+00> : vector<16x256xf32>
    %64 = tpu.matmul %63, %8, %cst_20 {dimension_numbers = #tpu.dot_dimension_numbers<[1], [0], [0], [1], [0, 0, 1, 1], [], []>} : vector<16x32xbf16>, vector<32x256xbf16>, vector<16x256xf32> -> vector<16x256xf32>
    %65 = vector.extract_strided_slice %64 {offsets = [0, 0], sizes = [8, 128], strides = [1, 1]} : vector<16x256xf32> to vector<8x128xf32>
    %c16 = arith.constant 16 : index
    %c0_21 = arith.constant 0 : index
    %66 = vector.load %arg6[%c16, %c0_21] : memref<64x256xf32, #tpu.memory_space<vmem>>, vector<8x128xf32>
    %67 = arith.addf %65, %66 : vector<8x128xf32>
    %68 = vector.extract_strided_slice %64 {offsets = [8, 128], sizes = [8, 128], strides = [1, 1]} : vector<16x256xf32> to vector<8x128xf32>
    %c40 = arith.constant 40 : index
    %c128_22 = arith.constant 128 : index
    %69 = vector.load %arg6[%c40, %c128_22] : memref<64x256xf32, #tpu.memory_space<vmem>>, vector<8x128xf32>
    %70 = arith.addf %68, %69 : vector<8x128xf32>
    %71 = tpu.concatenate %67, %70 in 0 : vector<8x128xf32>, vector<8x128xf32> -> vector<16x128xf32>
    %72 = arith.negf %71 : vector<16x128xf32>
    %73 = math.exp %72 : vector<16x128xf32>
    %cst_23 = arith.constant 1.000000e+00 : f32
    %74 = vector.broadcast %cst_23 : f32 to vector<16x128xf32>
    %75 = arith.addf %74, %73 : vector<16x128xf32>
    %76 = arith.divf %74, %75 : vector<16x128xf32>
    %77 = math.tanh %71 : vector<16x128xf32>
    %78 = vector.extract_strided_slice %76 {offsets = [0, 0], sizes = [16, 32], strides = [1, 1]} : vector<16x128xf32> to vector<16x32xf32>
    %79 = vector.extract_strided_slice %76 {offsets = [0, 32], sizes = [16, 32], strides = [1, 1]} : vector<16x128xf32> to vector<16x32xf32>
    %80 = vector.extract_strided_slice %77 {offsets = [0, 64], sizes = [16, 32], strides = [1, 1]} : vector<16x128xf32> to vector<16x32xf32>
    %81 = vector.extract_strided_slice %76 {offsets = [0, 96], sizes = [16, 32], strides = [1, 1]} : vector<16x128xf32> to vector<16x32xf32>
    %82 = arith.mulf %79, %58 : vector<16x32xf32>
    %83 = arith.mulf %78, %80 : vector<16x32xf32>
    %84 = arith.addf %82, %83 : vector<16x32xf32>
    %85 = math.tanh %84 : vector<16x32xf32>
    %86 = arith.mulf %81, %85 : vector<16x32xf32>
    %87 = vector.extract_strided_slice %86 {offsets = [0, 0], sizes = [8, 32], strides = [1, 1]} : vector<16x32xf32> to vector<8x32xf32>
    %88 = vector.extract_strided_slice %86 {offsets = [8, 0], sizes = [8, 32], strides = [1, 1]} : vector<16x32xf32> to vector<8x32xf32>
    %89 = arith.truncf %86 : vector<16x32xf32> to vector<16x32xbf16>
    %cst_24 = arith.constant dense<0.000000e+00> : vector<16x256xf32>
    %90 = tpu.matmul %89, %8, %cst_24 {dimension_numbers = #tpu.dot_dimension_numbers<[1], [0], [0], [1], [0, 0, 1, 1], [], []>} : vector<16x32xbf16>, vector<32x256xbf16>, vector<16x256xf32> -> vector<16x256xf32>
    %91 = vector.extract_strided_slice %90 {offsets = [0, 0], sizes = [8, 128], strides = [1, 1]} : vector<16x256xf32> to vector<8x128xf32>
    %c24 = arith.constant 24 : index
    %c0_25 = arith.constant 0 : index
    %92 = vector.load %arg6[%c24, %c0_25] : memref<64x256xf32, #tpu.memory_space<vmem>>, vector<8x128xf32>
    %93 = arith.addf %91, %92 : vector<8x128xf32>
    %94 = vector.extract_strided_slice %90 {offsets = [8, 128], sizes = [8, 128], strides = [1, 1]} : vector<16x256xf32> to vector<8x128xf32>
    %c32_26 = arith.constant 32 : index
    %c128_27 = arith.constant 128 : index
    %95 = vector.load %arg6[%c32_26, %c128_27] : memref<64x256xf32, #tpu.memory_space<vmem>>, vector<8x128xf32>
    %96 = arith.addf %94, %95 : vector<8x128xf32>
    %97 = tpu.concatenate %93, %96 in 0 : vector<8x128xf32>, vector<8x128xf32> -> vector<16x128xf32>
    %98 = arith.negf %97 : vector<16x128xf32>
    %99 = math.exp %98 : vector<16x128xf32>
    %cst_28 = arith.constant 1.000000e+00 : f32
    %100 = vector.broadcast %cst_28 : f32 to vector<16x128xf32>
    %101 = arith.addf %100, %99 : vector<16x128xf32>
    %102 = arith.divf %100, %101 : vector<16x128xf32>
    %103 = math.tanh %97 : vector<16x128xf32>
    %104 = vector.extract_strided_slice %102 {offsets = [0, 0], sizes = [16, 32], strides = [1, 1]} : vector<16x128xf32> to vector<16x32xf32>
    %105 = vector.extract_strided_slice %102 {offsets = [0, 32], sizes = [16, 32], strides = [1, 1]} : vector<16x128xf32> to vector<16x32xf32>
    %106 = vector.extract_strided_slice %103 {offsets = [0, 64], sizes = [16, 32], strides = [1, 1]} : vector<16x128xf32> to vector<16x32xf32>
    %107 = vector.extract_strided_slice %102 {offsets = [0, 96], sizes = [16, 32], strides = [1, 1]} : vector<16x128xf32> to vector<16x32xf32>
    %108 = arith.mulf %105, %84 : vector<16x32xf32>
    %109 = arith.mulf %104, %106 : vector<16x32xf32>
    %110 = arith.addf %108, %109 : vector<16x32xf32>
    %111 = math.tanh %110 : vector<16x32xf32>
    %112 = arith.mulf %107, %111 : vector<16x32xf32>
    %113 = vector.extract_strided_slice %112 {offsets = [0, 0], sizes = [8, 32], strides = [1, 1]} : vector<16x32xf32> to vector<8x32xf32>
    %114 = vector.extract_strided_slice %112 {offsets = [8, 0], sizes = [8, 32], strides = [1, 1]} : vector<16x32xf32> to vector<8x32xf32>
    %115 = arith.truncf %112 : vector<16x32xf32> to vector<16x32xbf16>
    %cst_29 = arith.constant dense<0.000000e+00> : vector<16x256xf32>
    %116 = tpu.matmul %115, %8, %cst_29 {dimension_numbers = #tpu.dot_dimension_numbers<[1], [0], [0], [1], [0, 0, 1, 1], [], []>} : vector<16x32xbf16>, vector<32x256xbf16>, vector<16x256xf32> -> vector<16x256xf32>
    %117 = vector.extract_strided_slice %116 {offsets = [0, 0], sizes = [8, 128], strides = [1, 1]} : vector<16x256xf32> to vector<8x128xf32>
    %c32_30 = arith.constant 32 : index
    %c0_31 = arith.constant 0 : index
    %118 = vector.load %arg6[%c32_30, %c0_31] : memref<64x256xf32, #tpu.memory_space<vmem>>, vector<8x128xf32>
    %119 = arith.addf %117, %118 : vector<8x128xf32>
    %120 = vector.extract_strided_slice %116 {offsets = [8, 128], sizes = [8, 128], strides = [1, 1]} : vector<16x256xf32> to vector<8x128xf32>
    %c24_32 = arith.constant 24 : index
    %c128_33 = arith.constant 128 : index
    %121 = vector.load %arg6[%c24_32, %c128_33] : memref<64x256xf32, #tpu.memory_space<vmem>>, vector<8x128xf32>
    %122 = arith.addf %120, %121 : vector<8x128xf32>
    %123 = tpu.concatenate %119, %122 in 0 : vector<8x128xf32>, vector<8x128xf32> -> vector<16x128xf32>
    %124 = arith.negf %123 : vector<16x128xf32>
    %125 = math.exp %124 : vector<16x128xf32>
    %cst_34 = arith.constant 1.000000e+00 : f32
    %126 = vector.broadcast %cst_34 : f32 to vector<16x128xf32>
    %127 = arith.addf %126, %125 : vector<16x128xf32>
    %128 = arith.divf %126, %127 : vector<16x128xf32>
    %129 = math.tanh %123 : vector<16x128xf32>
    %130 = vector.extract_strided_slice %128 {offsets = [0, 0], sizes = [16, 32], strides = [1, 1]} : vector<16x128xf32> to vector<16x32xf32>
    %131 = vector.extract_strided_slice %128 {offsets = [0, 32], sizes = [16, 32], strides = [1, 1]} : vector<16x128xf32> to vector<16x32xf32>
    %132 = vector.extract_strided_slice %129 {offsets = [0, 64], sizes = [16, 32], strides = [1, 1]} : vector<16x128xf32> to vector<16x32xf32>
    %133 = vector.extract_strided_slice %128 {offsets = [0, 96], sizes = [16, 32], strides = [1, 1]} : vector<16x128xf32> to vector<16x32xf32>
    %134 = arith.mulf %131, %110 : vector<16x32xf32>
    %135 = arith.mulf %130, %132 : vector<16x32xf32>
    %136 = arith.addf %134, %135 : vector<16x32xf32>
    %137 = math.tanh %136 : vector<16x32xf32>
    %138 = arith.mulf %133, %137 : vector<16x32xf32>
    %139 = vector.extract_strided_slice %138 {offsets = [0, 0], sizes = [8, 32], strides = [1, 1]} : vector<16x32xf32> to vector<8x32xf32>
    %140 = vector.extract_strided_slice %138 {offsets = [8, 0], sizes = [8, 32], strides = [1, 1]} : vector<16x32xf32> to vector<8x32xf32>
    %141 = arith.truncf %138 : vector<16x32xf32> to vector<16x32xbf16>
    %cst_35 = arith.constant dense<0.000000e+00> : vector<16x256xf32>
    %142 = tpu.matmul %141, %8, %cst_35 {dimension_numbers = #tpu.dot_dimension_numbers<[1], [0], [0], [1], [0, 0, 1, 1], [], []>} : vector<16x32xbf16>, vector<32x256xbf16>, vector<16x256xf32> -> vector<16x256xf32>
    %143 = vector.extract_strided_slice %142 {offsets = [0, 0], sizes = [8, 128], strides = [1, 1]} : vector<16x256xf32> to vector<8x128xf32>
    %c40_36 = arith.constant 40 : index
    %c0_37 = arith.constant 0 : index
    %144 = vector.load %arg6[%c40_36, %c0_37] : memref<64x256xf32, #tpu.memory_space<vmem>>, vector<8x128xf32>
    %145 = arith.addf %143, %144 : vector<8x128xf32>
    %146 = vector.extract_strided_slice %142 {offsets = [8, 128], sizes = [8, 128], strides = [1, 1]} : vector<16x256xf32> to vector<8x128xf32>
    %c16_38 = arith.constant 16 : index
    %c128_39 = arith.constant 128 : index
    %147 = vector.load %arg6[%c16_38, %c128_39] : memref<64x256xf32, #tpu.memory_space<vmem>>, vector<8x128xf32>
    %148 = arith.addf %146, %147 : vector<8x128xf32>
    %149 = tpu.concatenate %145, %148 in 0 : vector<8x128xf32>, vector<8x128xf32> -> vector<16x128xf32>
    %150 = arith.negf %149 : vector<16x128xf32>
    %151 = math.exp %150 : vector<16x128xf32>
    %cst_40 = arith.constant 1.000000e+00 : f32
    %152 = vector.broadcast %cst_40 : f32 to vector<16x128xf32>
    %153 = arith.addf %152, %151 : vector<16x128xf32>
    %154 = arith.divf %152, %153 : vector<16x128xf32>
    %155 = math.tanh %149 : vector<16x128xf32>
    %156 = vector.extract_strided_slice %154 {offsets = [0, 0], sizes = [16, 32], strides = [1, 1]} : vector<16x128xf32> to vector<16x32xf32>
    %157 = vector.extract_strided_slice %154 {offsets = [0, 32], sizes = [16, 32], strides = [1, 1]} : vector<16x128xf32> to vector<16x32xf32>
    %158 = vector.extract_strided_slice %155 {offsets = [0, 64], sizes = [16, 32], strides = [1, 1]} : vector<16x128xf32> to vector<16x32xf32>
    %159 = vector.extract_strided_slice %154 {offsets = [0, 96], sizes = [16, 32], strides = [1, 1]} : vector<16x128xf32> to vector<16x32xf32>
    %160 = arith.mulf %157, %136 : vector<16x32xf32>
    %161 = arith.mulf %156, %158 : vector<16x32xf32>
    %162 = arith.addf %160, %161 : vector<16x32xf32>
    %163 = math.tanh %162 : vector<16x32xf32>
    %164 = arith.mulf %159, %163 : vector<16x32xf32>
    %165 = vector.extract_strided_slice %164 {offsets = [0, 0], sizes = [8, 32], strides = [1, 1]} : vector<16x32xf32> to vector<8x32xf32>
    %166 = vector.extract_strided_slice %164 {offsets = [8, 0], sizes = [8, 32], strides = [1, 1]} : vector<16x32xf32> to vector<8x32xf32>
    %167 = arith.truncf %164 : vector<16x32xf32> to vector<16x32xbf16>
    %cst_41 = arith.constant dense<0.000000e+00> : vector<16x256xf32>
    %168 = tpu.matmul %167, %8, %cst_41 {dimension_numbers = #tpu.dot_dimension_numbers<[1], [0], [0], [1], [0, 0, 1, 1], [], []>} : vector<16x32xbf16>, vector<32x256xbf16>, vector<16x256xf32> -> vector<16x256xf32>
    %169 = vector.extract_strided_slice %168 {offsets = [0, 0], sizes = [8, 128], strides = [1, 1]} : vector<16x256xf32> to vector<8x128xf32>
    %c48_42 = arith.constant 48 : index
    %c0_43 = arith.constant 0 : index
    %170 = vector.load %arg6[%c48_42, %c0_43] : memref<64x256xf32, #tpu.memory_space<vmem>>, vector<8x128xf32>
    %171 = arith.addf %169, %170 : vector<8x128xf32>
    %172 = vector.extract_strided_slice %168 {offsets = [8, 128], sizes = [8, 128], strides = [1, 1]} : vector<16x256xf32> to vector<8x128xf32>
    %c8_44 = arith.constant 8 : index
    %c128_45 = arith.constant 128 : index
    %173 = vector.load %arg6[%c8_44, %c128_45] : memref<64x256xf32, #tpu.memory_space<vmem>>, vector<8x128xf32>
    %174 = arith.addf %172, %173 : vector<8x128xf32>
    %175 = tpu.concatenate %171, %174 in 0 : vector<8x128xf32>, vector<8x128xf32> -> vector<16x128xf32>
    %176 = arith.negf %175 : vector<16x128xf32>
    %177 = math.exp %176 : vector<16x128xf32>
    %cst_46 = arith.constant 1.000000e+00 : f32
    %178 = vector.broadcast %cst_46 : f32 to vector<16x128xf32>
    %179 = arith.addf %178, %177 : vector<16x128xf32>
    %180 = arith.divf %178, %179 : vector<16x128xf32>
    %181 = math.tanh %175 : vector<16x128xf32>
    %182 = vector.extract_strided_slice %180 {offsets = [0, 0], sizes = [16, 32], strides = [1, 1]} : vector<16x128xf32> to vector<16x32xf32>
    %183 = vector.extract_strided_slice %180 {offsets = [0, 32], sizes = [16, 32], strides = [1, 1]} : vector<16x128xf32> to vector<16x32xf32>
    %184 = vector.extract_strided_slice %181 {offsets = [0, 64], sizes = [16, 32], strides = [1, 1]} : vector<16x128xf32> to vector<16x32xf32>
    %185 = vector.extract_strided_slice %180 {offsets = [0, 96], sizes = [16, 32], strides = [1, 1]} : vector<16x128xf32> to vector<16x32xf32>
    %186 = arith.mulf %183, %162 : vector<16x32xf32>
    %187 = arith.mulf %182, %184 : vector<16x32xf32>
    %188 = arith.addf %186, %187 : vector<16x32xf32>
    %189 = math.tanh %188 : vector<16x32xf32>
    %190 = arith.mulf %185, %189 : vector<16x32xf32>
    %191 = vector.extract_strided_slice %190 {offsets = [0, 0], sizes = [8, 32], strides = [1, 1]} : vector<16x32xf32> to vector<8x32xf32>
    %192 = vector.extract_strided_slice %190 {offsets = [8, 0], sizes = [8, 32], strides = [1, 1]} : vector<16x32xf32> to vector<8x32xf32>
    %193 = arith.truncf %190 : vector<16x32xf32> to vector<16x32xbf16>
    %cst_47 = arith.constant dense<0.000000e+00> : vector<16x256xf32>
    %194 = tpu.matmul %193, %8, %cst_47 {dimension_numbers = #tpu.dot_dimension_numbers<[1], [0], [0], [1], [0, 0, 1, 1], [], []>} : vector<16x32xbf16>, vector<32x256xbf16>, vector<16x256xf32> -> vector<16x256xf32>
    %195 = vector.extract_strided_slice %194 {offsets = [0, 0], sizes = [8, 128], strides = [1, 1]} : vector<16x256xf32> to vector<8x128xf32>
    %c56_48 = arith.constant 56 : index
    %c0_49 = arith.constant 0 : index
    %196 = vector.load %arg6[%c56_48, %c0_49] : memref<64x256xf32, #tpu.memory_space<vmem>>, vector<8x128xf32>
    %197 = arith.addf %195, %196 : vector<8x128xf32>
    %198 = vector.extract_strided_slice %194 {offsets = [8, 128], sizes = [8, 128], strides = [1, 1]} : vector<16x256xf32> to vector<8x128xf32>
    %c0_50 = arith.constant 0 : index
    %c128_51 = arith.constant 128 : index
    %199 = vector.load %arg6[%c0_50, %c128_51] : memref<64x256xf32, #tpu.memory_space<vmem>>, vector<8x128xf32>
    %200 = arith.addf %198, %199 : vector<8x128xf32>
    %201 = tpu.concatenate %197, %200 in 0 : vector<8x128xf32>, vector<8x128xf32> -> vector<16x128xf32>
    %202 = arith.negf %201 : vector<16x128xf32>
    %203 = math.exp %202 : vector<16x128xf32>
    %cst_52 = arith.constant 1.000000e+00 : f32
    %204 = vector.broadcast %cst_52 : f32 to vector<16x128xf32>
    %205 = arith.addf %204, %203 : vector<16x128xf32>
    %206 = arith.divf %204, %205 : vector<16x128xf32>
    %207 = math.tanh %201 : vector<16x128xf32>
    %208 = vector.extract_strided_slice %206 {offsets = [0, 0], sizes = [16, 32], strides = [1, 1]} : vector<16x128xf32> to vector<16x32xf32>
    %209 = vector.extract_strided_slice %206 {offsets = [0, 32], sizes = [16, 32], strides = [1, 1]} : vector<16x128xf32> to vector<16x32xf32>
    %210 = vector.extract_strided_slice %207 {offsets = [0, 64], sizes = [16, 32], strides = [1, 1]} : vector<16x128xf32> to vector<16x32xf32>
    %211 = vector.extract_strided_slice %206 {offsets = [0, 96], sizes = [16, 32], strides = [1, 1]} : vector<16x128xf32> to vector<16x32xf32>
    %212 = arith.mulf %209, %188 : vector<16x32xf32>
    %213 = arith.mulf %208, %210 : vector<16x32xf32>
    %214 = arith.addf %212, %213 : vector<16x32xf32>
    %215 = math.tanh %214 : vector<16x32xf32>
    %216 = arith.mulf %211, %215 : vector<16x32xf32>
    %217 = vector.extract_strided_slice %216 {offsets = [0, 0], sizes = [8, 32], strides = [1, 1]} : vector<16x32xf32> to vector<8x32xf32>
    %218 = vector.extract_strided_slice %216 {offsets = [8, 0], sizes = [8, 32], strides = [1, 1]} : vector<16x32xf32> to vector<8x32xf32>
    %219 = tpu.concatenate %35, %61, %87, %113, %139, %165, %191, %217 in 0 : vector<8x32xf32>, vector<8x32xf32>, vector<8x32xf32>, vector<8x32xf32>, vector<8x32xf32>, vector<8x32xf32>, vector<8x32xf32>, vector<8x32xf32> -> vector<64x32xf32>
    %220 = tpu.concatenate %218, %192, %166, %140, %114, %88, %62, %36 in 0 : vector<8x32xf32>, vector<8x32xf32>, vector<8x32xf32>, vector<8x32xf32>, vector<8x32xf32>, vector<8x32xf32>, vector<8x32xf32>, vector<8x32xf32> -> vector<64x32xf32>
    %221 = arith.truncf %219 : vector<64x32xf32> to vector<64x32xbf16>
    %c64 = arith.constant 64 : index
    %c0_53 = arith.constant 0 : index
    %222 = vector.load %arg2[%c64, %c0_53] : memref<288x256xbf16, #tpu.memory_space<vmem>>, vector<32x256xbf16>
    %cst_54 = arith.constant dense<0.000000e+00> : vector<64x256xf32>
    %223 = tpu.matmul %221, %222, %cst_54 {dimension_numbers = #tpu.dot_dimension_numbers<[1], [0], [0], [1], [0, 0, 1, 1], [], []>} : vector<64x32xbf16>, vector<32x256xbf16>, vector<64x256xf32> -> vector<64x256xf32>
    %224 = arith.truncf %220 : vector<64x32xf32> to vector<64x32xbf16>
    %c96 = arith.constant 96 : index
    %c0_55 = arith.constant 0 : index
    %225 = vector.load %arg2[%c96, %c0_55] : memref<288x256xbf16, #tpu.memory_space<vmem>>, vector<32x256xbf16>
    %cst_56 = arith.constant dense<0.000000e+00> : vector<64x256xf32>
    %226 = tpu.matmul %224, %225, %cst_56 {dimension_numbers = #tpu.dot_dimension_numbers<[1], [0], [0], [1], [0, 0, 1, 1], [], []>} : vector<64x32xbf16>, vector<32x256xbf16>, vector<64x256xf32> -> vector<64x256xf32>
    %227 = arith.addf %223, %226 : vector<64x256xf32>
    %c8_57 = arith.constant 8 : index
    %c0_58 = arith.constant 0 : index
    %228 = vector.load %arg3[%c8_57, %c0_58] : memref<32x256xf32, #tpu.memory_space<vmem>>, vector<1x256xf32>
    %229 = vector.broadcast %228 : vector<1x256xf32> to vector<64x256xf32>
    %230 = arith.addf %227, %229 : vector<64x256xf32>
    %c0_59 = arith.constant 0 : index
    %c0_60 = arith.constant 0 : index
    %231 = vector.load %arg6[%c0_59, %c0_60] : memref<64x256xf32, #tpu.memory_space<vmem>>, vector<64x256xf32>
    tpu.vector_store %arg6[%c0_59, %c0_60], %230 {strides = array<i32>} : memref<64x256xf32, #tpu.memory_space<vmem>>, vector<64x256xf32>,
    %c128_61 = arith.constant 128 : index
    %c0_62 = arith.constant 0 : index
    %232 = vector.load %arg2[%c128_61, %c0_62] : memref<288x256xbf16, #tpu.memory_space<vmem>>, vector<32x256xbf16>
    %c16_63 = arith.constant 16 : index
    %c0_64 = arith.constant 0 : index
    %233 = vector.load %arg4[%c16_63, %c0_64] : memref<64x32xf32, #tpu.memory_space<vmem>>, vector<16x32xf32>
    %c48_65 = arith.constant 48 : index
    %c0_66 = arith.constant 0 : index
    %234 = vector.load %arg4[%c48_65, %c0_66] : memref<64x32xf32, #tpu.memory_space<vmem>>, vector<16x32xf32>
    %235 = arith.truncf %233 : vector<16x32xf32> to vector<16x32xbf16>
    %cst_67 = arith.constant dense<0.000000e+00> : vector<16x256xf32>
    %236 = tpu.matmul %235, %232, %cst_67 {dimension_numbers = #tpu.dot_dimension_numbers<[1], [0], [0], [1], [0, 0, 1, 1], [], []>} : vector<16x32xbf16>, vector<32x256xbf16>, vector<16x256xf32> -> vector<16x256xf32>
    %237 = vector.extract_strided_slice %236 {offsets = [0, 0], sizes = [8, 128], strides = [1, 1]} : vector<16x256xf32> to vector<8x128xf32>
    %c0_68 = arith.constant 0 : index
    %c0_69 = arith.constant 0 : index
    %238 = vector.load %arg6[%c0_68, %c0_69] : memref<64x256xf32, #tpu.memory_space<vmem>>, vector<8x128xf32>
    %239 = arith.addf %237, %238 : vector<8x128xf32>
    %240 = vector.extract_strided_slice %236 {offsets = [8, 128], sizes = [8, 128], strides = [1, 1]} : vector<16x256xf32> to vector<8x128xf32>
    %c56_70 = arith.constant 56 : index
    %c128_71 = arith.constant 128 : index
    %241 = vector.load %arg6[%c56_70, %c128_71] : memref<64x256xf32, #tpu.memory_space<vmem>>, vector<8x128xf32>
    %242 = arith.addf %240, %241 : vector<8x128xf32>
    %243 = tpu.concatenate %239, %242 in 0 : vector<8x128xf32>, vector<8x128xf32> -> vector<16x128xf32>
    %244 = arith.negf %243 : vector<16x128xf32>
    %245 = math.exp %244 : vector<16x128xf32>
    %cst_72 = arith.constant 1.000000e+00 : f32
    %246 = vector.broadcast %cst_72 : f32 to vector<16x128xf32>
    %247 = arith.addf %246, %245 : vector<16x128xf32>
    %248 = arith.divf %246, %247 : vector<16x128xf32>
    %249 = math.tanh %243 : vector<16x128xf32>
    %250 = vector.extract_strided_slice %248 {offsets = [0, 0], sizes = [16, 32], strides = [1, 1]} : vector<16x128xf32> to vector<16x32xf32>
    %251 = vector.extract_strided_slice %248 {offsets = [0, 32], sizes = [16, 32], strides = [1, 1]} : vector<16x128xf32> to vector<16x32xf32>
    %252 = vector.extract_strided_slice %249 {offsets = [0, 64], sizes = [16, 32], strides = [1, 1]} : vector<16x128xf32> to vector<16x32xf32>
    %253 = vector.extract_strided_slice %248 {offsets = [0, 96], sizes = [16, 32], strides = [1, 1]} : vector<16x128xf32> to vector<16x32xf32>
    %254 = arith.mulf %251, %234 : vector<16x32xf32>
    %255 = arith.mulf %250, %252 : vector<16x32xf32>
    %256 = arith.addf %254, %255 : vector<16x32xf32>
    %257 = math.tanh %256 : vector<16x32xf32>
    %258 = arith.mulf %253, %257 : vector<16x32xf32>
    %259 = vector.extract_strided_slice %258 {offsets = [0, 0], sizes = [8, 32], strides = [1, 1]} : vector<16x32xf32> to vector<8x32xf32>
    %260 = vector.extract_strided_slice %258 {offsets = [8, 0], sizes = [8, 32], strides = [1, 1]} : vector<16x32xf32> to vector<8x32xf32>
    %261 = arith.truncf %258 : vector<16x32xf32> to vector<16x32xbf16>
    %cst_73 = arith.constant dense<0.000000e+00> : vector<16x256xf32>
    %262 = tpu.matmul %261, %232, %cst_73 {dimension_numbers = #tpu.dot_dimension_numbers<[1], [0], [0], [1], [0, 0, 1, 1], [], []>} : vector<16x32xbf16>, vector<32x256xbf16>, vector<16x256xf32> -> vector<16x256xf32>
    %263 = vector.extract_strided_slice %262 {offsets = [0, 0], sizes = [8, 128], strides = [1, 1]} : vector<16x256xf32> to vector<8x128xf32>
    %c8_74 = arith.constant 8 : index
    %c0_75 = arith.constant 0 : index
    %264 = vector.load %arg6[%c8_74, %c0_75] : memref<64x256xf32, #tpu.memory_space<vmem>>, vector<8x128xf32>
    %265 = arith.addf %263, %264 : vector<8x128xf32>
    %266 = vector.extract_strided_slice %262 {offsets = [8, 128], sizes = [8, 128], strides = [1, 1]} : vector<16x256xf32> to vector<8x128xf32>
    %c48_76 = arith.constant 48 : index
    %c128_77 = arith.constant 128 : index
    %267 = vector.load %arg6[%c48_76, %c128_77] : memref<64x256xf32, #tpu.memory_space<vmem>>, vector<8x128xf32>
    %268 = arith.addf %266, %267 : vector<8x128xf32>
    %269 = tpu.concatenate %265, %268 in 0 : vector<8x128xf32>, vector<8x128xf32> -> vector<16x128xf32>
    %270 = arith.negf %269 : vector<16x128xf32>
    %271 = math.exp %270 : vector<16x128xf32>
    %cst_78 = arith.constant 1.000000e+00 : f32
    %272 = vector.broadcast %cst_78 : f32 to vector<16x128xf32>
    %273 = arith.addf %272, %271 : vector<16x128xf32>
    %274 = arith.divf %272, %273 : vector<16x128xf32>
    %275 = math.tanh %269 : vector<16x128xf32>
    %276 = vector.extract_strided_slice %274 {offsets = [0, 0], sizes = [16, 32], strides = [1, 1]} : vector<16x128xf32> to vector<16x32xf32>
    %277 = vector.extract_strided_slice %274 {offsets = [0, 32], sizes = [16, 32], strides = [1, 1]} : vector<16x128xf32> to vector<16x32xf32>
    %278 = vector.extract_strided_slice %275 {offsets = [0, 64], sizes = [16, 32], strides = [1, 1]} : vector<16x128xf32> to vector<16x32xf32>
    %279 = vector.extract_strided_slice %274 {offsets = [0, 96], sizes = [16, 32], strides = [1, 1]} : vector<16x128xf32> to vector<16x32xf32>
    %280 = arith.mulf %277, %256 : vector<16x32xf32>
    %281 = arith.mulf %276, %278 : vector<16x32xf32>
    %282 = arith.addf %280, %281 : vector<16x32xf32>
    %283 = math.tanh %282 : vector<16x32xf32>
    %284 = arith.mulf %279, %283 : vector<16x32xf32>
    %285 = vector.extract_strided_slice %284 {offsets = [0, 0], sizes = [8, 32], strides = [1, 1]} : vector<16x32xf32> to vector<8x32xf32>
    %286 = vector.extract_strided_slice %284 {offsets = [8, 0], sizes = [8, 32], strides = [1, 1]} : vector<16x32xf32> to vector<8x32xf32>
    %287 = arith.truncf %284 : vector<16x32xf32> to vector<16x32xbf16>
    %cst_79 = arith.constant dense<0.000000e+00> : vector<16x256xf32>
    %288 = tpu.matmul %287, %232, %cst_79 {dimension_numbers = #tpu.dot_dimension_numbers<[1], [0], [0], [1], [0, 0, 1, 1], [], []>} : vector<16x32xbf16>, vector<32x256xbf16>, vector<16x256xf32> -> vector<16x256xf32>
    %289 = vector.extract_strided_slice %288 {offsets = [0, 0], sizes = [8, 128], strides = [1, 1]} : vector<16x256xf32> to vector<8x128xf32>
    %c16_80 = arith.constant 16 : index
    %c0_81 = arith.constant 0 : index
    %290 = vector.load %arg6[%c16_80, %c0_81] : memref<64x256xf32, #tpu.memory_space<vmem>>, vector<8x128xf32>
    %291 = arith.addf %289, %290 : vector<8x128xf32>
    %292 = vector.extract_strided_slice %288 {offsets = [8, 128], sizes = [8, 128], strides = [1, 1]} : vector<16x256xf32> to vector<8x128xf32>
    %c40_82 = arith.constant 40 : index
    %c128_83 = arith.constant 128 : index
    %293 = vector.load %arg6[%c40_82, %c128_83] : memref<64x256xf32, #tpu.memory_space<vmem>>, vector<8x128xf32>
    %294 = arith.addf %292, %293 : vector<8x128xf32>
    %295 = tpu.concatenate %291, %294 in 0 : vector<8x128xf32>, vector<8x128xf32> -> vector<16x128xf32>
    %296 = arith.negf %295 : vector<16x128xf32>
    %297 = math.exp %296 : vector<16x128xf32>
    %cst_84 = arith.constant 1.000000e+00 : f32
    %298 = vector.broadcast %cst_84 : f32 to vector<16x128xf32>
    %299 = arith.addf %298, %297 : vector<16x128xf32>
    %300 = arith.divf %298, %299 : vector<16x128xf32>
    %301 = math.tanh %295 : vector<16x128xf32>
    %302 = vector.extract_strided_slice %300 {offsets = [0, 0], sizes = [16, 32], strides = [1, 1]} : vector<16x128xf32> to vector<16x32xf32>
    %303 = vector.extract_strided_slice %300 {offsets = [0, 32], sizes = [16, 32], strides = [1, 1]} : vector<16x128xf32> to vector<16x32xf32>
    %304 = vector.extract_strided_slice %301 {offsets = [0, 64], sizes = [16, 32], strides = [1, 1]} : vector<16x128xf32> to vector<16x32xf32>
    %305 = vector.extract_strided_slice %300 {offsets = [0, 96], sizes = [16, 32], strides = [1, 1]} : vector<16x128xf32> to vector<16x32xf32>
    %306 = arith.mulf %303, %282 : vector<16x32xf32>
    %307 = arith.mulf %302, %304 : vector<16x32xf32>
    %308 = arith.addf %306, %307 : vector<16x32xf32>
    %309 = math.tanh %308 : vector<16x32xf32>
    %310 = arith.mulf %305, %309 : vector<16x32xf32>
    %311 = vector.extract_strided_slice %310 {offsets = [0, 0], sizes = [8, 32], strides = [1, 1]} : vector<16x32xf32> to vector<8x32xf32>
    %312 = vector.extract_strided_slice %310 {offsets = [8, 0], sizes = [8, 32], strides = [1, 1]} : vector<16x32xf32> to vector<8x32xf32>
    %313 = arith.truncf %310 : vector<16x32xf32> to vector<16x32xbf16>
    %cst_85 = arith.constant dense<0.000000e+00> : vector<16x256xf32>
    %314 = tpu.matmul %313, %232, %cst_85 {dimension_numbers = #tpu.dot_dimension_numbers<[1], [0], [0], [1], [0, 0, 1, 1], [], []>} : vector<16x32xbf16>, vector<32x256xbf16>, vector<16x256xf32> -> vector<16x256xf32>
    %315 = vector.extract_strided_slice %314 {offsets = [0, 0], sizes = [8, 128], strides = [1, 1]} : vector<16x256xf32> to vector<8x128xf32>
    %c24_86 = arith.constant 24 : index
    %c0_87 = arith.constant 0 : index
    %316 = vector.load %arg6[%c24_86, %c0_87] : memref<64x256xf32, #tpu.memory_space<vmem>>, vector<8x128xf32>
    %317 = arith.addf %315, %316 : vector<8x128xf32>
    %318 = vector.extract_strided_slice %314 {offsets = [8, 128], sizes = [8, 128], strides = [1, 1]} : vector<16x256xf32> to vector<8x128xf32>
    %c32_88 = arith.constant 32 : index
    %c128_89 = arith.constant 128 : index
    %319 = vector.load %arg6[%c32_88, %c128_89] : memref<64x256xf32, #tpu.memory_space<vmem>>, vector<8x128xf32>
    %320 = arith.addf %318, %319 : vector<8x128xf32>
    %321 = tpu.concatenate %317, %320 in 0 : vector<8x128xf32>, vector<8x128xf32> -> vector<16x128xf32>
    %322 = arith.negf %321 : vector<16x128xf32>
    %323 = math.exp %322 : vector<16x128xf32>
    %cst_90 = arith.constant 1.000000e+00 : f32
    %324 = vector.broadcast %cst_90 : f32 to vector<16x128xf32>
    %325 = arith.addf %324, %323 : vector<16x128xf32>
    %326 = arith.divf %324, %325 : vector<16x128xf32>
    %327 = math.tanh %321 : vector<16x128xf32>
    %328 = vector.extract_strided_slice %326 {offsets = [0, 0], sizes = [16, 32], strides = [1, 1]} : vector<16x128xf32> to vector<16x32xf32>
    %329 = vector.extract_strided_slice %326 {offsets = [0, 32], sizes = [16, 32], strides = [1, 1]} : vector<16x128xf32> to vector<16x32xf32>
    %330 = vector.extract_strided_slice %327 {offsets = [0, 64], sizes = [16, 32], strides = [1, 1]} : vector<16x128xf32> to vector<16x32xf32>
    %331 = vector.extract_strided_slice %326 {offsets = [0, 96], sizes = [16, 32], strides = [1, 1]} : vector<16x128xf32> to vector<16x32xf32>
    %332 = arith.mulf %329, %308 : vector<16x32xf32>
    %333 = arith.mulf %328, %330 : vector<16x32xf32>
    %334 = arith.addf %332, %333 : vector<16x32xf32>
    %335 = math.tanh %334 : vector<16x32xf32>
    %336 = arith.mulf %331, %335 : vector<16x32xf32>
    %337 = vector.extract_strided_slice %336 {offsets = [0, 0], sizes = [8, 32], strides = [1, 1]} : vector<16x32xf32> to vector<8x32xf32>
    %338 = vector.extract_strided_slice %336 {offsets = [8, 0], sizes = [8, 32], strides = [1, 1]} : vector<16x32xf32> to vector<8x32xf32>
    %339 = arith.truncf %336 : vector<16x32xf32> to vector<16x32xbf16>
    %cst_91 = arith.constant dense<0.000000e+00> : vector<16x256xf32>
    %340 = tpu.matmul %339, %232, %cst_91 {dimension_numbers = #tpu.dot_dimension_numbers<[1], [0], [0], [1], [0, 0, 1, 1], [], []>} : vector<16x32xbf16>, vector<32x256xbf16>, vector<16x256xf32> -> vector<16x256xf32>
    %341 = vector.extract_strided_slice %340 {offsets = [0, 0], sizes = [8, 128], strides = [1, 1]} : vector<16x256xf32> to vector<8x128xf32>
    %c32_92 = arith.constant 32 : index
    %c0_93 = arith.constant 0 : index
    %342 = vector.load %arg6[%c32_92, %c0_93] : memref<64x256xf32, #tpu.memory_space<vmem>>, vector<8x128xf32>
    %343 = arith.addf %341, %342 : vector<8x128xf32>
    %344 = vector.extract_strided_slice %340 {offsets = [8, 128], sizes = [8, 128], strides = [1, 1]} : vector<16x256xf32> to vector<8x128xf32>
    %c24_94 = arith.constant 24 : index
    %c128_95 = arith.constant 128 : index
    %345 = vector.load %arg6[%c24_94, %c128_95] : memref<64x256xf32, #tpu.memory_space<vmem>>, vector<8x128xf32>
    %346 = arith.addf %344, %345 : vector<8x128xf32>
    %347 = tpu.concatenate %343, %346 in 0 : vector<8x128xf32>, vector<8x128xf32> -> vector<16x128xf32>
    %348 = arith.negf %347 : vector<16x128xf32>
    %349 = math.exp %348 : vector<16x128xf32>
    %cst_96 = arith.constant 1.000000e+00 : f32
    %350 = vector.broadcast %cst_96 : f32 to vector<16x128xf32>
    %351 = arith.addf %350, %349 : vector<16x128xf32>
    %352 = arith.divf %350, %351 : vector<16x128xf32>
    %353 = math.tanh %347 : vector<16x128xf32>
    %354 = vector.extract_strided_slice %352 {offsets = [0, 0], sizes = [16, 32], strides = [1, 1]} : vector<16x128xf32> to vector<16x32xf32>
    %355 = vector.extract_strided_slice %352 {offsets = [0, 32], sizes = [16, 32], strides = [1, 1]} : vector<16x128xf32> to vector<16x32xf32>
    %356 = vector.extract_strided_slice %353 {offsets = [0, 64], sizes = [16, 32], strides = [1, 1]} : vector<16x128xf32> to vector<16x32xf32>
    %357 = vector.extract_strided_slice %352 {offsets = [0, 96], sizes = [16, 32], strides = [1, 1]} : vector<16x128xf32> to vector<16x32xf32>
    %358 = arith.mulf %355, %334 : vector<16x32xf32>
    %359 = arith.mulf %354, %356 : vector<16x32xf32>
    %360 = arith.addf %358, %359 : vector<16x32xf32>
    %361 = math.tanh %360 : vector<16x32xf32>
    %362 = arith.mulf %357, %361 : vector<16x32xf32>
    %363 = vector.extract_strided_slice %362 {offsets = [0, 0], sizes = [8, 32], strides = [1, 1]} : vector<16x32xf32> to vector<8x32xf32>
    %364 = vector.extract_strided_slice %362 {offsets = [8, 0], sizes = [8, 32], strides = [1, 1]} : vector<16x32xf32> to vector<8x32xf32>
    %365 = arith.truncf %362 : vector<16x32xf32> to vector<16x32xbf16>
    %cst_97 = arith.constant dense<0.000000e+00> : vector<16x256xf32>
    %366 = tpu.matmul %365, %232, %cst_97 {dimension_numbers = #tpu.dot_dimension_numbers<[1], [0], [0], [1], [0, 0, 1, 1], [], []>} : vector<16x32xbf16>, vector<32x256xbf16>, vector<16x256xf32> -> vector<16x256xf32>
    %367 = vector.extract_strided_slice %366 {offsets = [0, 0], sizes = [8, 128], strides = [1, 1]} : vector<16x256xf32> to vector<8x128xf32>
    %c40_98 = arith.constant 40 : index
    %c0_99 = arith.constant 0 : index
    %368 = vector.load %arg6[%c40_98, %c0_99] : memref<64x256xf32, #tpu.memory_space<vmem>>, vector<8x128xf32>
    %369 = arith.addf %367, %368 : vector<8x128xf32>
    %370 = vector.extract_strided_slice %366 {offsets = [8, 128], sizes = [8, 128], strides = [1, 1]} : vector<16x256xf32> to vector<8x128xf32>
    %c16_100 = arith.constant 16 : index
    %c128_101 = arith.constant 128 : index
    %371 = vector.load %arg6[%c16_100, %c128_101] : memref<64x256xf32, #tpu.memory_space<vmem>>, vector<8x128xf32>
    %372 = arith.addf %370, %371 : vector<8x128xf32>
    %373 = tpu.concatenate %369, %372 in 0 : vector<8x128xf32>, vector<8x128xf32> -> vector<16x128xf32>
    %374 = arith.negf %373 : vector<16x128xf32>
    %375 = math.exp %374 : vector<16x128xf32>
    %cst_102 = arith.constant 1.000000e+00 : f32
    %376 = vector.broadcast %cst_102 : f32 to vector<16x128xf32>
    %377 = arith.addf %376, %375 : vector<16x128xf32>
    %378 = arith.divf %376, %377 : vector<16x128xf32>
    %379 = math.tanh %373 : vector<16x128xf32>
    %380 = vector.extract_strided_slice %378 {offsets = [0, 0], sizes = [16, 32], strides = [1, 1]} : vector<16x128xf32> to vector<16x32xf32>
    %381 = vector.extract_strided_slice %378 {offsets = [0, 32], sizes = [16, 32], strides = [1, 1]} : vector<16x128xf32> to vector<16x32xf32>
    %382 = vector.extract_strided_slice %379 {offsets = [0, 64], sizes = [16, 32], strides = [1, 1]} : vector<16x128xf32> to vector<16x32xf32>
    %383 = vector.extract_strided_slice %378 {offsets = [0, 96], sizes = [16, 32], strides = [1, 1]} : vector<16x128xf32> to vector<16x32xf32>
    %384 = arith.mulf %381, %360 : vector<16x32xf32>
    %385 = arith.mulf %380, %382 : vector<16x32xf32>
    %386 = arith.addf %384, %385 : vector<16x32xf32>
    %387 = math.tanh %386 : vector<16x32xf32>
    %388 = arith.mulf %383, %387 : vector<16x32xf32>
    %389 = vector.extract_strided_slice %388 {offsets = [0, 0], sizes = [8, 32], strides = [1, 1]} : vector<16x32xf32> to vector<8x32xf32>
    %390 = vector.extract_strided_slice %388 {offsets = [8, 0], sizes = [8, 32], strides = [1, 1]} : vector<16x32xf32> to vector<8x32xf32>
    %391 = arith.truncf %388 : vector<16x32xf32> to vector<16x32xbf16>
    %cst_103 = arith.constant dense<0.000000e+00> : vector<16x256xf32>
    %392 = tpu.matmul %391, %232, %cst_103 {dimension_numbers = #tpu.dot_dimension_numbers<[1], [0], [0], [1], [0, 0, 1, 1], [], []>} : vector<16x32xbf16>, vector<32x256xbf16>, vector<16x256xf32> -> vector<16x256xf32>
    %393 = vector.extract_strided_slice %392 {offsets = [0, 0], sizes = [8, 128], strides = [1, 1]} : vector<16x256xf32> to vector<8x128xf32>
    %c48_104 = arith.constant 48 : index
    %c0_105 = arith.constant 0 : index
    %394 = vector.load %arg6[%c48_104, %c0_105] : memref<64x256xf32, #tpu.memory_space<vmem>>, vector<8x128xf32>
    %395 = arith.addf %393, %394 : vector<8x128xf32>
    %396 = vector.extract_strided_slice %392 {offsets = [8, 128], sizes = [8, 128], strides = [1, 1]} : vector<16x256xf32> to vector<8x128xf32>
    %c8_106 = arith.constant 8 : index
    %c128_107 = arith.constant 128 : index
    %397 = vector.load %arg6[%c8_106, %c128_107] : memref<64x256xf32, #tpu.memory_space<vmem>>, vector<8x128xf32>
    %398 = arith.addf %396, %397 : vector<8x128xf32>
    %399 = tpu.concatenate %395, %398 in 0 : vector<8x128xf32>, vector<8x128xf32> -> vector<16x128xf32>
    %400 = arith.negf %399 : vector<16x128xf32>
    %401 = math.exp %400 : vector<16x128xf32>
    %cst_108 = arith.constant 1.000000e+00 : f32
    %402 = vector.broadcast %cst_108 : f32 to vector<16x128xf32>
    %403 = arith.addf %402, %401 : vector<16x128xf32>
    %404 = arith.divf %402, %403 : vector<16x128xf32>
    %405 = math.tanh %399 : vector<16x128xf32>
    %406 = vector.extract_strided_slice %404 {offsets = [0, 0], sizes = [16, 32], strides = [1, 1]} : vector<16x128xf32> to vector<16x32xf32>
    %407 = vector.extract_strided_slice %404 {offsets = [0, 32], sizes = [16, 32], strides = [1, 1]} : vector<16x128xf32> to vector<16x32xf32>
    %408 = vector.extract_strided_slice %405 {offsets = [0, 64], sizes = [16, 32], strides = [1, 1]} : vector<16x128xf32> to vector<16x32xf32>
    %409 = vector.extract_strided_slice %404 {offsets = [0, 96], sizes = [16, 32], strides = [1, 1]} : vector<16x128xf32> to vector<16x32xf32>
    %410 = arith.mulf %407, %386 : vector<16x32xf32>
    %411 = arith.mulf %406, %408 : vector<16x32xf32>
    %412 = arith.addf %410, %411 : vector<16x32xf32>
    %413 = math.tanh %412 : vector<16x32xf32>
    %414 = arith.mulf %409, %413 : vector<16x32xf32>
    %415 = vector.extract_strided_slice %414 {offsets = [0, 0], sizes = [8, 32], strides = [1, 1]} : vector<16x32xf32> to vector<8x32xf32>
    %416 = vector.extract_strided_slice %414 {offsets = [8, 0], sizes = [8, 32], strides = [1, 1]} : vector<16x32xf32> to vector<8x32xf32>
    %417 = arith.truncf %414 : vector<16x32xf32> to vector<16x32xbf16>
    %cst_109 = arith.constant dense<0.000000e+00> : vector<16x256xf32>
    %418 = tpu.matmul %417, %232, %cst_109 {dimension_numbers = #tpu.dot_dimension_numbers<[1], [0], [0], [1], [0, 0, 1, 1], [], []>} : vector<16x32xbf16>, vector<32x256xbf16>, vector<16x256xf32> -> vector<16x256xf32>
    %419 = vector.extract_strided_slice %418 {offsets = [0, 0], sizes = [8, 128], strides = [1, 1]} : vector<16x256xf32> to vector<8x128xf32>
    %c56_110 = arith.constant 56 : index
    %c0_111 = arith.constant 0 : index
    %420 = vector.load %arg6[%c56_110, %c0_111] : memref<64x256xf32, #tpu.memory_space<vmem>>, vector<8x128xf32>
    %421 = arith.addf %419, %420 : vector<8x128xf32>
    %422 = vector.extract_strided_slice %418 {offsets = [8, 128], sizes = [8, 128], strides = [1, 1]} : vector<16x256xf32> to vector<8x128xf32>
    %c0_112 = arith.constant 0 : index
    %c128_113 = arith.constant 128 : index
    %423 = vector.load %arg6[%c0_112, %c128_113] : memref<64x256xf32, #tpu.memory_space<vmem>>, vector<8x128xf32>
    %424 = arith.addf %422, %423 : vector<8x128xf32>
    %425 = tpu.concatenate %421, %424 in 0 : vector<8x128xf32>, vector<8x128xf32> -> vector<16x128xf32>
    %426 = arith.negf %425 : vector<16x128xf32>
    %427 = math.exp %426 : vector<16x128xf32>
    %cst_114 = arith.constant 1.000000e+00 : f32
    %428 = vector.broadcast %cst_114 : f32 to vector<16x128xf32>
    %429 = arith.addf %428, %427 : vector<16x128xf32>
    %430 = arith.divf %428, %429 : vector<16x128xf32>
    %431 = math.tanh %425 : vector<16x128xf32>
    %432 = vector.extract_strided_slice %430 {offsets = [0, 0], sizes = [16, 32], strides = [1, 1]} : vector<16x128xf32> to vector<16x32xf32>
    %433 = vector.extract_strided_slice %430 {offsets = [0, 32], sizes = [16, 32], strides = [1, 1]} : vector<16x128xf32> to vector<16x32xf32>
    %434 = vector.extract_strided_slice %431 {offsets = [0, 64], sizes = [16, 32], strides = [1, 1]} : vector<16x128xf32> to vector<16x32xf32>
    %435 = vector.extract_strided_slice %430 {offsets = [0, 96], sizes = [16, 32], strides = [1, 1]} : vector<16x128xf32> to vector<16x32xf32>
    %436 = arith.mulf %433, %412 : vector<16x32xf32>
    %437 = arith.mulf %432, %434 : vector<16x32xf32>
    %438 = arith.addf %436, %437 : vector<16x32xf32>
    %439 = math.tanh %438 : vector<16x32xf32>
    %440 = arith.mulf %435, %439 : vector<16x32xf32>
    %441 = vector.extract_strided_slice %440 {offsets = [0, 0], sizes = [8, 32], strides = [1, 1]} : vector<16x32xf32> to vector<8x32xf32>
    %442 = vector.extract_strided_slice %440 {offsets = [8, 0], sizes = [8, 32], strides = [1, 1]} : vector<16x32xf32> to vector<8x32xf32>
    %443 = tpu.concatenate %259, %285, %311, %337, %363, %389, %415, %441 in 0 : vector<8x32xf32>, vector<8x32xf32>, vector<8x32xf32>, vector<8x32xf32>, vector<8x32xf32>, vector<8x32xf32>, vector<8x32xf32>, vector<8x32xf32> -> vector<64x32xf32>
    %444 = tpu.concatenate %442, %416, %390, %364, %338, %312, %286, %260 in 0 : vector<8x32xf32>, vector<8x32xf32>, vector<8x32xf32>, vector<8x32xf32>, vector<8x32xf32>, vector<8x32xf32>, vector<8x32xf32>, vector<8x32xf32> -> vector<64x32xf32>
    %c0_115 = arith.constant 0 : index
    %c0_116 = arith.constant 0 : index
    %445 = vector.load %arg1[%c0_115, %c0_116] : memref<64x32xf32, #tpu.memory_space<vmem>>, vector<64x32xf32>
    %cst_117 = arith.constant 0.000000e+00 : f32
    %446 = vector.broadcast %cst_117 : f32 to vector<64x32xf32>
    %447 = arith.maximumf %445, %446 : vector<64x32xf32>
    %cst_118 = arith.constant dense<0.000000e+00> : vector<64xf32>
    %448 = vector.multi_reduction <add>, %447, %cst_118 [1] : vector<64x32xf32> to vector<64xf32>
    %449 = vector.shape_cast %448 : vector<64xf32> to vector<64x1xf32>
    %cst_119 = arith.constant 3.125000e-02 : f32
    %450 = vector.broadcast %cst_119 : f32 to vector<64x1xf32>
    %451 = arith.mulf %449, %450 : vector<64x1xf32>
    %cst_120 = arith.constant 0.000000e+00 : f32
    %452 = vector.broadcast %cst_120 : f32 to vector<64x32xf32>
    %453 = arith.minimumf %445, %452 : vector<64x32xf32>
    %cst_121 = arith.constant dense<0.000000e+00> : vector<64xf32>
    %454 = vector.multi_reduction <add>, %453, %cst_121 [1] : vector<64x32xf32> to vector<64xf32>
    %455 = vector.shape_cast %454 : vector<64xf32> to vector<64x1xf32>
    %cst_122 = arith.constant 3.125000e-02 : f32
    %456 = vector.broadcast %cst_122 : f32 to vector<64x1xf32>
    %457 = arith.mulf %455, %456 : vector<64x1xf32>
    %cst_123 = arith.constant 0.000000e+00 : f32
    %458 = vector.broadcast %cst_123 : f32 to vector<64x32xf32>
    %459 = arith.maximumf %443, %458 : vector<64x32xf32>
    %460 = vector.broadcast %451 : vector<64x1xf32> to vector<64x32xf32>
    %461 = arith.mulf %459, %460 : vector<64x32xf32>
    %cst_124 = arith.constant 0.000000e+00 : f32
    %462 = vector.broadcast %cst_124 : f32 to vector<64x32xf32>
    %463 = arith.minimumf %443, %462 : vector<64x32xf32>
    %464 = vector.broadcast %457 : vector<64x1xf32> to vector<64x32xf32>
    %465 = arith.mulf %463, %464 : vector<64x32xf32>
    %466 = arith.addf %461, %465 : vector<64x32xf32>
    %cst_125 = arith.constant 0.000000e+00 : f32
    %467 = vector.broadcast %cst_125 : f32 to vector<64x32xf32>
    %468 = arith.maximumf %444, %467 : vector<64x32xf32>
    %469 = vector.broadcast %451 : vector<64x1xf32> to vector<64x32xf32>
    %470 = arith.mulf %468, %469 : vector<64x32xf32>
    %cst_126 = arith.constant 0.000000e+00 : f32
    %471 = vector.broadcast %cst_126 : f32 to vector<64x32xf32>
    %472 = arith.minimumf %444, %471 : vector<64x32xf32>
    %473 = vector.broadcast %457 : vector<64x1xf32> to vector<64x32xf32>
    %474 = arith.mulf %472, %473 : vector<64x32xf32>
    %475 = arith.addf %470, %474 : vector<64x32xf32>
    %476 = arith.truncf %466 : vector<64x32xf32> to vector<64x32xbf16>
    %c160 = arith.constant 160 : index
    %c0_127 = arith.constant 0 : index
    %477 = vector.load %arg2[%c160, %c0_127] : memref<288x256xbf16, #tpu.memory_space<vmem>>, vector<32x64xbf16>
    %cst_128 = arith.constant dense<0.000000e+00> : vector<64x64xf32>
    %478 = tpu.matmul %476, %477, %cst_128 {dimension_numbers = #tpu.dot_dimension_numbers<[1], [0], [0], [1], [0, 0, 1, 1], [], []>} : vector<64x32xbf16>, vector<32x64xbf16>, vector<64x64xf32> -> vector<64x64xf32>
    %479 = arith.truncf %475 : vector<64x32xf32> to vector<64x32xbf16>
    %c192 = arith.constant 192 : index
    %c0_129 = arith.constant 0 : index
    %480 = vector.load %arg2[%c192, %c0_129] : memref<288x256xbf16, #tpu.memory_space<vmem>>, vector<32x64xbf16>
    %cst_130 = arith.constant dense<0.000000e+00> : vector<64x64xf32>
    %481 = tpu.matmul %479, %480, %cst_130 {dimension_numbers = #tpu.dot_dimension_numbers<[1], [0], [0], [1], [0, 0, 1, 1], [], []>} : vector<64x32xbf16>, vector<32x64xbf16>, vector<64x64xf32> -> vector<64x64xf32>
    %482 = arith.addf %478, %481 : vector<64x64xf32>
    %c16_131 = arith.constant 16 : index
    %c0_132 = arith.constant 0 : index
    %483 = vector.load %arg3[%c16_131, %c0_132] : memref<32x256xf32, #tpu.memory_space<vmem>>, vector<1x64xf32>
    %484 = vector.broadcast %483 : vector<1x64xf32> to vector<64x64xf32>
    %485 = arith.addf %482, %484 : vector<64x64xf32>
    %cst_133 = arith.constant 0.000000e+00 : f32
    %486 = vector.broadcast %cst_133 : f32 to vector<64x64xf32>
    %487 = arith.maximumf %485, %486 : vector<64x64xf32>
    %488 = arith.truncf %487 : vector<64x64xf32> to vector<64x64xbf16>
    %c224 = arith.constant 224 : index
    %c0_134 = arith.constant 0 : index
    %489 = vector.load %arg2[%c224, %c0_134] : memref<288x256xbf16, #tpu.memory_space<vmem>>, vector<64x128xbf16>
    %cst_135 = arith.constant dense<0.000000e+00> : vector<64x128xf32>
    %490 = tpu.matmul %488, %489, %cst_135 {dimension_numbers = #tpu.dot_dimension_numbers<[1], [0], [0], [1], [0, 0, 1, 1], [], []>} : vector<64x64xbf16>, vector<64x128xbf16>, vector<64x128xf32> -> vector<64x128xf32>
    %c24_136 = arith.constant 24 : index
    %c0_137 = arith.constant 0 : index
    %491 = vector.load %arg3[%c24_136, %c0_137] : memref<32x256xf32, #tpu.memory_space<vmem>>, vector<1x128xf32>
    %492 = vector.broadcast %491 : vector<1x128xf32> to vector<64x128xf32>
    %493 = arith.addf %490, %492 : vector<64x128xf32>
    %c0_138 = arith.constant 0 : index
    %c0_139 = arith.constant 0 : index
    %494 = vector.load %arg5[%c0_138, %c0_139] : memref<64x128xf32, #tpu.memory_space<vmem>>, vector<64x128xf32>
    tpu.vector_store %arg5[%c0_138, %c0_139], %493 {strides = array<i32>} : memref<64x128xf32, #tpu.memory_space<vmem>>, vector<64x128xf32>,
    return
  }
  func.func @transform_0(%arg0: i32) -> (i32, i32) {
    %c0_i32 = arith.constant 0 : i32
    %c0_i32_0 = arith.constant 0 : i32
    %c0_i32_1 = arith.constant 0 : i32
    return %c0_i32, %c0_i32_0 : i32, i32
  }
  func.func @transform_1(%arg0: i32) -> (i32, i32) {
    %c0_i32 = arith.constant 0 : i32
    %c0_i32_0 = arith.constant 0 : i32
    %c0_i32_1 = arith.constant 0 : i32
    return %c0_i32, %c0_i32_0 : i32, i32
  }
  func.func @transform_2(%arg0: i32) -> (i32, i32) {
    %c0_i32 = arith.constant 0 : i32
    %c0_i32_0 = arith.constant 0 : i32
    %c0_i32_1 = arith.constant 0 : i32
    return %c0_i32, %c0_i32_0 : i32, i32
  }
  func.func @transform_3(%arg0: i32) -> (i32, i32) {
    %c0_i32 = arith.constant 0 : i32
    %c0_i32_0 = arith.constant 0 : i32
    %c0_i32_1 = arith.constant 0 : i32
    return %c0_i32, %c0_i32_0 : i32, i32
  }
  func.func @transform_4(%arg0: i32) -> (i32, i32) {
    %c0_i32 = arith.constant 0 : i32
    %c0_i32_0 = arith.constant 0 : i32
    %c0_i32_1 = arith.constant 0 : i32
    return %c0_i32, %c0_i32_0 : i32, i32
  }
}

</mosaic_0001>

<llo_original>
// kernel: lstm_module_forward.1
$region0: #{lstm_module_forward.1}
  #allocation0 [shape = 'u32[]', space=smem, size = 0x4, offset = 0x4, fixed_abs, tag = 'smem constant byte address 0x4 - core index']
  #allocation1 [shape = 'u32[72,128]{1,0:T(1,128)}', space=vmem, size = 0x9000, scoped, tag = 'internal scratch']
  #allocation2 [shape = 'f32[64,256]{1,0:T(8,128)}', space=vmem, size = 0x10000, scoped, tag = 'scratch operand']
  %s0 = inlined_call_operand.vmem [shape: f32[64,32], index: 0, kind: input, shape index: {}]
  %s1 = inlined_call_operand.vmem [shape: bf16[288,256], index: 1, kind: input, shape index: {}]
  %s2 = inlined_call_operand.vmem [shape: f32[32,256], index: 2, kind: input, shape index: {}]
  %s3 = inlined_call_operand.vmem [shape: f32[64,32], index: 3, kind: input, shape index: {}]
  %s4 = inlined_call_operand.vmem [shape: f32[64,128], index: 4, kind: output, shape index: {}]
  %s5 = sld [smem:[#allocation0]]
  $region26: #{lstm_module_forward.1} parent=0
    _
  %s7 = ssub.s32 1, %s5
  %s8 = scalar_select 0, %s7, %s5
  // Predicated region
  $region2: #{lstm_module_forward.1} parent=0 // pred_check
    _
  $region3: #{lstm_module_forward.1} parent=0 // pred_check_branch
    %10 = sbr.rel (0) target = $region5
  $region4: #{lstm_module_forward.1} parent=0 // pred_region
    _
  $region5: #{lstm_module_forward.1} parent=0 // pred_fallthru
    _
  // Predicated region
  $region6: #{lstm_module_forward.1} parent=0 // pred_check
    _
  $region7: #{lstm_module_forward.1} parent=0 // pred_check_branch
    %12 = sbr.rel (0) target = $region9
  $region8: #{lstm_module_forward.1} parent=0 // pred_region
    _
  $region9: #{lstm_module_forward.1} parent=0 // pred_fallthru
    _
  // Predicated region
  $region10: #{lstm_module_forward.1} parent=0 // pred_check
    _
  $region11: #{lstm_module_forward.1} parent=0 // pred_check_branch
    %14 = sbr.rel (0) target = $region13
  $region12: #{lstm_module_forward.1} parent=0 // pred_region
    _
  $region13: #{lstm_module_forward.1} parent=0 // pred_fallthru
    _
  // Predicated region
  $region14: #{lstm_module_forward.1} parent=0 // pred_check
    _
  $region15: #{lstm_module_forward.1} parent=0 // pred_check_branch
    %16 = sbr.rel (0) target = $region17
  $region16: #{lstm_module_forward.1} parent=0 // pred_region
    _
  $region17: #{lstm_module_forward.1} parent=0 // pred_fallthru
    _
  %v18 = vld [vmem:[%s0] sm:$0xff]
  %v19 = vld [vmem:[%s0 + $0x8] sm:$0xff]
  %v20 = vld [vmem:[%s0 + $0x10] sm:$0xff]
  %v21 = vld [vmem:[%s0 + $0x18] sm:$0xff]
  %v22 = vld [vmem:[%s0 + $0x20] sm:$0xff]
  %v23 = vld [vmem:[%s0 + $0x28] sm:$0xff]
  %v24 = vld [vmem:[%s0 + $0x30] sm:$0xff]
  %v25 = vld [vmem:[%s0 + $0x38] sm:$0xff]
  %v26 = vpack.c.bf16 %v19, %v18
  %v27 = vpack.c.bf16 %v21, %v20
  %v28 = vpack.c.bf16 %v23, %v22
  %v29 = vpack.c.bf16 %v25, %v24
  %v30 = vld [vmem:[%s1] sm:$0xff]
  %v31 = vld [vmem:[%s1 + $0x8] sm:$0xff]
  %v32 = vld [vmem:[%s1 + $0x10] sm:$0xff]
  %v33 = vld [vmem:[%s1 + $0x18] sm:$0xff]
  %v34 = vld [vmem:[%s2] ss:$8 sm:$0x3]
  %v36 = vperm.slane %v34, 0
  %v37 = vperm.slane %v34, 1
  %v44 = vunpack.c.l.b16 %v30
  %v45 = vunpack.c.h.b16 %v30
  %v46 = vunpack.c.l.b16 %v31
  %v47 = vunpack.c.h.b16 %v31
  %v48 = vunpack.c.l.b16 %v32
  %v49 = vunpack.c.h.b16 %v32
  %v50 = vunpack.c.l.b16 %v33
  %v51 = vunpack.c.h.b16 %v33
  %v52 = vpack.c.b16 %v46, %v44
  %v53 = vpack.c.b16 %v47, %v45
  %v54 = vpack.c.b16 %v50, %v48
  %v55 = vpack.c.b16 %v51, %v49
  %vm60 = vcmask 261120
  %v62 = vsel %vm60, %v26, 0
  %v65 = vsel %vm60, %v27, 0
  %v68 = vsel %vm60, %v28, 0
  %v71 = vsel %vm60, %v29, 0
  %73 = vmatpush.bf16.msra.mxu0 0
  %74 = vmatpush.bf16.msra.mxu0 0
  %75 = vmatpush.bf16.msra.mxu0 0
  %76 = vmatpush.bf16.msra.mxu0 0
  %77 = vmatpush.bf16.msra.mxu0 0
  %78 = vmatpush.bf16.msra.mxu0 0
  %79 = vmatpush.bf16.msra.mxu0 %v54
  %80 = vmatpush.bf16.msra.mxu0 %v52
  %81 = vmatmul.bf16.gmra.mxu0 %v62
  %v82 = vpop.f32.mrf.mxu0
  %v83 = vadd.f32 %v36, %v82
  %v84 = vpop.f32.mrf.mxu0
  %v85 = vadd.f32 %v36, %v84
  %86 = vmatmul.bf16.gmra.mxu0 %v65
  %v87 = vpop.f32.mrf.mxu0
  %v88 = vadd.f32 %v36, %v87
  %v89 = vpop.f32.mrf.mxu0
  %v90 = vadd.f32 %v36, %v89
  %91 = vmatmul.bf16.gmra.mxu0 %v68
  %v92 = vpop.f32.mrf.mxu0
  %v93 = vadd.f32 %v36, %v92
  %v94 = vpop.f32.mrf.mxu0
  %v95 = vadd.f32 %v36, %v94
  %96 = vmatmul.bf16.gmra.mxu0 %v71
  %v97 = vpop.f32.mrf.mxu0
  %v98 = vadd.f32 %v36, %v97
  %v99 = vpop.f32.mrf.mxu0
  %v100 = vadd.f32 %v36, %v99
  %101 = vdwg.mxu0
  %102 = vmatpush.bf16.msra.mxu0 0
  %103 = vmatpush.bf16.msra.mxu0 0
  %104 = vmatpush.bf16.msra.mxu0 0
  %105 = vmatpush.bf16.msra.mxu0 0
  %106 = vmatpush.bf16.msra.mxu0 0
  %107 = vmatpush.bf16.msra.mxu0 0
  %108 = vmatpush.bf16.msra.mxu0 %v55
  %109 = vmatpush.bf16.msra.mxu0 %v53
  %110 = vmatmul.bf16.gmra.mxu0 %v62
  %v111 = vpop.f32.mrf.mxu0
  %v112 = vadd.f32 %v37, %v111
  %v113 = vpop.f32.mrf.mxu0
  %v114 = vadd.f32 %v37, %v113
  %115 = vmatmul.bf16.gmra.mxu0 %v65
  %v116 = vpop.f32.mrf.mxu0
  %v117 = vadd.f32 %v37, %v116
  %v118 = vpop.f32.mrf.mxu0
  %v119 = vadd.f32 %v37, %v118
  %120 = vmatmul.bf16.gmra.mxu0 %v68
  %v121 = vpop.f32.mrf.mxu0
  %v122 = vadd.f32 %v37, %v121
  %v123 = vpop.f32.mrf.mxu0
  %v124 = vadd.f32 %v37, %v123
  %125 = vmatmul.bf16.gmra.mxu0 %v71
  %v126 = vpop.f32.mrf.mxu0
  %v127 = vadd.f32 %v37, %v126
  %v128 = vpop.f32.mrf.mxu0
  %v129 = vadd.f32 %v37, %v128
  %130 = vdwg.mxu0
  %131 = vst [vmem:[#allocation2] sm:$0xff] %v83
  %132 = vst [vmem:[#allocation2 + $0x8] sm:$0xff] %v112
  %133 = vst [vmem:[#allocation2 + $0x10] sm:$0xff] %v85
  %134 = vst [vmem:[#allocation2 + $0x18] sm:$0xff] %v114
  %135 = vst [vmem:[#allocation2 + $0x20] sm:$0xff] %v88
  %136 = vst [vmem:[#allocation2 + $0x28] sm:$0xff] %v117
  %137 = vst [vmem:[#allocation2 + $0x30] sm:$0xff] %v90
  %138 = vst [vmem:[#allocation2 + $0x38] sm:$0xff] %v119
  %139 = vst [vmem:[#allocation2 + $0x40] sm:$0xff] %v93
  %140 = vst [vmem:[#allocation2 + $0x48] sm:$0xff] %v122
  %141 = vst [vmem:[#allocation2 + $0x50] sm:$0xff] %v95
  %142 = vst [vmem:[#allocation2 + $0x58] sm:$0xff] %v124
  %143 = vst [vmem:[#allocation2 + $0x60] sm:$0xff] %v98
  %144 = vst [vmem:[#allocation2 + $0x68] sm:$0xff] %v127
  %145 = vst [vmem:[#allocation2 + $0x70] sm:$0xff] %v100
  %146 = vst [vmem:[#allocation2 + $0x78] sm:$0xff] %v129
  %v147 = vld [vmem:[%s1 + $0x20] sm:$0xff]
  %v148 = vld [vmem:[%s1 + $0x28] sm:$0xff]
  %v149 = vld [vmem:[%s1 + $0x30] sm:$0xff]
  %v150 = vld [vmem:[%s1 + $0x38] sm:$0xff]
  %v151 = vld [vmem:[%s3] sm:$0xff]
  %v152 = vld [vmem:[%s3 + $0x8] sm:$0xff]
  %v153 = vld [vmem:[%s3 + $0x20] sm:$0xff]
  %v154 = vld [vmem:[%s3 + $0x28] sm:$0xff]
  %v155 = vpack.c.bf16 %v152, %v151
  %v160 = vunpack.c.l.b16 %v147
  %v161 = vunpack.c.h.b16 %v147
  %v162 = vunpack.c.l.b16 %v148
  %v163 = vunpack.c.h.b16 %v148
  %v164 = vunpack.c.l.b16 %v149
  %v165 = vunpack.c.h.b16 %v149
  %v166 = vunpack.c.l.b16 %v150
  %v167 = vunpack.c.h.b16 %v150
  %v168 = vpack.c.b16 %v162, %v160
  %v169 = vpack.c.b16 %v163, %v161
  %v170 = vpack.c.b16 %v166, %v164
  %v171 = vpack.c.b16 %v167, %v165
  %v177 = vsel %vm60, %v155, 0
  %179 = vmatpush.bf16.msra.mxu0 0
  %180 = vmatpush.bf16.msra.mxu0 0
  %181 = vmatpush.bf16.msra.mxu0 0
  %182 = vmatpush.bf16.msra.mxu0 0
  %183 = vmatpush.bf16.msra.mxu0 0
  %184 = vmatpush.bf16.msra.mxu0 0
  %185 = vmatpush.bf16.msra.mxu0 %v170
  %186 = vmatpush.bf16.msra.mxu0 %v168
  %187 = vmatmul.bf16.gmra.mxu0 %v177
  %v188 = vpop.f32.mrf.mxu0
  %v189 = vadd.f32 0.0, %v188
  %v190 = vpop.f32.mrf.mxu0
  %191 = vdwg.mxu0
  %192 = vmatpush.bf16.msra.mxu0 0
  %193 = vmatpush.bf16.msra.mxu0 0
  %194 = vmatpush.bf16.msra.mxu0 0
  %195 = vmatpush.bf16.msra.mxu0 0
  %196 = vmatpush.bf16.msra.mxu0 0
  %197 = vmatpush.bf16.msra.mxu0 0
  %198 = vmatpush.bf16.msra.mxu0 %v171
  %199 = vmatpush.bf16.msra.mxu0 %v169
  %200 = vmatmul.bf16.gmra.mxu0 %v177
  %v201 = vpop.f32.mrf.mxu0
  %v202 = vpop.f32.mrf.mxu0
  %v203 = vadd.f32 0.0, %v202
  %204 = vdwg.mxu0
  %v205 = vld [vmem:[#allocation2] sm:$0xff]
  %v206 = vadd.f32 %v189, %v205
  %v207 = vld [vmem:[#allocation2 + $0x78] sm:$0xff]
  %v208 = vadd.f32 %v203, %v207
  %v209 = vxor.u32 %v206, 2147483648
  %v210 = vxor.u32 %v208, 2147483648
  %v211 = vmul.f32 %v209, 1.442695
  %v212 = vpow.pop %v211
  %v213 = vmul.f32 %v210, 1.442695
  %v214 = vpow.pop %v213
  %v215 = vadd.f32 %v212, 1.0
  %v216 = vadd.f32 %v214, 1.0
  %v217 = vrcp.pop %v215
  %v218 = vmul.f32 %v215, %v217
  %v219 = vsub.f32 1.0, %v218
  %v220 = vmul.f32 %v217, %v219
  %v221 = vadd.f32 %v217, %v220
  %vm222 = vweird.f32 %v215
  %vm223 = vweird.f32 %v217
  %vm224 = vmor %vm222, %vm223
  %v225 = vsel %vm224, %v217, %v221
  %v226 = vand.u32 2147483647, %v215
  %vm227 = vcmp.eq.f32.partialorder %v226, 8.507059e+37
  %v228 = vand.u32 %v215, 2147483648
  %v229 = vor.u32 1.1754944e-38, %v228
  %v230 = vsel %vm227, %v229, %v225
  %v231 = vmul.f32 1.0, %v230
  %v232 = vrcp.pop %v216
  %v233 = vmul.f32 %v216, %v232
  %v234 = vsub.f32 1.0, %v233
  %v235 = vmul.f32 %v232, %v234
  %v236 = vadd.f32 %v232, %v235
  %vm237 = vweird.f32 %v216
  %vm238 = vweird.f32 %v232
  %vm239 = vmor %vm237, %vm238
  %v240 = vsel %vm239, %v232, %v236
  %v241 = vand.u32 2147483647, %v216
  %vm242 = vcmp.eq.f32.partialorder %v241, 8.507059e+37
  %v243 = vand.u32 %v216, 2147483648
  %v244 = vor.u32 1.1754944e-38, %v243
  %v245 = vsel %vm242, %v244, %v240
  %v246 = vmul.f32 1.0, %v245
  %v247 = vtanh.pop %v206
  %v248 = vtanh.pop %v208
  %251 = vrot.lane.b32.xlu0 %v153, 32
  %v252 = vpop.permute.xlu0 %251
  %253 = vrot.lane.b32.xlu0 %v154, 32
  %v254 = vpop.permute.xlu0 %253
  %v257 = vmul.f32 %v231, %v252
  %v258 = vmul.f32 %v246, %v254
  %261 = vrot.lane.b32.xlu0 %v247, 64
  %v262 = vpop.permute.xlu0 %261
  %263 = vrot.lane.b32.xlu0 %v248, 64
  %v264 = vpop.permute.xlu0 %263
  %v267 = vmul.f32 %v231, %v262
  %v268 = vmul.f32 %v246, %v264
  %271 = vrot.lane.b32.xlu0 %v267, 32
  %v272 = vpop.permute.xlu0 %271
  %273 = vrot.lane.b32.xlu0 %v268, 32
  %v274 = vpop.permute.xlu0 %273
  %v277 = vadd.f32 %v257, %v272
  %v278 = vadd.f32 %v258, %v274
  %v279 = vtanh.pop %v277
  %v280 = vtanh.pop %v278
  %283 = vrot.lane.b32.xlu0 %v279, 64
  %v284 = vpop.permute.xlu0 %283
  %285 = vrot.lane.b32.xlu0 %v280, 64
  %v286 = vpop.permute.xlu0 %285
  %v289 = vmul.f32 %v231, %v284
  %v290 = vmul.f32 %v246, %v286
  %v291 = vpack.c.bf16 %v290, %v289
  %293 = vrot.lane.b32.xlu0 %v291, 32
  %v294 = vpop.permute.xlu0 %293
  %v296 = vsel %vm60, %v294, 0
  %298 = vmatpush.bf16.msra.mxu0 0
  %299 = vmatpush.bf16.msra.mxu0 0
  %300 = vmatpush.bf16.msra.mxu0 0
  %301 = vmatpush.bf16.msra.mxu0 0
  %302 = vmatpush.bf16.msra.mxu0 0
  %303 = vmatpush.bf16.msra.mxu0 0
  %304 = vmatpush.bf16.msra.mxu0 %v170
  %305 = vmatpush.bf16.msra.mxu0 %v168
  %306 = vmatmul.bf16.gmra.mxu0 %v296
  %v307 = vpop.f32.mrf.mxu0
  %v308 = vadd.f32 0.0, %v307
  %v309 = vpop.f32.mrf.mxu0
  %310 = vdwg.mxu0
  %311 = vmatpush.bf16.msra.mxu0 0
  %312 = vmatpush.bf16.msra.mxu0 0
  %313 = vmatpush.bf16.msra.mxu0 0
  %314 = vmatpush.bf16.msra.mxu0 0
  %315 = vmatpush.bf16.msra.mxu0 0
  %316 = vmatpush.bf16.msra.mxu0 0
  %317 = vmatpush.bf16.msra.mxu0 %v171
  %318 = vmatpush.bf16.msra.mxu0 %v169
  %319 = vmatmul.bf16.gmra.mxu0 %v296
  %v320 = vpop.f32.mrf.mxu0
  %v321 = vpop.f32.mrf.mxu0
  %v322 = vadd.f32 0.0, %v321
  %323 = vdwg.mxu0
  %v324 = vld [vmem:[#allocation2 + $0x10] sm:$0xff]
  %v325 = vadd.f32 %v308, %v324
  %v326 = vld [vmem:[#allocation2 + $0x68] sm:$0xff]
  %v327 = vadd.f32 %v322, %v326
  %v328 = vxor.u32 %v325, 2147483648
  %v329 = vxor.u32 %v327, 2147483648
  %v330 = vmul.f32 %v328, 1.442695
  %v331 = vpow.pop %v330
  %v332 = vmul.f32 %v329, 1.442695
  %v333 = vpow.pop %v332
  %v334 = vadd.f32 %v331, 1.0
  %v335 = vadd.f32 %v333, 1.0
  %v336 = vrcp.pop %v334
  %v337 = vmul.f32 %v334, %v336
  %v338 = vsub.f32 1.0, %v337
  %v339 = vmul.f32 %v336, %v338
  %v340 = vadd.f32 %v336, %v339
  %vm341 = vweird.f32 %v334
  %vm342 = vweird.f32 %v336
  %vm343 = vmor %vm341, %vm342
  %v344 = vsel %vm343, %v336, %v340
  %v345 = vand.u32 2147483647, %v334
  %vm346 = vcmp.eq.f32.partialorder %v345, 8.507059e+37
  %v347 = vand.u32 %v334, 2147483648
  %v348 = vor.u32 1.1754944e-38, %v347
  %v349 = vsel %vm346, %v348, %v344
  %v350 = vmul.f32 1.0, %v349
  %v351 = vrcp.pop %v335
  %v352 = vmul.f32 %v335, %v351
  %v353 = vsub.f32 1.0, %v352
  %v354 = vmul.f32 %v351, %v353
  %v355 = vadd.f32 %v351, %v354
  %vm356 = vweird.f32 %v335
  %vm357 = vweird.f32 %v351
  %vm358 = vmor %vm356, %vm357
  %v359 = vsel %vm358, %v351, %v355
  %v360 = vand.u32 2147483647, %v335
  %vm361 = vcmp.eq.f32.partialorder %v360, 8.507059e+37
  %v362 = vand.u32 %v335, 2147483648
  %v363 = vor.u32 1.1754944e-38, %v362
  %v364 = vsel %vm361, %v363, %v359
  %v365 = vmul.f32 1.0, %v364
  %v366 = vtanh.pop %v325
  %v367 = vtanh.pop %v327
  %v368 = vmul.f32 %v350, %v277
  %v369 = vmul.f32 %v365, %v278
  %372 = vrot.lane.b32.xlu0 %v366, 64
  %v373 = vpop.permute.xlu0 %372
  %374 = vrot.lane.b32.xlu0 %v367, 64
  %v375 = vpop.permute.xlu0 %374
  %v378 = vmul.f32 %v350, %v373
  %v379 = vmul.f32 %v365, %v375
  %382 = vrot.lane.b32.xlu0 %v378, 32
  %v383 = vpop.permute.xlu0 %382
  %384 = vrot.lane.b32.xlu0 %v379, 32
  %v385 = vpop.permute.xlu0 %384
  %v388 = vadd.f32 %v368, %v383
  %v389 = vadd.f32 %v369, %v385
  %v390 = vtanh.pop %v388
  %v391 = vtanh.pop %v389
  %394 = vrot.lane.b32.xlu0 %v390, 64
  %v395 = vpop.permute.xlu0 %394
  %396 = vrot.lane.b32.xlu0 %v391, 64
  %v397 = vpop.permute.xlu0 %396
  %v400 = vmul.f32 %v350, %v395
  %v401 = vmul.f32 %v365, %v397
  %v402 = vpack.c.bf16 %v401, %v400
  %404 = vrot.lane.b32.xlu0 %v402, 32
  %v405 = vpop.permute.xlu0 %404
  %v407 = vsel %vm60, %v405, 0
  %409 = vmatpush.bf16.msra.mxu0 0
  %410 = vmatpush.bf16.msra.mxu0 0
  %411 = vmatpush.bf16.msra.mxu0 0
  %412 = vmatpush.bf16.msra.mxu0 0
  %413 = vmatpush.bf16.msra.mxu0 0
  %414 = vmatpush.bf16.msra.mxu0 0
  %415 = vmatpush.bf16.msra.mxu0 %v170
  %416 = vmatpush.bf16.msra.mxu0 %v168
  %417 = vmatmul.bf16.gmra.mxu0 %v407
  %v418 = vpop.f32.mrf.mxu0
  %v419 = vadd.f32 0.0, %v418
  %v420 = vpop.f32.mrf.mxu0
  %421 = vdwg.mxu0
  %422 = vmatpush.bf16.msra.mxu0 0
  %423 = vmatpush.bf16.msra.mxu0 0
  %424 = vmatpush.bf16.msra.mxu0 0
  %425 = vmatpush.bf16.msra.mxu0 0
  %426 = vmatpush.bf16.msra.mxu0 0
  %427 = vmatpush.bf16.msra.mxu0 0
  %428 = vmatpush.bf16.msra.mxu0 %v171
  %429 = vmatpush.bf16.msra.mxu0 %v169
  %430 = vmatmul.bf16.gmra.mxu0 %v407
  %v431 = vpop.f32.mrf.mxu0
  %v432 = vpop.f32.mrf.mxu0
  %v433 = vadd.f32 0.0, %v432
  %434 = vdwg.mxu0
  %v435 = vld [vmem:[#allocation2 + $0x20] sm:$0xff]
  %v436 = vadd.f32 %v419, %v435
  %v437 = vld [vmem:[#allocation2 + $0x58] sm:$0xff]
  %v438 = vadd.f32 %v433, %v437
  %v439 = vxor.u32 %v436, 2147483648
  %v440 = vxor.u32 %v438, 2147483648
  %v441 = vmul.f32 %v439, 1.442695
  %v442 = vpow.pop %v441
  %v443 = vmul.f32 %v440, 1.442695
  %v444 = vpow.pop %v443
  %v445 = vadd.f32 %v442, 1.0
  %v446 = vadd.f32 %v444, 1.0
  %v447 = vrcp.pop %v445
  %v448 = vmul.f32 %v445, %v447
  %v449 = vsub.f32 1.0, %v448
  %v450 = vmul.f32 %v447, %v449
  %v451 = vadd.f32 %v447, %v450
  %vm452 = vweird.f32 %v445
  %vm453 = vweird.f32 %v447
  %vm454 = vmor %vm452, %vm453
  %v455 = vsel %vm454, %v447, %v451
  %v456 = vand.u32 2147483647, %v445
  %vm457 = vcmp.eq.f32.partialorder %v456, 8.507059e+37
  %v458 = vand.u32 %v445, 2147483648
  %v459 = vor.u32 1.1754944e-38, %v458
  %v460 = vsel %vm457, %v459, %v455
  %v461 = vmul.f32 1.0, %v460
  %v462 = vrcp.pop %v446
  %v463 = vmul.f32 %v446, %v462
  %v464 = vsub.f32 1.0, %v463
  %v465 = vmul.f32 %v462, %v464
  %v466 = vadd.f32 %v462, %v465
  %vm467 = vweird.f32 %v446
  %vm468 = vweird.f32 %v462
  %vm469 = vmor %vm467, %vm468
  %v470 = vsel %vm469, %v462, %v466
  %v471 = vand.u32 2147483647, %v446
  %vm472 = vcmp.eq.f32.partialorder %v471, 8.507059e+37
  %v473 = vand.u32 %v446, 2147483648
  %v474 = vor.u32 1.1754944e-38, %v473
  %v475 = vsel %vm472, %v474, %v470
  %v476 = vmul.f32 1.0, %v475
  %v477 = vtanh.pop %v436
  %v478 = vtanh.pop %v438
  %v479 = vmul.f32 %v461, %v388
  %v480 = vmul.f32 %v476, %v389
  %483 = vrot.lane.b32.xlu0 %v477, 64
  %v484 = vpop.permute.xlu0 %483
  %485 = vrot.lane.b32.xlu0 %v478, 64
  %v486 = vpop.permute.xlu0 %485
  %v489 = vmul.f32 %v461, %v484
  %v490 = vmul.f32 %v476, %v486
  %493 = vrot.lane.b32.xlu0 %v489, 32
  %v494 = vpop.permute.xlu0 %493
  %495 = vrot.lane.b32.xlu0 %v490, 32
  %v496 = vpop.permute.xlu0 %495
  %v499 = vadd.f32 %v479, %v494
  %v500 = vadd.f32 %v480, %v496
  %v501 = vtanh.pop %v499
  %v502 = vtanh.pop %v500
  %505 = vrot.lane.b32.xlu0 %v501, 64
  %v506 = vpop.permute.xlu0 %505
  %507 = vrot.lane.b32.xlu0 %v502, 64
  %v508 = vpop.permute.xlu0 %507
  %v511 = vmul.f32 %v461, %v506
  %v512 = vmul.f32 %v476, %v508
  %v513 = vpack.c.bf16 %v512, %v511
  %515 = vrot.lane.b32.xlu0 %v513, 32
  %v516 = vpop.permute.xlu0 %515
  %v518 = vsel %vm60, %v516, 0
  %520 = vmatpush.bf16.msra.mxu0 0
  %521 = vmatpush.bf16.msra.mxu0 0
  %522 = vmatpush.bf16.msra.mxu0 0
  %523 = vmatpush.bf16.msra.mxu0 0
  %524 = vmatpush.bf16.msra.mxu0 0
  %525 = vmatpush.bf16.msra.mxu0 0
  %526 = vmatpush.bf16.msra.mxu0 %v170
  %527 = vmatpush.bf16.msra.mxu0 %v168
  %528 = vmatmul.bf16.gmra.mxu0 %v518
  %v529 = vpop.f32.mrf.mxu0
  %v530 = vadd.f32 0.0, %v529
  %v531 = vpop.f32.mrf.mxu0
  %532 = vdwg.mxu0
  %533 = vmatpush.bf16.msra.mxu0 0
  %534 = vmatpush.bf16.msra.mxu0 0
  %535 = vmatpush.bf16.msra.mxu0 0
  %536 = vmatpush.bf16.msra.mxu0 0
  %537 = vmatpush.bf16.msra.mxu0 0
  %538 = vmatpush.bf16.msra.mxu0 0
  %539 = vmatpush.bf16.msra.mxu0 %v171
  %540 = vmatpush.bf16.msra.mxu0 %v169
  %541 = vmatmul.bf16.gmra.mxu0 %v518
  %v542 = vpop.f32.mrf.mxu0
  %v543 = vpop.f32.mrf.mxu0
  %v544 = vadd.f32 0.0, %v543
  %545 = vdwg.mxu0
  %v546 = vld [vmem:[#allocation2 + $0x30] sm:$0xff]
  %v547 = vadd.f32 %v530, %v546
  %v548 = vld [vmem:[#allocation2 + $0x48] sm:$0xff]
  %v549 = vadd.f32 %v544, %v548
  %v550 = vxor.u32 %v547, 2147483648
  %v551 = vxor.u32 %v549, 2147483648
  %v552 = vmul.f32 %v550, 1.442695
  %v553 = vpow.pop %v552
  %v554 = vmul.f32 %v551, 1.442695
  %v555 = vpow.pop %v554
  %v556 = vadd.f32 %v553, 1.0
  %v557 = vadd.f32 %v555, 1.0
  %v558 = vrcp.pop %v556
  %v559 = vmul.f32 %v556, %v558
  %v560 = vsub.f32 1.0, %v559
  %v561 = vmul.f32 %v558, %v560
  %v562 = vadd.f32 %v558, %v561
  %vm563 = vweird.f32 %v556
  %vm564 = vweird.f32 %v558
  %vm565 = vmor %vm563, %vm564
  %v566 = vsel %vm565, %v558, %v562
  %v567 = vand.u32 2147483647, %v556
  %vm568 = vcmp.eq.f32.partialorder %v567, 8.507059e+37
  %v569 = vand.u32 %v556, 2147483648
  %v570 = vor.u32 1.1754944e-38, %v569
  %v571 = vsel %vm568, %v570, %v566
  %v572 = vmul.f32 1.0, %v571
  %v573 = vrcp.pop %v557
  %v574 = vmul.f32 %v557, %v573
  %v575 = vsub.f32 1.0, %v574
  %v576 = vmul.f32 %v573, %v575
  %v577 = vadd.f32 %v573, %v576
  %vm578 = vweird.f32 %v557
  %vm579 = vweird.f32 %v573
  %vm580 = vmor %vm578, %vm579
  %v581 = vsel %vm580, %v573, %v577
  %v582 = vand.u32 2147483647, %v557
  %vm583 = vcmp.eq.f32.partialorder %v582, 8.507059e+37
  %v584 = vand.u32 %v557, 2147483648
  %v585 = vor.u32 1.1754944e-38, %v584
  %v586 = vsel %vm583, %v585, %v581
  %v587 = vmul.f32 1.0, %v586
  %v588 = vtanh.pop %v547
  %v589 = vtanh.pop %v549
  %v590 = vmul.f32 %v572, %v499
  %v591 = vmul.f32 %v587, %v500
  %594 = vrot.lane.b32.xlu0 %v588, 64
  %v595 = vpop.permute.xlu0 %594
  %596 = vrot.lane.b32.xlu0 %v589, 64
  %v597 = vpop.permute.xlu0 %596
  %v600 = vmul.f32 %v572, %v595
  %v601 = vmul.f32 %v587, %v597
  %604 = vrot.lane.b32.xlu0 %v600, 32
  %v605 = vpop.permute.xlu0 %604
  %606 = vrot.lane.b32.xlu0 %v601, 32
  %v607 = vpop.permute.xlu0 %606
  %v610 = vadd.f32 %v590, %v605
  %v611 = vadd.f32 %v591, %v607
  %v612 = vtanh.pop %v610
  %v613 = vtanh.pop %v611
  %616 = vrot.lane.b32.xlu0 %v612, 64
  %v617 = vpop.permute.xlu0 %616
  %618 = vrot.lane.b32.xlu0 %v613, 64
  %v619 = vpop.permute.xlu0 %618
  %v622 = vmul.f32 %v572, %v617
  %v623 = vmul.f32 %v587, %v619
  %v624 = vpack.c.bf16 %v623, %v622
  %626 = vrot.lane.b32.xlu0 %v624, 32
  %v627 = vpop.permute.xlu0 %626
  %v629 = vsel %vm60, %v627, 0
  %631 = vmatpush.bf16.msra.mxu0 0
  %632 = vmatpush.bf16.msra.mxu0 0
  %633 = vmatpush.bf16.msra.mxu0 0
  %634 = vmatpush.bf16.msra.mxu0 0
  %635 = vmatpush.bf16.msra.mxu0 0
  %636 = vmatpush.bf16.msra.mxu0 0
  %637 = vmatpush.bf16.msra.mxu0 %v170
  %638 = vmatpush.bf16.msra.mxu0 %v168
  %639 = vmatmul.bf16.gmra.mxu0 %v629
  %v640 = vpop.f32.mrf.mxu0
  %v641 = vadd.f32 0.0, %v640
  %v642 = vpop.f32.mrf.mxu0
  %643 = vdwg.mxu0
  %644 = vmatpush.bf16.msra.mxu0 0
  %645 = vmatpush.bf16.msra.mxu0 0
  %646 = vmatpush.bf16.msra.mxu0 0
  %647 = vmatpush.bf16.msra.mxu0 0
  %648 = vmatpush.bf16.msra.mxu0 0
  %649 = vmatpush.bf16.msra.mxu0 0
  %650 = vmatpush.bf16.msra.mxu0 %v171
  %651 = vmatpush.bf16.msra.mxu0 %v169
  %652 = vmatmul.bf16.gmra.mxu0 %v629
  %v653 = vpop.f32.mrf.mxu0
  %v654 = vpop.f32.mrf.mxu0
  %v655 = vadd.f32 0.0, %v654
  %656 = vdwg.mxu0
  %v657 = vld [vmem:[#allocation2 + $0x40] sm:$0xff]
  %v658 = vadd.f32 %v641, %v657
  %v659 = vld [vmem:[#allocation2 + $0x38] sm:$0xff]
  %v660 = vadd.f32 %v655, %v659
  %v661 = vxor.u32 %v658, 2147483648
  %v662 = vxor.u32 %v660, 2147483648
  %v663 = vmul.f32 %v661, 1.442695
  %v664 = vpow.pop %v663
  %v665 = vmul.f32 %v662, 1.442695
  %v666 = vpow.pop %v665
  %v667 = vadd.f32 %v664, 1.0
  %v668 = vadd.f32 %v666, 1.0
  %v669 = vrcp.pop %v667
  %v670 = vmul.f32 %v667, %v669
  %v671 = vsub.f32 1.0, %v670
  %v672 = vmul.f32 %v669, %v671
  %v673 = vadd.f32 %v669, %v672
  %vm674 = vweird.f32 %v667
  %vm675 = vweird.f32 %v669
  %vm676 = vmor %vm674, %vm675
  %v677 = vsel %vm676, %v669, %v673
  %v678 = vand.u32 2147483647, %v667
  %vm679 = vcmp.eq.f32.partialorder %v678, 8.507059e+37
  %v680 = vand.u32 %v667, 2147483648
  %v681 = vor.u32 1.1754944e-38, %v680
  %v682 = vsel %vm679, %v681, %v677
  %v683 = vmul.f32 1.0, %v682
  %v684 = vrcp.pop %v668
  %v685 = vmul.f32 %v668, %v684
  %v686 = vsub.f32 1.0, %v685
  %v687 = vmul.f32 %v684, %v686
  %v688 = vadd.f32 %v684, %v687
  %vm689 = vweird.f32 %v668
  %vm690 = vweird.f32 %v684
  %vm691 = vmor %vm689, %vm690
  %v692 = vsel %vm691, %v684, %v688
  %v693 = vand.u32 2147483647, %v668
  %vm694 = vcmp.eq.f32.partialorder %v693, 8.507059e+37
  %v695 = vand.u32 %v668, 2147483648
  %v696 = vor.u32 1.1754944e-38, %v695
  %v697 = vsel %vm694, %v696, %v692
  %v698 = vmul.f32 1.0, %v697
  %v699 = vtanh.pop %v658
  %v700 = vtanh.pop %v660
  %v701 = vmul.f32 %v683, %v610
  %v702 = vmul.f32 %v698, %v611
  %705 = vrot.lane.b32.xlu0 %v699, 64
  %v706 = vpop.permute.xlu0 %705
  %707 = vrot.lane.b32.xlu0 %v700, 64
  %v708 = vpop.permute.xlu0 %707
  %v711 = vmul.f32 %v683, %v706
  %v712 = vmul.f32 %v698, %v708
  %715 = vrot.lane.b32.xlu0 %v711, 32
  %v716 = vpop.permute.xlu0 %715
  %717 = vrot.lane.b32.xlu0 %v712, 32
  %v718 = vpop.permute.xlu0 %717
  %v721 = vadd.f32 %v701, %v716
  %v722 = vadd.f32 %v702, %v718
  %v723 = vtanh.pop %v721
  %v724 = vtanh.pop %v722
  %727 = vrot.lane.b32.xlu0 %v723, 64
  %v728 = vpop.permute.xlu0 %727
  %729 = vrot.lane.b32.xlu0 %v724, 64
  %v730 = vpop.permute.xlu0 %729
  %v733 = vmul.f32 %v683, %v728
  %v734 = vmul.f32 %v698, %v730
  %v735 = vpack.c.bf16 %v734, %v733
  %737 = vrot.lane.b32.xlu0 %v735, 32
  %v738 = vpop.permute.xlu0 %737
  %v740 = vsel %vm60, %v738, 0
  %742 = vmatpush.bf16.msra.mxu0 0
  %743 = vmatpush.bf16.msra.mxu0 0
  %744 = vmatpush.bf16.msra.mxu0 0
  %745 = vmatpush.bf16.msra.mxu0 0
  %746 = vmatpush.bf16.msra.mxu0 0
  %747 = vmatpush.bf16.msra.mxu0 0
  %748 = vmatpush.bf16.msra.mxu0 %v170
  %749 = vmatpush.bf16.msra.mxu0 %v168
  %750 = vmatmul.bf16.gmra.mxu0 %v740
  %v751 = vpop.f32.mrf.mxu0
  %v752 = vadd.f32 0.0, %v751
  %v753 = vpop.f32.mrf.mxu0
  %754 = vdwg.mxu0
  %755 = vmatpush.bf16.msra.mxu0 0
  %756 = vmatpush.bf16.msra.mxu0 0
  %757 = vmatpush.bf16.msra.mxu0 0
  %758 = vmatpush.bf16.msra.mxu0 0
  %759 = vmatpush.bf16.msra.mxu0 0
  %760 = vmatpush.bf16.msra.mxu0 0
  %761 = vmatpush.bf16.msra.mxu0 %v171
  %762 = vmatpush.bf16.msra.mxu0 %v169
  %763 = vmatmul.bf16.gmra.mxu0 %v740
  %v764 = vpop.f32.mrf.mxu0
  %v765 = vpop.f32.mrf.mxu0
  %v766 = vadd.f32 0.0, %v765
  %767 = vdwg.mxu0
  %v768 = vld [vmem:[#allocation2 + $0x50] sm:$0xff]
  %v769 = vadd.f32 %v752, %v768
  %v770 = vld [vmem:[#allocation2 + $0x28] sm:$0xff]
  %v771 = vadd.f32 %v766, %v770
  %v772 = vxor.u32 %v769, 2147483648
  %v773 = vxor.u32 %v771, 2147483648
  %v774 = vmul.f32 %v772, 1.442695
  %v775 = vpow.pop %v774
  %v776 = vmul.f32 %v773, 1.442695
  %v777 = vpow.pop %v776
  %v778 = vadd.f32 %v775, 1.0
  %v779 = vadd.f32 %v777, 1.0
  %v780 = vrcp.pop %v778
  %v781 = vmul.f32 %v778, %v780
  %v782 = vsub.f32 1.0, %v781
  %v783 = vmul.f32 %v780, %v782
  %v784 = vadd.f32 %v780, %v783
  %vm785 = vweird.f32 %v778
  %vm786 = vweird.f32 %v780
  %vm787 = vmor %vm785, %vm786
  %v788 = vsel %vm787, %v780, %v784
  %v789 = vand.u32 2147483647, %v778
  %vm790 = vcmp.eq.f32.partialorder %v789, 8.507059e+37
  %v791 = vand.u32 %v778, 2147483648
  %v792 = vor.u32 1.1754944e-38, %v791
  %v793 = vsel %vm790, %v792, %v788
  %v794 = vmul.f32 1.0, %v793
  %v795 = vrcp.pop %v779
  %v796 = vmul.f32 %v779, %v795
  %v797 = vsub.f32 1.0, %v796
  %v798 = vmul.f32 %v795, %v797
  %v799 = vadd.f32 %v795, %v798
  %vm800 = vweird.f32 %v779
  %vm801 = vweird.f32 %v795
  %vm802 = vmor %vm800, %vm801
  %v803 = vsel %vm802, %v795, %v799
  %v804 = vand.u32 2147483647, %v779
  %vm805 = vcmp.eq.f32.partialorder %v804, 8.507059e+37
  %v806 = vand.u32 %v779, 2147483648
  %v807 = vor.u32 1.1754944e-38, %v806
  %v808 = vsel %vm805, %v807, %v803
  %v809 = vmul.f32 1.0, %v808
  %v810 = vtanh.pop %v769
  %v811 = vtanh.pop %v771
  %v812 = vmul.f32 %v794, %v721
  %v813 = vmul.f32 %v809, %v722
  %816 = vrot.lane.b32.xlu0 %v810, 64
  %v817 = vpop.permute.xlu0 %816
  %818 = vrot.lane.b32.xlu0 %v811, 64
  %v819 = vpop.permute.xlu0 %818
  %v822 = vmul.f32 %v794, %v817
  %v823 = vmul.f32 %v809, %v819
  %826 = vrot.lane.b32.xlu0 %v822, 32
  %v827 = vpop.permute.xlu0 %826
  %828 = vrot.lane.b32.xlu0 %v823, 32
  %v829 = vpop.permute.xlu0 %828
  %v832 = vadd.f32 %v812, %v827
  %v833 = vadd.f32 %v813, %v829
  %v834 = vtanh.pop %v832
  %v835 = vtanh.pop %v833
  %838 = vrot.lane.b32.xlu0 %v834, 64
  %v839 = vpop.permute.xlu0 %838
  %840 = vrot.lane.b32.xlu0 %v835, 64
  %v841 = vpop.permute.xlu0 %840
  %v844 = vmul.f32 %v794, %v839
  %v845 = vmul.f32 %v809, %v841
  %v846 = vpack.c.bf16 %v845, %v844
  %848 = vrot.lane.b32.xlu0 %v846, 32
  %v849 = vpop.permute.xlu0 %848
  %v851 = vsel %vm60, %v849, 0
  %853 = vmatpush.bf16.msra.mxu0 0
  %854 = vmatpush.bf16.msra.mxu0 0
  %855 = vmatpush.bf16.msra.mxu0 0
  %856 = vmatpush.bf16.msra.mxu0 0
  %857 = vmatpush.bf16.msra.mxu0 0
  %858 = vmatpush.bf16.msra.mxu0 0
  %859 = vmatpush.bf16.msra.mxu0 %v170
  %860 = vmatpush.bf16.msra.mxu0 %v168
  %861 = vmatmul.bf16.gmra.mxu0 %v851
  %v862 = vpop.f32.mrf.mxu0
  %v863 = vadd.f32 0.0, %v862
  %v864 = vpop.f32.mrf.mxu0
  %865 = vdwg.mxu0
  %866 = vmatpush.bf16.msra.mxu0 0
  %867 = vmatpush.bf16.msra.mxu0 0
  %868 = vmatpush.bf16.msra.mxu0 0
  %869 = vmatpush.bf16.msra.mxu0 0
  %870 = vmatpush.bf16.msra.mxu0 0
  %871 = vmatpush.bf16.msra.mxu0 0
  %872 = vmatpush.bf16.msra.mxu0 %v171
  %873 = vmatpush.bf16.msra.mxu0 %v169
  %874 = vmatmul.bf16.gmra.mxu0 %v851
  %v875 = vpop.f32.mrf.mxu0
  %v876 = vpop.f32.mrf.mxu0
  %v877 = vadd.f32 0.0, %v876
  %878 = vdwg.mxu0
  %v879 = vld [vmem:[#allocation2 + $0x60] sm:$0xff]
  %v880 = vadd.f32 %v863, %v879
  %v881 = vld [vmem:[#allocation2 + $0x18] sm:$0xff]
  %v882 = vadd.f32 %v877, %v881
  %v883 = vxor.u32 %v880, 2147483648
  %v884 = vxor.u32 %v882, 2147483648
  %v885 = vmul.f32 %v883, 1.442695
  %v886 = vpow.pop %v885
  %v887 = vmul.f32 %v884, 1.442695
  %v888 = vpow.pop %v887
  %v889 = vadd.f32 %v886, 1.0
  %v890 = vadd.f32 %v888, 1.0
  %v891 = vrcp.pop %v889
  %v892 = vmul.f32 %v889, %v891
  %v893 = vsub.f32 1.0, %v892
  %v894 = vmul.f32 %v891, %v893
  %v895 = vadd.f32 %v891, %v894
  %vm896 = vweird.f32 %v889
  %vm897 = vweird.f32 %v891
  %vm898 = vmor %vm896, %vm897
  %v899 = vsel %vm898, %v891, %v895
  %v900 = vand.u32 2147483647, %v889
  %vm901 = vcmp.eq.f32.partialorder %v900, 8.507059e+37
  %v902 = vand.u32 %v889, 2147483648
  %v903 = vor.u32 1.1754944e-38, %v902
  %v904 = vsel %vm901, %v903, %v899
  %v905 = vmul.f32 1.0, %v904
  %v906 = vrcp.pop %v890
  %v907 = vmul.f32 %v890, %v906
  %v908 = vsub.f32 1.0, %v907
  %v909 = vmul.f32 %v906, %v908
  %v910 = vadd.f32 %v906, %v909
  %vm911 = vweird.f32 %v890
  %vm912 = vweird.f32 %v906
  %vm913 = vmor %vm911, %vm912
  %v914 = vsel %vm913, %v906, %v910
  %v915 = vand.u32 2147483647, %v890
  %vm916 = vcmp.eq.f32.partialorder %v915, 8.507059e+37
  %v917 = vand.u32 %v890, 2147483648
  %v918 = vor.u32 1.1754944e-38, %v917
  %v919 = vsel %vm916, %v918, %v914
  %v920 = vmul.f32 1.0, %v919
  %v921 = vtanh.pop %v880
  %v922 = vtanh.pop %v882
  %v923 = vmul.f32 %v905, %v832
  %v924 = vmul.f32 %v920, %v833
  %927 = vrot.lane.b32.xlu0 %v921, 64
  %v928 = vpop.permute.xlu0 %927
  %929 = vrot.lane.b32.xlu0 %v922, 64
  %v930 = vpop.permute.xlu0 %929
  %v933 = vmul.f32 %v905, %v928
  %v934 = vmul.f32 %v920, %v930
  %937 = vrot.lane.b32.xlu0 %v933, 32
  %v938 = vpop.permute.xlu0 %937
  %939 = vrot.lane.b32.xlu0 %v934, 32
  %v940 = vpop.permute.xlu0 %939
  %v943 = vadd.f32 %v923, %v938
  %v944 = vadd.f32 %v924, %v940
  %v945 = vtanh.pop %v943
  %v946 = vtanh.pop %v944
  %949 = vrot.lane.b32.xlu0 %v945, 64
  %v950 = vpop.permute.xlu0 %949
  %951 = vrot.lane.b32.xlu0 %v946, 64
  %v952 = vpop.permute.xlu0 %951
  %v955 = vmul.f32 %v905, %v950
  %v956 = vmul.f32 %v920, %v952
  %v957 = vpack.c.bf16 %v956, %v955
  %959 = vrot.lane.b32.xlu0 %v957, 32
  %v960 = vpop.permute.xlu0 %959
  %v962 = vsel %vm60, %v960, 0
  %964 = vmatpush.bf16.msra.mxu0 0
  %965 = vmatpush.bf16.msra.mxu0 0
  %966 = vmatpush.bf16.msra.mxu0 0
  %967 = vmatpush.bf16.msra.mxu0 0
  %968 = vmatpush.bf16.msra.mxu0 0
  %969 = vmatpush.bf16.msra.mxu0 0
  %970 = vmatpush.bf16.msra.mxu0 %v170
  %971 = vmatpush.bf16.msra.mxu0 %v168
  %972 = vmatmul.bf16.gmra.mxu0 %v962
  %v973 = vpop.f32.mrf.mxu0
  %v974 = vadd.f32 0.0, %v973
  %v975 = vpop.f32.mrf.mxu0
  %976 = vdwg.mxu0
  %977 = vmatpush.bf16.msra.mxu0 0
  %978 = vmatpush.bf16.msra.mxu0 0
  %979 = vmatpush.bf16.msra.mxu0 0
  %980 = vmatpush.bf16.msra.mxu0 0
  %981 = vmatpush.bf16.msra.mxu0 0
  %982 = vmatpush.bf16.msra.mxu0 0
  %983 = vmatpush.bf16.msra.mxu0 %v171
  %984 = vmatpush.bf16.msra.mxu0 %v169
  %985 = vmatmul.bf16.gmra.mxu0 %v962
  %v986 = vpop.f32.mrf.mxu0
  %v987 = vpop.f32.mrf.mxu0
  %v988 = vadd.f32 0.0, %v987
  %989 = vdwg.mxu0
  %v990 = vld [vmem:[#allocation2 + $0x70] sm:$0xff]
  %v991 = vadd.f32 %v974, %v990
  %v992 = vld [vmem:[#allocation2 + $0x8] sm:$0xff]
  %v993 = vadd.f32 %v988, %v992
  %v994 = vxor.u32 %v991, 2147483648
  %v995 = vxor.u32 %v993, 2147483648
  %v996 = vmul.f32 %v994, 1.442695
  %v997 = vpow.pop %v996
  %v998 = vmul.f32 %v995, 1.442695
  %v999 = vpow.pop %v998
  %v1000 = vadd.f32 %v997, 1.0
  %v1001 = vadd.f32 %v999, 1.0
  %v1002 = vrcp.pop %v1000
  %v1003 = vmul.f32 %v1000, %v1002
  %v1004 = vsub.f32 1.0, %v1003
  %v1005 = vmul.f32 %v1002, %v1004
  %v1006 = vadd.f32 %v1002, %v1005
  %vm1007 = vweird.f32 %v1000
  %vm1008 = vweird.f32 %v1002
  %vm1009 = vmor %vm1007, %vm1008
  %v1010 = vsel %vm1009, %v1002, %v1006
  %v1011 = vand.u32 2147483647, %v1000
  %vm1012 = vcmp.eq.f32.partialorder %v1011, 8.507059e+37
  %v1013 = vand.u32 %v1000, 2147483648
  %v1014 = vor.u32 1.1754944e-38, %v1013
  %v1015 = vsel %vm1012, %v1014, %v1010
  %v1016 = vmul.f32 1.0, %v1015
  %v1017 = vrcp.pop %v1001
  %v1018 = vmul.f32 %v1001, %v1017
  %v1019 = vsub.f32 1.0, %v1018
  %v1020 = vmul.f32 %v1017, %v1019
  %v1021 = vadd.f32 %v1017, %v1020
  %vm1022 = vweird.f32 %v1001
  %vm1023 = vweird.f32 %v1017
  %vm1024 = vmor %vm1022, %vm1023
  %v1025 = vsel %vm1024, %v1017, %v1021
  %v1026 = vand.u32 2147483647, %v1001
  %vm1027 = vcmp.eq.f32.partialorder %v1026, 8.507059e+37
  %v1028 = vand.u32 %v1001, 2147483648
  %v1029 = vor.u32 1.1754944e-38, %v1028
  %v1030 = vsel %vm1027, %v1029, %v1025
  %v1031 = vmul.f32 1.0, %v1030
  %v1032 = vtanh.pop %v991
  %v1033 = vtanh.pop %v993
  %v1034 = vmul.f32 %v1016, %v943
  %v1035 = vmul.f32 %v1031, %v944
  %1038 = vrot.lane.b32.xlu0 %v1032, 64
  %v1039 = vpop.permute.xlu0 %1038
  %1040 = vrot.lane.b32.xlu0 %v1033, 64
  %v1041 = vpop.permute.xlu0 %1040
  %v1044 = vmul.f32 %v1016, %v1039
  %v1045 = vmul.f32 %v1031, %v1041
  %1048 = vrot.lane.b32.xlu0 %v1044, 32
  %v1049 = vpop.permute.xlu0 %1048
  %1050 = vrot.lane.b32.xlu0 %v1045, 32
  %v1051 = vpop.permute.xlu0 %1050
  %v1054 = vadd.f32 %v1034, %v1049
  %v1055 = vadd.f32 %v1035, %v1051
  %v1056 = vtanh.pop %v1054
  %v1057 = vtanh.pop %v1055
  %1060 = vrot.lane.b32.xlu0 %v1056, 64
  %v1061 = vpop.permute.xlu0 %1060
  %1062 = vrot.lane.b32.xlu0 %v1057, 64
  %v1063 = vpop.permute.xlu0 %1062
  %v1066 = vmul.f32 %v1016, %v1061
  %v1067 = vmul.f32 %v1031, %v1063
  %v1068 = vpack.c.bf16 %v400, %v289
  %v1069 = vpack.c.bf16 %v622, %v511
  %v1070 = vpack.c.bf16 %v844, %v733
  %v1071 = vpack.c.bf16 %v1066, %v955
  %v1072 = vld [vmem:[%s1 + $0x40] sm:$0xff]
  %v1073 = vld [vmem:[%s1 + $0x48] sm:$0xff]
  %v1074 = vld [vmem:[%s1 + $0x50] sm:$0xff]
  %v1075 = vld [vmem:[%s1 + $0x58] sm:$0xff]
  %v1076 = vpack.c.bf16 %v956, %v1067
  %v1077 = vpack.c.bf16 %v734, %v845
  %v1078 = vpack.c.bf16 %v512, %v623
  %v1079 = vpack.c.bf16 %v290, %v401
  %v1080 = vld [vmem:[%s1 + $0x60] sm:$0xff]
  %v1081 = vld [vmem:[%s1 + $0x68] sm:$0xff]
  %v1082 = vld [vmem:[%s1 + $0x70] sm:$0xff]
  %v1083 = vld [vmem:[%s1 + $0x78] sm:$0xff]
  %1088 = vrot.lane.b32.xlu0 %v1076, 32
  %v1089 = vpop.permute.xlu0 %1088
  %1090 = vrot.lane.b32.xlu0 %v1077, 32
  %v1091 = vpop.permute.xlu0 %1090
  %1092 = vrot.lane.b32.xlu0 %v1078, 32
  %v1093 = vpop.permute.xlu0 %1092
  %1094 = vrot.lane.b32.xlu0 %v1079, 32
  %v1095 = vpop.permute.xlu0 %1094
  %v1100 = vunpack.c.l.b16 %v1080
  %v1101 = vunpack.c.h.b16 %v1080
  %v1102 = vunpack.c.l.b16 %v1081
  %v1103 = vunpack.c.h.b16 %v1081
  %v1104 = vunpack.c.l.b16 %v1082
  %v1105 = vunpack.c.h.b16 %v1082
  %v1106 = vunpack.c.l.b16 %v1083
  %v1107 = vunpack.c.h.b16 %v1083
  %v1108 = vpack.c.b16 %v1102, %v1100
  %v1109 = vpack.c.b16 %v1103, %v1101
  %v1110 = vpack.c.b16 %v1106, %v1104
  %v1111 = vpack.c.b16 %v1107, %v1105
  %v1117 = vsel %vm60, %v1089, 0
  %v1120 = vsel %vm60, %v1091, 0
  %v1123 = vsel %vm60, %v1093, 0
  %v1126 = vsel %vm60, %v1095, 0
  %1128 = vmatpush.bf16.msra.mxu0 0
  %1129 = vmatpush.bf16.msra.mxu0 0
  %1130 = vmatpush.bf16.msra.mxu0 0
  %1131 = vmatpush.bf16.msra.mxu0 0
  %1132 = vmatpush.bf16.msra.mxu0 0
  %1133 = vmatpush.bf16.msra.mxu0 0
  %1134 = vmatpush.bf16.msra.mxu0 %v1110
  %1135 = vmatpush.bf16.msra.mxu0 %v1108
  %1136 = vmatmul.bf16.gmra.mxu0 %v1117
  %v1137 = vpop.f32.mrf.mxu0
  %v1138 = vadd.f32 0.0, %v1137
  %v1139 = vpop.f32.mrf.mxu0
  %v1140 = vadd.f32 0.0, %v1139
  %1141 = vmatmul.bf16.gmra.mxu0 %v1120
  %v1142 = vpop.f32.mrf.mxu0
  %v1143 = vadd.f32 0.0, %v1142
  %v1144 = vpop.f32.mrf.mxu0
  %v1145 = vadd.f32 0.0, %v1144
  %1146 = vmatmul.bf16.gmra.mxu0 %v1123
  %v1147 = vpop.f32.mrf.mxu0
  %v1148 = vadd.f32 0.0, %v1147
  %v1149 = vpop.f32.mrf.mxu0
  %v1150 = vadd.f32 0.0, %v1149
  %1151 = vmatmul.bf16.gmra.mxu0 %v1126
  %v1152 = vpop.f32.mrf.mxu0
  %v1153 = vadd.f32 0.0, %v1152
  %v1154 = vpop.f32.mrf.mxu0
  %v1155 = vadd.f32 0.0, %v1154
  %1156 = vdwg.mxu0
  %1157 = vmatpush.bf16.msra.mxu0 0
  %1158 = vmatpush.bf16.msra.mxu0 0
  %1159 = vmatpush.bf16.msra.mxu0 0
  %1160 = vmatpush.bf16.msra.mxu0 0
  %1161 = vmatpush.bf16.msra.mxu0 0
  %1162 = vmatpush.bf16.msra.mxu0 0
  %1163 = vmatpush.bf16.msra.mxu0 %v1111
  %1164 = vmatpush.bf16.msra.mxu0 %v1109
  %1165 = vmatmul.bf16.gmra.mxu0 %v1117
  %v1166 = vpop.f32.mrf.mxu0
  %v1167 = vadd.f32 0.0, %v1166
  %v1168 = vpop.f32.mrf.mxu0
  %v1169 = vadd.f32 0.0, %v1168
  %1170 = vmatmul.bf16.gmra.mxu0 %v1120
  %v1171 = vpop.f32.mrf.mxu0
  %v1172 = vadd.f32 0.0, %v1171
  %v1173 = vpop.f32.mrf.mxu0
  %v1174 = vadd.f32 0.0, %v1173
  %1175 = vmatmul.bf16.gmra.mxu0 %v1123
  %v1176 = vpop.f32.mrf.mxu0
  %v1177 = vadd.f32 0.0, %v1176
  %v1178 = vpop.f32.mrf.mxu0
  %v1179 = vadd.f32 0.0, %v1178
  %1180 = vmatmul.bf16.gmra.mxu0 %v1126
  %v1181 = vpop.f32.mrf.mxu0
  %v1182 = vadd.f32 0.0, %v1181
  %v1183 = vpop.f32.mrf.mxu0
  %v1184 = vadd.f32 0.0, %v1183
  %1185 = vdwg.mxu0
  %1190 = vrot.lane.b32.xlu0 %v1068, 32
  %v1191 = vpop.permute.xlu0 %1190
  %1192 = vrot.lane.b32.xlu0 %v1069, 32
  %v1193 = vpop.permute.xlu0 %1192
  %1194 = vrot.lane.b32.xlu0 %v1070, 32
  %v1195 = vpop.permute.xlu0 %1194
  %1196 = vrot.lane.b32.xlu0 %v1071, 32
  %v1197 = vpop.permute.xlu0 %1196
  %v1202 = vunpack.c.l.b16 %v1072
  %v1203 = vunpack.c.h.b16 %v1072
  %v1204 = vunpack.c.l.b16 %v1073
  %v1205 = vunpack.c.h.b16 %v1073
  %v1206 = vunpack.c.l.b16 %v1074
  %v1207 = vunpack.c.h.b16 %v1074
  %v1208 = vunpack.c.l.b16 %v1075
  %v1209 = vunpack.c.h.b16 %v1075
  %v1210 = vpack.c.b16 %v1204, %v1202
  %v1211 = vpack.c.b16 %v1205, %v1203
  %v1212 = vpack.c.b16 %v1208, %v1206
  %v1213 = vpack.c.b16 %v1209, %v1207
  %v1219 = vsel %vm60, %v1191, 0
  %v1222 = vsel %vm60, %v1193, 0
  %v1225 = vsel %vm60, %v1195, 0
  %v1228 = vsel %vm60, %v1197, 0
  %1230 = vmatpush.bf16.msra.mxu0 0
  %1231 = vmatpush.bf16.msra.mxu0 0
  %1232 = vmatpush.bf16.msra.mxu0 0
  %1233 = vmatpush.bf16.msra.mxu0 0
  %1234 = vmatpush.bf16.msra.mxu0 0
  %1235 = vmatpush.bf16.msra.mxu0 0
  %1236 = vmatpush.bf16.msra.mxu0 %v1212
  %1237 = vmatpush.bf16.msra.mxu0 %v1210
  %1238 = vmatmul.bf16.gmra.mxu0 %v1219
  %v1239 = vpop.f32.mrf.mxu0
  %v1240 = vadd.f32 %v1138, %v1239
  %v1241 = vpop.f32.mrf.mxu0
  %v1242 = vadd.f32 %v1140, %v1241
  %1243 = vmatmul.bf16.gmra.mxu0 %v1222
  %v1244 = vpop.f32.mrf.mxu0
  %v1245 = vadd.f32 %v1143, %v1244
  %v1246 = vpop.f32.mrf.mxu0
  %v1247 = vadd.f32 %v1145, %v1246
  %1248 = vmatmul.bf16.gmra.mxu0 %v1225
  %v1249 = vpop.f32.mrf.mxu0
  %v1250 = vadd.f32 %v1148, %v1249
  %v1251 = vpop.f32.mrf.mxu0
  %v1252 = vadd.f32 %v1150, %v1251
  %1253 = vmatmul.bf16.gmra.mxu0 %v1228
  %v1254 = vpop.f32.mrf.mxu0
  %v1255 = vadd.f32 %v1153, %v1254
  %v1256 = vpop.f32.mrf.mxu0
  %v1257 = vadd.f32 %v1155, %v1256
  %1258 = vdwg.mxu0
  %1259 = vmatpush.bf16.msra.mxu0 0
  %1260 = vmatpush.bf16.msra.mxu0 0
  %1261 = vmatpush.bf16.msra.mxu0 0
  %1262 = vmatpush.bf16.msra.mxu0 0
  %1263 = vmatpush.bf16.msra.mxu0 0
  %1264 = vmatpush.bf16.msra.mxu0 0
  %1265 = vmatpush.bf16.msra.mxu0 %v1213
  %1266 = vmatpush.bf16.msra.mxu0 %v1211
  %1267 = vmatmul.bf16.gmra.mxu0 %v1219
  %v1268 = vpop.f32.mrf.mxu0
  %v1269 = vadd.f32 %v1167, %v1268
  %v1270 = vpop.f32.mrf.mxu0
  %v1271 = vadd.f32 %v1169, %v1270
  %1272 = vmatmul.bf16.gmra.mxu0 %v1222
  %v1273 = vpop.f32.mrf.mxu0
  %v1274 = vadd.f32 %v1172, %v1273
  %v1275 = vpop.f32.mrf.mxu0
  %v1276 = vadd.f32 %v1174, %v1275
  %1277 = vmatmul.bf16.gmra.mxu0 %v1225
  %v1278 = vpop.f32.mrf.mxu0
  %v1279 = vadd.f32 %v1177, %v1278
  %v1280 = vpop.f32.mrf.mxu0
  %v1281 = vadd.f32 %v1179, %v1280
  %1282 = vmatmul.bf16.gmra.mxu0 %v1228
  %v1283 = vpop.f32.mrf.mxu0
  %v1284 = vadd.f32 %v1182, %v1283
  %v1285 = vpop.f32.mrf.mxu0
  %v1286 = vadd.f32 %v1184, %v1285
  %1287 = vdwg.mxu0
  %s1288 = scalar_lea.vmem %s2, 16
  %v1289 = vld [vmem:[%s1288] ss:$8 sm:$0x3]
  %v1291 = vperm.slane %v1289, 0
  %v1292 = vperm.slane %v1289, 1
  %v1295 = vadd.f32 %v1240, %v1291
  %v1296 = vadd.f32 %v1269, %v1292
  %v1297 = vadd.f32 %v1242, %v1291
  %v1298 = vadd.f32 %v1271, %v1292
  %v1299 = vadd.f32 %v1245, %v1291
  %v1300 = vadd.f32 %v1274, %v1292
  %v1301 = vadd.f32 %v1247, %v1291
  %v1302 = vadd.f32 %v1276, %v1292
  %v1303 = vadd.f32 %v1250, %v1291
  %v1304 = vadd.f32 %v1279, %v1292
  %v1305 = vadd.f32 %v1252, %v1291
  %v1306 = vadd.f32 %v1281, %v1292
  %v1307 = vadd.f32 %v1255, %v1291
  %v1308 = vadd.f32 %v1284, %v1292
  %v1309 = vadd.f32 %v1257, %v1291
  %v1310 = vadd.f32 %v1286, %v1292
  %1311 = vst [vmem:[#allocation2] sm:$0xff] %v1295
  %1312 = vst [vmem:[#allocation2 + $0x8] sm:$0xff] %v1296
  %1313 = vst [vmem:[#allocation2 + $0x10] sm:$0xff] %v1297
  %1314 = vst [vmem:[#allocation2 + $0x18] sm:$0xff] %v1298
  %1315 = vst [vmem:[#allocation2 + $0x20] sm:$0xff] %v1299
  %1316 = vst [vmem:[#allocation2 + $0x28] sm:$0xff] %v1300
  %1317 = vst [vmem:[#allocation2 + $0x30] sm:$0xff] %v1301
  %1318 = vst [vmem:[#allocation2 + $0x38] sm:$0xff] %v1302
  %1319 = vst [vmem:[#allocation2 + $0x40] sm:$0xff] %v1303
  %1320 = vst [vmem:[#allocation2 + $0x48] sm:$0xff] %v1304
  %1321 = vst [vmem:[#allocation2 + $0x50] sm:$0xff] %v1305
  %1322 = vst [vmem:[#allocation2 + $0x58] sm:$0xff] %v1306
  %1323 = vst [vmem:[#allocation2 + $0x60] sm:$0xff] %v1307
  %1324 = vst [vmem:[#allocation2 + $0x68] sm:$0xff] %v1308
  %1325 = vst [vmem:[#allocation2 + $0x70] sm:$0xff] %v1309
  %1326 = vst [vmem:[#allocation2 + $0x78] sm:$0xff] %v1310
  %v1327 = vld [vmem:[%s1 + $0x80] sm:$0xff]
  %v1328 = vld [vmem:[%s1 + $0x88] sm:$0xff]
  %v1329 = vld [vmem:[%s1 + $0x90] sm:$0xff]
  %v1330 = vld [vmem:[%s1 + $0x98] sm:$0xff]
  %v1331 = vld [vmem:[%s3 + $0x10] sm:$0xff]
  %v1332 = vld [vmem:[%s3 + $0x18] sm:$0xff]
  %v1333 = vld [vmem:[%s3 + $0x30] sm:$0xff]
  %v1334 = vld [vmem:[%s3 + $0x38] sm:$0xff]
  %v1335 = vpack.c.bf16 %v1332, %v1331
  %v1340 = vunpack.c.l.b16 %v1327
  %v1341 = vunpack.c.h.b16 %v1327
  %v1342 = vunpack.c.l.b16 %v1328
  %v1343 = vunpack.c.h.b16 %v1328
  %v1344 = vunpack.c.l.b16 %v1329
  %v1345 = vunpack.c.h.b16 %v1329
  %v1346 = vunpack.c.l.b16 %v1330
  %v1347 = vunpack.c.h.b16 %v1330
  %v1348 = vpack.c.b16 %v1342, %v1340
  %v1349 = vpack.c.b16 %v1343, %v1341
  %v1350 = vpack.c.b16 %v1346, %v1344
  %v1351 = vpack.c.b16 %v1347, %v1345
  %v1357 = vsel %vm60, %v1335, 0
  %1359 = vmatpush.bf16.msra.mxu0 0
  %1360 = vmatpush.bf16.msra.mxu0 0
  %1361 = vmatpush.bf16.msra.mxu0 0
  %1362 = vmatpush.bf16.msra.mxu0 0
  %1363 = vmatpush.bf16.msra.mxu0 0
  %1364 = vmatpush.bf16.msra.mxu0 0
  %1365 = vmatpush.bf16.msra.mxu0 %v1350
  %1366 = vmatpush.bf16.msra.mxu0 %v1348
  %1367 = vmatmul.bf16.gmra.mxu0 %v1357
  %v1368 = vpop.f32.mrf.mxu0
  %v1369 = vadd.f32 0.0, %v1368
  %v1370 = vpop.f32.mrf.mxu0
  %1371 = vdwg.mxu0
  %1372 = vmatpush.bf16.msra.mxu0 0
  %1373 = vmatpush.bf16.msra.mxu0 0
  %1374 = vmatpush.bf16.msra.mxu0 0
  %1375 = vmatpush.bf16.msra.mxu0 0
  %1376 = vmatpush.bf16.msra.mxu0 0
  %1377 = vmatpush.bf16.msra.mxu0 0
  %1378 = vmatpush.bf16.msra.mxu0 %v1351
  %1379 = vmatpush.bf16.msra.mxu0 %v1349
  %1380 = vmatmul.bf16.gmra.mxu0 %v1357
  %v1381 = vpop.f32.mrf.mxu0
  %v1382 = vpop.f32.mrf.mxu0
  %v1383 = vadd.f32 0.0, %v1382
  %1384 = vdwg.mxu0
  %v1385 = vld [vmem:[#allocation2] sm:$0xff]
  %v1386 = vadd.f32 %v1369, %v1385
  %v1387 = vld [vmem:[#allocation2 + $0x78] sm:$0xff]
  %v1388 = vadd.f32 %v1383, %v1387
  %v1389 = vxor.u32 %v1386, 2147483648
  %v1390 = vxor.u32 %v1388, 2147483648
  %v1391 = vmul.f32 %v1389, 1.442695
  %v1392 = vpow.pop %v1391
  %v1393 = vmul.f32 %v1390, 1.442695
  %v1394 = vpow.pop %v1393
  %v1395 = vadd.f32 %v1392, 1.0
  %v1396 = vadd.f32 %v1394, 1.0
  %v1397 = vrcp.pop %v1395
  %v1398 = vmul.f32 %v1395, %v1397
  %v1399 = vsub.f32 1.0, %v1398
  %v1400 = vmul.f32 %v1397, %v1399
  %v1401 = vadd.f32 %v1397, %v1400
  %vm1402 = vweird.f32 %v1395
  %vm1403 = vweird.f32 %v1397
  %vm1404 = vmor %vm1402, %vm1403
  %v1405 = vsel %vm1404, %v1397, %v1401
  %v1406 = vand.u32 2147483647, %v1395
  %vm1407 = vcmp.eq.f32.partialorder %v1406, 8.507059e+37
  %v1408 = vand.u32 %v1395, 2147483648
  %v1409 = vor.u32 1.1754944e-38, %v1408
  %v1410 = vsel %vm1407, %v1409, %v1405
  %v1411 = vmul.f32 1.0, %v1410
  %v1412 = vrcp.pop %v1396
  %v1413 = vmul.f32 %v1396, %v1412
  %v1414 = vsub.f32 1.0, %v1413
  %v1415 = vmul.f32 %v1412, %v1414
  %v1416 = vadd.f32 %v1412, %v1415
  %vm1417 = vweird.f32 %v1396
  %vm1418 = vweird.f32 %v1412
  %vm1419 = vmor %vm1417, %vm1418
  %v1420 = vsel %vm1419, %v1412, %v1416
  %v1421 = vand.u32 2147483647, %v1396
  %vm1422 = vcmp.eq.f32.partialorder %v1421, 8.507059e+37
  %v1423 = vand.u32 %v1396, 2147483648
  %v1424 = vor.u32 1.1754944e-38, %v1423
  %v1425 = vsel %vm1422, %v1424, %v1420
  %v1426 = vmul.f32 1.0, %v1425
  %v1427 = vtanh.pop %v1386
  %v1428 = vtanh.pop %v1388
  %1431 = vrot.lane.b32.xlu0 %v1333, 32
  %v1432 = vpop.permute.xlu0 %1431
  %1433 = vrot.lane.b32.xlu0 %v1334, 32
  %v1434 = vpop.permute.xlu0 %1433
  %v1437 = vmul.f32 %v1411, %v1432
  %v1438 = vmul.f32 %v1426, %v1434
  %1441 = vrot.lane.b32.xlu0 %v1427, 64
  %v1442 = vpop.permute.xlu0 %1441
  %1443 = vrot.lane.b32.xlu0 %v1428, 64
  %v1444 = vpop.permute.xlu0 %1443
  %v1447 = vmul.f32 %v1411, %v1442
  %v1448 = vmul.f32 %v1426, %v1444
  %1451 = vrot.lane.b32.xlu0 %v1447, 32
  %v1452 = vpop.permute.xlu0 %1451
  %1453 = vrot.lane.b32.xlu0 %v1448, 32
  %v1454 = vpop.permute.xlu0 %1453
  %v1457 = vadd.f32 %v1437, %v1452
  %v1458 = vadd.f32 %v1438, %v1454
  %v1459 = vtanh.pop %v1457
  %v1460 = vtanh.pop %v1458
  %1463 = vrot.lane.b32.xlu0 %v1459, 64
  %v1464 = vpop.permute.xlu0 %1463
  %1465 = vrot.lane.b32.xlu0 %v1460, 64
  %v1466 = vpop.permute.xlu0 %1465
  %v1469 = vmul.f32 %v1411, %v1464
  %v1470 = vmul.f32 %v1426, %v1466
  %v1471 = vpack.c.bf16 %v1470, %v1469
  %1473 = vrot.lane.b32.xlu0 %v1471, 32
  %v1474 = vpop.permute.xlu0 %1473
  %v1476 = vsel %vm60, %v1474, 0
  %1478 = vmatpush.bf16.msra.mxu0 0
  %1479 = vmatpush.bf16.msra.mxu0 0
  %1480 = vmatpush.bf16.msra.mxu0 0
  %1481 = vmatpush.bf16.msra.mxu0 0
  %1482 = vmatpush.bf16.msra.mxu0 0
  %1483 = vmatpush.bf16.msra.mxu0 0
  %1484 = vmatpush.bf16.msra.mxu0 %v1350
  %1485 = vmatpush.bf16.msra.mxu0 %v1348
  %1486 = vmatmul.bf16.gmra.mxu0 %v1476
  %v1487 = vpop.f32.mrf.mxu0
  %v1488 = vadd.f32 0.0, %v1487
  %v1489 = vpop.f32.mrf.mxu0
  %1490 = vdwg.mxu0
  %1491 = vmatpush.bf16.msra.mxu0 0
  %1492 = vmatpush.bf16.msra.mxu0 0
  %1493 = vmatpush.bf16.msra.mxu0 0
  %1494 = vmatpush.bf16.msra.mxu0 0
  %1495 = vmatpush.bf16.msra.mxu0 0
  %1496 = vmatpush.bf16.msra.mxu0 0
  %1497 = vmatpush.bf16.msra.mxu0 %v1351
  %1498 = vmatpush.bf16.msra.mxu0 %v1349
  %1499 = vmatmul.bf16.gmra.mxu0 %v1476
  %v1500 = vpop.f32.mrf.mxu0
  %v1501 = vpop.f32.mrf.mxu0
  %v1502 = vadd.f32 0.0, %v1501
  %1503 = vdwg.mxu0
  %v1504 = vld [vmem:[#allocation2 + $0x10] sm:$0xff]
  %v1505 = vadd.f32 %v1488, %v1504
  %v1506 = vld [vmem:[#allocation2 + $0x68] sm:$0xff]
  %v1507 = vadd.f32 %v1502, %v1506
  %v1508 = vxor.u32 %v1505, 2147483648
  %v1509 = vxor.u32 %v1507, 2147483648
  %v1510 = vmul.f32 %v1508, 1.442695
  %v1511 = vpow.pop %v1510
  %v1512 = vmul.f32 %v1509, 1.442695
  %v1513 = vpow.pop %v1512
  %v1514 = vadd.f32 %v1511, 1.0
  %v1515 = vadd.f32 %v1513, 1.0
  %v1516 = vrcp.pop %v1514
  %v1517 = vmul.f32 %v1514, %v1516
  %v1518 = vsub.f32 1.0, %v1517
  %v1519 = vmul.f32 %v1516, %v1518
  %v1520 = vadd.f32 %v1516, %v1519
  %vm1521 = vweird.f32 %v1514
  %vm1522 = vweird.f32 %v1516
  %vm1523 = vmor %vm1521, %vm1522
  %v1524 = vsel %vm1523, %v1516, %v1520
  %v1525 = vand.u32 2147483647, %v1514
  %vm1526 = vcmp.eq.f32.partialorder %v1525, 8.507059e+37
  %v1527 = vand.u32 %v1514, 2147483648
  %v1528 = vor.u32 1.1754944e-38, %v1527
  %v1529 = vsel %vm1526, %v1528, %v1524
  %v1530 = vmul.f32 1.0, %v1529
  %v1531 = vrcp.pop %v1515
  %v1532 = vmul.f32 %v1515, %v1531
  %v1533 = vsub.f32 1.0, %v1532
  %v1534 = vmul.f32 %v1531, %v1533
  %v1535 = vadd.f32 %v1531, %v1534
  %vm1536 = vweird.f32 %v1515
  %vm1537 = vweird.f32 %v1531
  %vm1538 = vmor %vm1536, %vm1537
  %v1539 = vsel %vm1538, %v1531, %v1535
  %v1540 = vand.u32 2147483647, %v1515
  %vm1541 = vcmp.eq.f32.partialorder %v1540, 8.507059e+37
  %v1542 = vand.u32 %v1515, 2147483648
  %v1543 = vor.u32 1.1754944e-38, %v1542
  %v1544 = vsel %vm1541, %v1543, %v1539
  %v1545 = vmul.f32 1.0, %v1544
  %v1546 = vtanh.pop %v1505
  %v1547 = vtanh.pop %v1507
  %v1548 = vmul.f32 %v1530, %v1457
  %v1549 = vmul.f32 %v1545, %v1458
  %1552 = vrot.lane.b32.xlu0 %v1546, 64
  %v1553 = vpop.permute.xlu0 %1552
  %1554 = vrot.lane.b32.xlu0 %v1547, 64
  %v1555 = vpop.permute.xlu0 %1554
  %v1558 = vmul.f32 %v1530, %v1553
  %v1559 = vmul.f32 %v1545, %v1555
  %1562 = vrot.lane.b32.xlu0 %v1558, 32
  %v1563 = vpop.permute.xlu0 %1562
  %1564 = vrot.lane.b32.xlu0 %v1559, 32
  %v1565 = vpop.permute.xlu0 %1564
  %v1568 = vadd.f32 %v1548, %v1563
  %v1569 = vadd.f32 %v1549, %v1565
  %v1570 = vtanh.pop %v1568
  %v1571 = vtanh.pop %v1569
  %1574 = vrot.lane.b32.xlu0 %v1570, 64
  %v1575 = vpop.permute.xlu0 %1574
  %1576 = vrot.lane.b32.xlu0 %v1571, 64
  %v1577 = vpop.permute.xlu0 %1576
  %v1580 = vmul.f32 %v1530, %v1575
  %v1581 = vmul.f32 %v1545, %v1577
  %v1582 = vpack.c.bf16 %v1581, %v1580
  %1584 = vrot.lane.b32.xlu0 %v1582, 32
  %v1585 = vpop.permute.xlu0 %1584
  %v1587 = vsel %vm60, %v1585, 0
  %1589 = vmatpush.bf16.msra.mxu0 0
  %1590 = vmatpush.bf16.msra.mxu0 0
  %1591 = vmatpush.bf16.msra.mxu0 0
  %1592 = vmatpush.bf16.msra.mxu0 0
  %1593 = vmatpush.bf16.msra.mxu0 0
  %1594 = vmatpush.bf16.msra.mxu0 0
  %1595 = vmatpush.bf16.msra.mxu0 %v1350
  %1596 = vmatpush.bf16.msra.mxu0 %v1348
  %1597 = vmatmul.bf16.gmra.mxu0 %v1587
  %v1598 = vpop.f32.mrf.mxu0
  %v1599 = vadd.f32 0.0, %v1598
  %v1600 = vpop.f32.mrf.mxu0
  %1601 = vdwg.mxu0
  %1602 = vmatpush.bf16.msra.mxu0 0
  %1603 = vmatpush.bf16.msra.mxu0 0
  %1604 = vmatpush.bf16.msra.mxu0 0
  %1605 = vmatpush.bf16.msra.mxu0 0
  %1606 = vmatpush.bf16.msra.mxu0 0
  %1607 = vmatpush.bf16.msra.mxu0 0
  %1608 = vmatpush.bf16.msra.mxu0 %v1351
  %1609 = vmatpush.bf16.msra.mxu0 %v1349
  %1610 = vmatmul.bf16.gmra.mxu0 %v1587
  %v1611 = vpop.f32.mrf.mxu0
  %v1612 = vpop.f32.mrf.mxu0
  %v1613 = vadd.f32 0.0, %v1612
  %1614 = vdwg.mxu0
  %v1615 = vld [vmem:[#allocation2 + $0x20] sm:$0xff]
  %v1616 = vadd.f32 %v1599, %v1615
  %v1617 = vld [vmem:[#allocation2 + $0x58] sm:$0xff]
  %v1618 = vadd.f32 %v1613, %v1617
  %v1619 = vxor.u32 %v1616, 2147483648
  %v1620 = vxor.u32 %v1618, 2147483648
  %v1621 = vmul.f32 %v1619, 1.442695
  %v1622 = vpow.pop %v1621
  %v1623 = vmul.f32 %v1620, 1.442695
  %v1624 = vpow.pop %v1623
  %v1625 = vadd.f32 %v1622, 1.0
  %v1626 = vadd.f32 %v1624, 1.0
  %v1627 = vrcp.pop %v1625
  %v1628 = vmul.f32 %v1625, %v1627
  %v1629 = vsub.f32 1.0, %v1628
  %v1630 = vmul.f32 %v1627, %v1629
  %v1631 = vadd.f32 %v1627, %v1630
  %vm1632 = vweird.f32 %v1625
  %vm1633 = vweird.f32 %v1627
  %vm1634 = vmor %vm1632, %vm1633
  %v1635 = vsel %vm1634, %v1627, %v1631
  %v1636 = vand.u32 2147483647, %v1625
  %vm1637 = vcmp.eq.f32.partialorder %v1636, 8.507059e+37
  %v1638 = vand.u32 %v1625, 2147483648
  %v1639 = vor.u32 1.1754944e-38, %v1638
  %v1640 = vsel %vm1637, %v1639, %v1635
  %v1641 = vmul.f32 1.0, %v1640
  %v1642 = vrcp.pop %v1626
  %v1643 = vmul.f32 %v1626, %v1642
  %v1644 = vsub.f32 1.0, %v1643
  %v1645 = vmul.f32 %v1642, %v1644
  %v1646 = vadd.f32 %v1642, %v1645
  %vm1647 = vweird.f32 %v1626
  %vm1648 = vweird.f32 %v1642
  %vm1649 = vmor %vm1647, %vm1648
  %v1650 = vsel %vm1649, %v1642, %v1646
  %v1651 = vand.u32 2147483647, %v1626
  %vm1652 = vcmp.eq.f32.partialorder %v1651, 8.507059e+37
  %v1653 = vand.u32 %v1626, 2147483648
  %v1654 = vor.u32 1.1754944e-38, %v1653
  %v1655 = vsel %vm1652, %v1654, %v1650
  %v1656 = vmul.f32 1.0, %v1655
  %v1657 = vtanh.pop %v1616
  %v1658 = vtanh.pop %v1618
  %v1659 = vmul.f32 %v1641, %v1568
  %v1660 = vmul.f32 %v1656, %v1569
  %1663 = vrot.lane.b32.xlu0 %v1657, 64
  %v1664 = vpop.permute.xlu0 %1663
  %1665 = vrot.lane.b32.xlu0 %v1658, 64
  %v1666 = vpop.permute.xlu0 %1665
  %v1669 = vmul.f32 %v1641, %v1664
  %v1670 = vmul.f32 %v1656, %v1666
  %1673 = vrot.lane.b32.xlu0 %v1669, 32
  %v1674 = vpop.permute.xlu0 %1673
  %1675 = vrot.lane.b32.xlu0 %v1670, 32
  %v1676 = vpop.permute.xlu0 %1675
  %v1679 = vadd.f32 %v1659, %v1674
  %v1680 = vadd.f32 %v1660, %v1676
  %v1681 = vtanh.pop %v1679
  %v1682 = vtanh.pop %v1680
  %1685 = vrot.lane.b32.xlu0 %v1681, 64
  %v1686 = vpop.permute.xlu0 %1685
  %1687 = vrot.lane.b32.xlu0 %v1682, 64
  %v1688 = vpop.permute.xlu0 %1687
  %v1691 = vmul.f32 %v1641, %v1686
  %v1692 = vmul.f32 %v1656, %v1688
  %v1693 = vpack.c.bf16 %v1692, %v1691
  %1695 = vrot.lane.b32.xlu0 %v1693, 32
  %v1696 = vpop.permute.xlu0 %1695
  %v1698 = vsel %vm60, %v1696, 0
  %1700 = vmatpush.bf16.msra.mxu0 0
  %1701 = vmatpush.bf16.msra.mxu0 0
  %1702 = vmatpush.bf16.msra.mxu0 0
  %1703 = vmatpush.bf16.msra.mxu0 0
  %1704 = vmatpush.bf16.msra.mxu0 0
  %1705 = vmatpush.bf16.msra.mxu0 0
  %1706 = vmatpush.bf16.msra.mxu0 %v1350
  %1707 = vmatpush.bf16.msra.mxu0 %v1348
  %1708 = vmatmul.bf16.gmra.mxu0 %v1698
  %v1709 = vpop.f32.mrf.mxu0
  %v1710 = vadd.f32 0.0, %v1709
  %v1711 = vpop.f32.mrf.mxu0
  %1712 = vdwg.mxu0
  %1713 = vmatpush.bf16.msra.mxu0 0
  %1714 = vmatpush.bf16.msra.mxu0 0
  %1715 = vmatpush.bf16.msra.mxu0 0
  %1716 = vmatpush.bf16.msra.mxu0 0
  %1717 = vmatpush.bf16.msra.mxu0 0
  %1718 = vmatpush.bf16.msra.mxu0 0
  %1719 = vmatpush.bf16.msra.mxu0 %v1351
  %1720 = vmatpush.bf16.msra.mxu0 %v1349
  %1721 = vmatmul.bf16.gmra.mxu0 %v1698
  %v1722 = vpop.f32.mrf.mxu0
  %v1723 = vpop.f32.mrf.mxu0
  %v1724 = vadd.f32 0.0, %v1723
  %1725 = vdwg.mxu0
  %v1726 = vld [vmem:[#allocation2 + $0x30] sm:$0xff]
  %v1727 = vadd.f32 %v1710, %v1726
  %v1728 = vld [vmem:[#allocation2 + $0x48] sm:$0xff]
  %v1729 = vadd.f32 %v1724, %v1728
  %v1730 = vxor.u32 %v1727, 2147483648
  %v1731 = vxor.u32 %v1729, 2147483648
  %v1732 = vmul.f32 %v1730, 1.442695
  %v1733 = vpow.pop %v1732
  %v1734 = vmul.f32 %v1731, 1.442695
  %v1735 = vpow.pop %v1734
  %v1736 = vadd.f32 %v1733, 1.0
  %v1737 = vadd.f32 %v1735, 1.0
  %v1738 = vrcp.pop %v1736
  %v1739 = vmul.f32 %v1736, %v1738
  %v1740 = vsub.f32 1.0, %v1739
  %v1741 = vmul.f32 %v1738, %v1740
  %v1742 = vadd.f32 %v1738, %v1741
  %vm1743 = vweird.f32 %v1736
  %vm1744 = vweird.f32 %v1738
  %vm1745 = vmor %vm1743, %vm1744
  %v1746 = vsel %vm1745, %v1738, %v1742
  %v1747 = vand.u32 2147483647, %v1736
  %vm1748 = vcmp.eq.f32.partialorder %v1747, 8.507059e+37
  %v1749 = vand.u32 %v1736, 2147483648
  %v1750 = vor.u32 1.1754944e-38, %v1749
  %v1751 = vsel %vm1748, %v1750, %v1746
  %v1752 = vmul.f32 1.0, %v1751
  %v1753 = vrcp.pop %v1737
  %v1754 = vmul.f32 %v1737, %v1753
  %v1755 = vsub.f32 1.0, %v1754
  %v1756 = vmul.f32 %v1753, %v1755
  %v1757 = vadd.f32 %v1753, %v1756
  %vm1758 = vweird.f32 %v1737
  %vm1759 = vweird.f32 %v1753
  %vm1760 = vmor %vm1758, %vm1759
  %v1761 = vsel %vm1760, %v1753, %v1757
  %v1762 = vand.u32 2147483647, %v1737
  %vm1763 = vcmp.eq.f32.partialorder %v1762, 8.507059e+37
  %v1764 = vand.u32 %v1737, 2147483648
  %v1765 = vor.u32 1.1754944e-38, %v1764
  %v1766 = vsel %vm1763, %v1765, %v1761
  %v1767 = vmul.f32 1.0, %v1766
  %v1768 = vtanh.pop %v1727
  %v1769 = vtanh.pop %v1729
  %v1770 = vmul.f32 %v1752, %v1679
  %v1771 = vmul.f32 %v1767, %v1680
  %1774 = vrot.lane.b32.xlu0 %v1768, 64
  %v1775 = vpop.permute.xlu0 %1774
  %1776 = vrot.lane.b32.xlu0 %v1769, 64
  %v1777 = vpop.permute.xlu0 %1776
  %v1780 = vmul.f32 %v1752, %v1775
  %v1781 = vmul.f32 %v1767, %v1777
  %1784 = vrot.lane.b32.xlu0 %v1780, 32
  %v1785 = vpop.permute.xlu0 %1784
  %1786 = vrot.lane.b32.xlu0 %v1781, 32
  %v1787 = vpop.permute.xlu0 %1786
  %v1790 = vadd.f32 %v1770, %v1785
  %v1791 = vadd.f32 %v1771, %v1787
  %v1792 = vtanh.pop %v1790
  %v1793 = vtanh.pop %v1791
  %1796 = vrot.lane.b32.xlu0 %v1792, 64
  %v1797 = vpop.permute.xlu0 %1796
  %1798 = vrot.lane.b32.xlu0 %v1793, 64
  %v1799 = vpop.permute.xlu0 %1798
  %v1802 = vmul.f32 %v1752, %v1797
  %v1803 = vmul.f32 %v1767, %v1799
  %v1804 = vpack.c.bf16 %v1803, %v1802
  %1806 = vrot.lane.b32.xlu0 %v1804, 32
  %v1807 = vpop.permute.xlu0 %1806
  %v1809 = vsel %vm60, %v1807, 0
  %1811 = vmatpush.bf16.msra.mxu0 0
  %1812 = vmatpush.bf16.msra.mxu0 0
  %1813 = vmatpush.bf16.msra.mxu0 0
  %1814 = vmatpush.bf16.msra.mxu0 0
  %1815 = vmatpush.bf16.msra.mxu0 0
  %1816 = vmatpush.bf16.msra.mxu0 0
  %1817 = vmatpush.bf16.msra.mxu0 %v1350
  %1818 = vmatpush.bf16.msra.mxu0 %v1348
  %1819 = vmatmul.bf16.gmra.mxu0 %v1809
  %v1820 = vpop.f32.mrf.mxu0
  %v1821 = vadd.f32 0.0, %v1820
  %v1822 = vpop.f32.mrf.mxu0
  %1823 = vdwg.mxu0
  %1824 = vmatpush.bf16.msra.mxu0 0
  %1825 = vmatpush.bf16.msra.mxu0 0
  %1826 = vmatpush.bf16.msra.mxu0 0
  %1827 = vmatpush.bf16.msra.mxu0 0
  %1828 = vmatpush.bf16.msra.mxu0 0
  %1829 = vmatpush.bf16.msra.mxu0 0
  %1830 = vmatpush.bf16.msra.mxu0 %v1351
  %1831 = vmatpush.bf16.msra.mxu0 %v1349
  %1832 = vmatmul.bf16.gmra.mxu0 %v1809
  %v1833 = vpop.f32.mrf.mxu0
  %v1834 = vpop.f32.mrf.mxu0
  %v1835 = vadd.f32 0.0, %v1834
  %1836 = vdwg.mxu0
  %v1837 = vld [vmem:[#allocation2 + $0x40] sm:$0xff]
  %v1838 = vadd.f32 %v1821, %v1837
  %v1839 = vld [vmem:[#allocation2 + $0x38] sm:$0xff]
  %v1840 = vadd.f32 %v1835, %v1839
  %v1841 = vxor.u32 %v1838, 2147483648
  %v1842 = vxor.u32 %v1840, 2147483648
  %v1843 = vmul.f32 %v1841, 1.442695
  %v1844 = vpow.pop %v1843
  %v1845 = vmul.f32 %v1842, 1.442695
  %v1846 = vpow.pop %v1845
  %v1847 = vadd.f32 %v1844, 1.0
  %v1848 = vadd.f32 %v1846, 1.0
  %v1849 = vrcp.pop %v1847
  %v1850 = vmul.f32 %v1847, %v1849
  %v1851 = vsub.f32 1.0, %v1850
  %v1852 = vmul.f32 %v1849, %v1851
  %v1853 = vadd.f32 %v1849, %v1852
  %vm1854 = vweird.f32 %v1847
  %vm1855 = vweird.f32 %v1849
  %vm1856 = vmor %vm1854, %vm1855
  %v1857 = vsel %vm1856, %v1849, %v1853
  %v1858 = vand.u32 2147483647, %v1847
  %vm1859 = vcmp.eq.f32.partialorder %v1858, 8.507059e+37
  %v1860 = vand.u32 %v1847, 2147483648
  %v1861 = vor.u32 1.1754944e-38, %v1860
  %v1862 = vsel %vm1859, %v1861, %v1857
  %v1863 = vmul.f32 1.0, %v1862
  %v1864 = vrcp.pop %v1848
  %v1865 = vmul.f32 %v1848, %v1864
  %v1866 = vsub.f32 1.0, %v1865
  %v1867 = vmul.f32 %v1864, %v1866
  %v1868 = vadd.f32 %v1864, %v1867
  %vm1869 = vweird.f32 %v1848
  %vm1870 = vweird.f32 %v1864
  %vm1871 = vmor %vm1869, %vm1870
  %v1872 = vsel %vm1871, %v1864, %v1868
  %v1873 = vand.u32 2147483647, %v1848
  %vm1874 = vcmp.eq.f32.partialorder %v1873, 8.507059e+37
  %v1875 = vand.u32 %v1848, 2147483648
  %v1876 = vor.u32 1.1754944e-38, %v1875
  %v1877 = vsel %vm1874, %v1876, %v1872
  %v1878 = vmul.f32 1.0, %v1877
  %v1879 = vtanh.pop %v1838
  %v1880 = vtanh.pop %v1840
  %v1881 = vmul.f32 %v1863, %v1790
  %v1882 = vmul.f32 %v1878, %v1791
  %1885 = vrot.lane.b32.xlu0 %v1879, 64
  %v1886 = vpop.permute.xlu0 %1885
  %1887 = vrot.lane.b32.xlu0 %v1880, 64
  %v1888 = vpop.permute.xlu0 %1887
  %v1891 = vmul.f32 %v1863, %v1886
  %v1892 = vmul.f32 %v1878, %v1888
  %1895 = vrot.lane.b32.xlu0 %v1891, 32
  %v1896 = vpop.permute.xlu0 %1895
  %1897 = vrot.lane.b32.xlu0 %v1892, 32
  %v1898 = vpop.permute.xlu0 %1897
  %v1901 = vadd.f32 %v1881, %v1896
  %v1902 = vadd.f32 %v1882, %v1898
  %v1903 = vtanh.pop %v1901
  %v1904 = vtanh.pop %v1902
  %1907 = vrot.lane.b32.xlu0 %v1903, 64
  %v1908 = vpop.permute.xlu0 %1907
  %1909 = vrot.lane.b32.xlu0 %v1904, 64
  %v1910 = vpop.permute.xlu0 %1909
  %v1913 = vmul.f32 %v1863, %v1908
  %v1914 = vmul.f32 %v1878, %v1910
  %v1915 = vpack.c.bf16 %v1914, %v1913
  %1917 = vrot.lane.b32.xlu0 %v1915, 32
  %v1918 = vpop.permute.xlu0 %1917
  %v1920 = vsel %vm60, %v1918, 0
  %1922 = vmatpush.bf16.msra.mxu0 0
  %1923 = vmatpush.bf16.msra.mxu0 0
  %1924 = vmatpush.bf16.msra.mxu0 0
  %1925 = vmatpush.bf16.msra.mxu0 0
  %1926 = vmatpush.bf16.msra.mxu0 0
  %1927 = vmatpush.bf16.msra.mxu0 0
  %1928 = vmatpush.bf16.msra.mxu0 %v1350
  %1929 = vmatpush.bf16.msra.mxu0 %v1348
  %1930 = vmatmul.bf16.gmra.mxu0 %v1920
  %v1931 = vpop.f32.mrf.mxu0
  %v1932 = vadd.f32 0.0, %v1931
  %v1933 = vpop.f32.mrf.mxu0
  %1934 = vdwg.mxu0
  %1935 = vmatpush.bf16.msra.mxu0 0
  %1936 = vmatpush.bf16.msra.mxu0 0
  %1937 = vmatpush.bf16.msra.mxu0 0
  %1938 = vmatpush.bf16.msra.mxu0 0
  %1939 = vmatpush.bf16.msra.mxu0 0
  %1940 = vmatpush.bf16.msra.mxu0 0
  %1941 = vmatpush.bf16.msra.mxu0 %v1351
  %1942 = vmatpush.bf16.msra.mxu0 %v1349
  %1943 = vmatmul.bf16.gmra.mxu0 %v1920
  %v1944 = vpop.f32.mrf.mxu0
  %v1945 = vpop.f32.mrf.mxu0
  %v1946 = vadd.f32 0.0, %v1945
  %1947 = vdwg.mxu0
  %v1948 = vld [vmem:[#allocation2 + $0x50] sm:$0xff]
  %v1949 = vadd.f32 %v1932, %v1948
  %v1950 = vld [vmem:[#allocation2 + $0x28] sm:$0xff]
  %v1951 = vadd.f32 %v1946, %v1950
  %v1952 = vxor.u32 %v1949, 2147483648
  %v1953 = vxor.u32 %v1951, 2147483648
  %v1954 = vmul.f32 %v1952, 1.442695
  %v1955 = vpow.pop %v1954
  %v1956 = vmul.f32 %v1953, 1.442695
  %v1957 = vpow.pop %v1956
  %v1958 = vadd.f32 %v1955, 1.0
  %v1959 = vadd.f32 %v1957, 1.0
  %v1960 = vrcp.pop %v1958
  %v1961 = vmul.f32 %v1958, %v1960
  %v1962 = vsub.f32 1.0, %v1961
  %v1963 = vmul.f32 %v1960, %v1962
  %v1964 = vadd.f32 %v1960, %v1963
  %vm1965 = vweird.f32 %v1958
  %vm1966 = vweird.f32 %v1960
  %vm1967 = vmor %vm1965, %vm1966
  %v1968 = vsel %vm1967, %v1960, %v1964
  %v1969 = vand.u32 2147483647, %v1958
  %vm1970 = vcmp.eq.f32.partialorder %v1969, 8.507059e+37
  %v1971 = vand.u32 %v1958, 2147483648
  %v1972 = vor.u32 1.1754944e-38, %v1971
  %v1973 = vsel %vm1970, %v1972, %v1968
  %v1974 = vmul.f32 1.0, %v1973
  %v1975 = vrcp.pop %v1959
  %v1976 = vmul.f32 %v1959, %v1975
  %v1977 = vsub.f32 1.0, %v1976
  %v1978 = vmul.f32 %v1975, %v1977
  %v1979 = vadd.f32 %v1975, %v1978
  %vm1980 = vweird.f32 %v1959
  %vm1981 = vweird.f32 %v1975
  %vm1982 = vmor %vm1980, %vm1981
  %v1983 = vsel %vm1982, %v1975, %v1979
  %v1984 = vand.u32 2147483647, %v1959
  %vm1985 = vcmp.eq.f32.partialorder %v1984, 8.507059e+37
  %v1986 = vand.u32 %v1959, 2147483648
  %v1987 = vor.u32 1.1754944e-38, %v1986
  %v1988 = vsel %vm1985, %v1987, %v1983
  %v1989 = vmul.f32 1.0, %v1988
  %v1990 = vtanh.pop %v1949
  %v1991 = vtanh.pop %v1951
  %v1992 = vmul.f32 %v1974, %v1901
  %v1993 = vmul.f32 %v1989, %v1902
  %1996 = vrot.lane.b32.xlu0 %v1990, 64
  %v1997 = vpop.permute.xlu0 %1996
  %1998 = vrot.lane.b32.xlu0 %v1991, 64
  %v1999 = vpop.permute.xlu0 %1998
  %v2002 = vmul.f32 %v1974, %v1997
  %v2003 = vmul.f32 %v1989, %v1999
  %2006 = vrot.lane.b32.xlu0 %v2002, 32
  %v2007 = vpop.permute.xlu0 %2006
  %2008 = vrot.lane.b32.xlu0 %v2003, 32
  %v2009 = vpop.permute.xlu0 %2008
  %v2012 = vadd.f32 %v1992, %v2007
  %v2013 = vadd.f32 %v1993, %v2009
  %v2014 = vtanh.pop %v2012
  %v2015 = vtanh.pop %v2013
  %2018 = vrot.lane.b32.xlu0 %v2014, 64
  %v2019 = vpop.permute.xlu0 %2018
  %2020 = vrot.lane.b32.xlu0 %v2015, 64
  %v2021 = vpop.permute.xlu0 %2020
  %v2024 = vmul.f32 %v1974, %v2019
  %v2025 = vmul.f32 %v1989, %v2021
  %v2026 = vpack.c.bf16 %v2025, %v2024
  %2028 = vrot.lane.b32.xlu0 %v2026, 32
  %v2029 = vpop.permute.xlu0 %2028
  %v2031 = vsel %vm60, %v2029, 0
  %2033 = vmatpush.bf16.msra.mxu0 0
  %2034 = vmatpush.bf16.msra.mxu0 0
  %2035 = vmatpush.bf16.msra.mxu0 0
  %2036 = vmatpush.bf16.msra.mxu0 0
  %2037 = vmatpush.bf16.msra.mxu0 0
  %2038 = vmatpush.bf16.msra.mxu0 0
  %2039 = vmatpush.bf16.msra.mxu0 %v1350
  %2040 = vmatpush.bf16.msra.mxu0 %v1348
  %2041 = vmatmul.bf16.gmra.mxu0 %v2031
  %v2042 = vpop.f32.mrf.mxu0
  %v2043 = vadd.f32 0.0, %v2042
  %v2044 = vpop.f32.mrf.mxu0
  %2045 = vdwg.mxu0
  %2046 = vmatpush.bf16.msra.mxu0 0
  %2047 = vmatpush.bf16.msra.mxu0 0
  %2048 = vmatpush.bf16.msra.mxu0 0
  %2049 = vmatpush.bf16.msra.mxu0 0
  %2050 = vmatpush.bf16.msra.mxu0 0
  %2051 = vmatpush.bf16.msra.mxu0 0
  %2052 = vmatpush.bf16.msra.mxu0 %v1351
  %2053 = vmatpush.bf16.msra.mxu0 %v1349
  %2054 = vmatmul.bf16.gmra.mxu0 %v2031
  %v2055 = vpop.f32.mrf.mxu0
  %v2056 = vpop.f32.mrf.mxu0
  %v2057 = vadd.f32 0.0, %v2056
  %2058 = vdwg.mxu0
  %v2059 = vld [vmem:[#allocation2 + $0x60] sm:$0xff]
  %v2060 = vadd.f32 %v2043, %v2059
  %v2061 = vld [vmem:[#allocation2 + $0x18] sm:$0xff]
  %v2062 = vadd.f32 %v2057, %v2061
  %v2063 = vxor.u32 %v2060, 2147483648
  %v2064 = vxor.u32 %v2062, 2147483648
  %v2065 = vmul.f32 %v2063, 1.442695
  %v2066 = vpow.pop %v2065
  %v2067 = vmul.f32 %v2064, 1.442695
  %v2068 = vpow.pop %v2067
  %v2069 = vadd.f32 %v2066, 1.0
  %v2070 = vadd.f32 %v2068, 1.0
  %v2071 = vrcp.pop %v2069
  %v2072 = vmul.f32 %v2069, %v2071
  %v2073 = vsub.f32 1.0, %v2072
  %v2074 = vmul.f32 %v2071, %v2073
  %v2075 = vadd.f32 %v2071, %v2074
  %vm2076 = vweird.f32 %v2069
  %vm2077 = vweird.f32 %v2071
  %vm2078 = vmor %vm2076, %vm2077
  %v2079 = vsel %vm2078, %v2071, %v2075
  %v2080 = vand.u32 2147483647, %v2069
  %vm2081 = vcmp.eq.f32.partialorder %v2080, 8.507059e+37
  %v2082 = vand.u32 %v2069, 2147483648
  %v2083 = vor.u32 1.1754944e-38, %v2082
  %v2084 = vsel %vm2081, %v2083, %v2079
  %v2085 = vmul.f32 1.0, %v2084
  %v2086 = vrcp.pop %v2070
  %v2087 = vmul.f32 %v2070, %v2086
  %v2088 = vsub.f32 1.0, %v2087
  %v2089 = vmul.f32 %v2086, %v2088
  %v2090 = vadd.f32 %v2086, %v2089
  %vm2091 = vweird.f32 %v2070
  %vm2092 = vweird.f32 %v2086
  %vm2093 = vmor %vm2091, %vm2092
  %v2094 = vsel %vm2093, %v2086, %v2090
  %v2095 = vand.u32 2147483647, %v2070
  %vm2096 = vcmp.eq.f32.partialorder %v2095, 8.507059e+37
  %v2097 = vand.u32 %v2070, 2147483648
  %v2098 = vor.u32 1.1754944e-38, %v2097
  %v2099 = vsel %vm2096, %v2098, %v2094
  %v2100 = vmul.f32 1.0, %v2099
  %v2101 = vtanh.pop %v2060
  %v2102 = vtanh.pop %v2062
  %v2103 = vmul.f32 %v2085, %v2012
  %v2104 = vmul.f32 %v2100, %v2013
  %2107 = vrot.lane.b32.xlu0 %v2101, 64
  %v2108 = vpop.permute.xlu0 %2107
  %2109 = vrot.lane.b32.xlu0 %v2102, 64
  %v2110 = vpop.permute.xlu0 %2109
  %v2113 = vmul.f32 %v2085, %v2108
  %v2114 = vmul.f32 %v2100, %v2110
  %2117 = vrot.lane.b32.xlu0 %v2113, 32
  %v2118 = vpop.permute.xlu0 %2117
  %2119 = vrot.lane.b32.xlu0 %v2114, 32
  %v2120 = vpop.permute.xlu0 %2119
  %v2123 = vadd.f32 %v2103, %v2118
  %v2124 = vadd.f32 %v2104, %v2120
  %v2125 = vtanh.pop %v2123
  %v2126 = vtanh.pop %v2124
  %2129 = vrot.lane.b32.xlu0 %v2125, 64
  %v2130 = vpop.permute.xlu0 %2129
  %2131 = vrot.lane.b32.xlu0 %v2126, 64
  %v2132 = vpop.permute.xlu0 %2131
  %v2135 = vmul.f32 %v2085, %v2130
  %v2136 = vmul.f32 %v2100, %v2132
  %v2137 = vpack.c.bf16 %v2136, %v2135
  %2139 = vrot.lane.b32.xlu0 %v2137, 32
  %v2140 = vpop.permute.xlu0 %2139
  %v2142 = vsel %vm60, %v2140, 0
  %2144 = vmatpush.bf16.msra.mxu0 0
  %2145 = vmatpush.bf16.msra.mxu0 0
  %2146 = vmatpush.bf16.msra.mxu0 0
  %2147 = vmatpush.bf16.msra.mxu0 0
  %2148 = vmatpush.bf16.msra.mxu0 0
  %2149 = vmatpush.bf16.msra.mxu0 0
  %2150 = vmatpush.bf16.msra.mxu0 %v1350
  %2151 = vmatpush.bf16.msra.mxu0 %v1348
  %2152 = vmatmul.bf16.gmra.mxu0 %v2142
  %v2153 = vpop.f32.mrf.mxu0
  %v2154 = vadd.f32 0.0, %v2153
  %v2155 = vpop.f32.mrf.mxu0
  %2156 = vdwg.mxu0
  %2157 = vmatpush.bf16.msra.mxu0 0
  %2158 = vmatpush.bf16.msra.mxu0 0
  %2159 = vmatpush.bf16.msra.mxu0 0
  %2160 = vmatpush.bf16.msra.mxu0 0
  %2161 = vmatpush.bf16.msra.mxu0 0
  %2162 = vmatpush.bf16.msra.mxu0 0
  %2163 = vmatpush.bf16.msra.mxu0 %v1351
  %2164 = vmatpush.bf16.msra.mxu0 %v1349
  %2165 = vmatmul.bf16.gmra.mxu0 %v2142
  %v2166 = vpop.f32.mrf.mxu0
  %v2167 = vpop.f32.mrf.mxu0
  %v2168 = vadd.f32 0.0, %v2167
  %2169 = vdwg.mxu0
  %v2170 = vld [vmem:[#allocation2 + $0x70] sm:$0xff]
  %v2171 = vadd.f32 %v2154, %v2170
  %v2172 = vld [vmem:[#allocation2 + $0x8] sm:$0xff]
  %v2173 = vadd.f32 %v2168, %v2172
  %v2174 = vxor.u32 %v2171, 2147483648
  %v2175 = vxor.u32 %v2173, 2147483648
  %v2176 = vmul.f32 %v2174, 1.442695
  %v2177 = vpow.pop %v2176
  %v2178 = vmul.f32 %v2175, 1.442695
  %v2179 = vpow.pop %v2178
  %v2180 = vadd.f32 %v2177, 1.0
  %v2181 = vadd.f32 %v2179, 1.0
  %v2182 = vrcp.pop %v2180
  %v2183 = vmul.f32 %v2180, %v2182
  %v2184 = vsub.f32 1.0, %v2183
  %v2185 = vmul.f32 %v2182, %v2184
  %v2186 = vadd.f32 %v2182, %v2185
  %vm2187 = vweird.f32 %v2180
  %vm2188 = vweird.f32 %v2182
  %vm2189 = vmor %vm2187, %vm2188
  %v2190 = vsel %vm2189, %v2182, %v2186
  %v2191 = vand.u32 2147483647, %v2180
  %vm2192 = vcmp.eq.f32.partialorder %v2191, 8.507059e+37
  %v2193 = vand.u32 %v2180, 2147483648
  %v2194 = vor.u32 1.1754944e-38, %v2193
  %v2195 = vsel %vm2192, %v2194, %v2190
  %v2196 = vmul.f32 1.0, %v2195
  %v2197 = vrcp.pop %v2181
  %v2198 = vmul.f32 %v2181, %v2197
  %v2199 = vsub.f32 1.0, %v2198
  %v2200 = vmul.f32 %v2197, %v2199
  %v2201 = vadd.f32 %v2197, %v2200
  %vm2202 = vweird.f32 %v2181
  %vm2203 = vweird.f32 %v2197
  %vm2204 = vmor %vm2202, %vm2203
  %v2205 = vsel %vm2204, %v2197, %v2201
  %v2206 = vand.u32 2147483647, %v2181
  %vm2207 = vcmp.eq.f32.partialorder %v2206, 8.507059e+37
  %v2208 = vand.u32 %v2181, 2147483648
  %v2209 = vor.u32 1.1754944e-38, %v2208
  %v2210 = vsel %vm2207, %v2209, %v2205
  %v2211 = vmul.f32 1.0, %v2210
  %v2212 = vtanh.pop %v2171
  %v2213 = vtanh.pop %v2173
  %v2214 = vmul.f32 %v2196, %v2123
  %v2215 = vmul.f32 %v2211, %v2124
  %2218 = vrot.lane.b32.xlu0 %v2212, 64
  %v2219 = vpop.permute.xlu0 %2218
  %2220 = vrot.lane.b32.xlu0 %v2213, 64
  %v2221 = vpop.permute.xlu0 %2220
  %v2224 = vmul.f32 %v2196, %v2219
  %v2225 = vmul.f32 %v2211, %v2221
  %2228 = vrot.lane.b32.xlu0 %v2224, 32
  %v2229 = vpop.permute.xlu0 %2228
  %2230 = vrot.lane.b32.xlu0 %v2225, 32
  %v2231 = vpop.permute.xlu0 %2230
  %v2234 = vadd.f32 %v2214, %v2229
  %v2235 = vadd.f32 %v2215, %v2231
  %v2236 = vtanh.pop %v2234
  %v2237 = vtanh.pop %v2235
  %2240 = vrot.lane.b32.xlu0 %v2236, 64
  %v2241 = vpop.permute.xlu0 %2240
  %2242 = vrot.lane.b32.xlu0 %v2237, 64
  %v2243 = vpop.permute.xlu0 %2242
  %v2246 = vmul.f32 %v2196, %v2241
  %v2247 = vmul.f32 %v2211, %v2243
  %v2248 = vld [vmem:[%s0] sm:$0xff]
  %v2249 = vld [vmem:[%s0 + $0x8] sm:$0xff]
  %v2250 = vld [vmem:[%s0 + $0x10] sm:$0xff]
  %v2251 = vld [vmem:[%s0 + $0x18] sm:$0xff]
  %v2252 = vld [vmem:[%s0 + $0x20] sm:$0xff]
  %v2253 = vld [vmem:[%s0 + $0x28] sm:$0xff]
  %v2254 = vld [vmem:[%s0 + $0x30] sm:$0xff]
  %v2255 = vld [vmem:[%s0 + $0x38] sm:$0xff]
  %v2256 = vmax.f32 %v2248, 0.0
  %v2257 = vmax.f32 %v2249, 0.0
  %v2258 = vmax.f32 %v2250, 0.0
  %v2259 = vmax.f32 %v2251, 0.0
  %v2260 = vmax.f32 %v2252, 0.0
  %v2261 = vmax.f32 %v2253, 0.0
  %v2262 = vmax.f32 %v2254, 0.0
  %v2263 = vmax.f32 %v2255, 0.0
  %v2264 = vsel %vm60, %v2256, 0.0
  %2265 = vadd.xlane.f32.xlu0 %v2264
  %v2266 = vpop.xlane.xlu0 %2265
  %v2267 = vsel %vm60, %v2257, 0.0
  %2268 = vadd.xlane.f32.xlu0 %v2267
  %v2269 = vpop.xlane.xlu0 %2268
  %v2270 = vsel %vm60, %v2258, 0.0
  %2271 = vadd.xlane.f32.xlu0 %v2270
  %v2272 = vpop.xlane.xlu0 %2271
  %v2273 = vsel %vm60, %v2259, 0.0
  %2274 = vadd.xlane.f32.xlu0 %v2273
  %v2275 = vpop.xlane.xlu0 %2274
  %v2276 = vsel %vm60, %v2260, 0.0
  %2277 = vadd.xlane.f32.xlu0 %v2276
  %v2278 = vpop.xlane.xlu0 %2277
  %v2279 = vsel %vm60, %v2261, 0.0
  %2280 = vadd.xlane.f32.xlu0 %v2279
  %v2281 = vpop.xlane.xlu0 %2280
  %v2282 = vsel %vm60, %v2262, 0.0
  %2283 = vadd.xlane.f32.xlu0 %v2282
  %v2284 = vpop.xlane.xlu0 %2283
  %v2285 = vsel %vm60, %v2263, 0.0
  %2286 = vadd.xlane.f32.xlu0 %v2285
  %v2287 = vpop.xlane.xlu0 %2286
  %v2288 = vmul.f32 %v2266, 0.03125
  %v2289 = vmul.f32 %v2269, 0.03125
  %v2290 = vmul.f32 %v2272, 0.03125
  %v2291 = vmul.f32 %v2275, 0.03125
  %v2292 = vmul.f32 %v2278, 0.03125
  %v2293 = vmul.f32 %v2281, 0.03125
  %v2294 = vmul.f32 %v2284, 0.03125
  %v2295 = vmul.f32 %v2287, 0.03125
  %v2296 = vmin.f32 %v2248, 0.0
  %v2297 = vmin.f32 %v2249, 0.0
  %v2298 = vmin.f32 %v2250, 0.0
  %v2299 = vmin.f32 %v2251, 0.0
  %v2300 = vmin.f32 %v2252, 0.0
  %v2301 = vmin.f32 %v2253, 0.0
  %v2302 = vmin.f32 %v2254, 0.0
  %v2303 = vmin.f32 %v2255, 0.0
  %v2304 = vsel %vm60, %v2296, 0.0
  %2305 = vadd.xlane.f32.xlu0 %v2304
  %v2306 = vpop.xlane.xlu0 %2305
  %v2307 = vsel %vm60, %v2297, 0.0
  %2308 = vadd.xlane.f32.xlu0 %v2307
  %v2309 = vpop.xlane.xlu0 %2308
  %v2310 = vsel %vm60, %v2298, 0.0
  %2311 = vadd.xlane.f32.xlu0 %v2310
  %v2312 = vpop.xlane.xlu0 %2311
  %v2313 = vsel %vm60, %v2299, 0.0
  %2314 = vadd.xlane.f32.xlu0 %v2313
  %v2315 = vpop.xlane.xlu0 %2314
  %v2316 = vsel %vm60, %v2300, 0.0
  %2317 = vadd.xlane.f32.xlu0 %v2316
  %v2318 = vpop.xlane.xlu0 %2317
  %v2319 = vsel %vm60, %v2301, 0.0
  %2320 = vadd.xlane.f32.xlu0 %v2319
  %v2321 = vpop.xlane.xlu0 %2320
  %v2322 = vsel %vm60, %v2302, 0.0
  %2323 = vadd.xlane.f32.xlu0 %v2322
  %v2324 = vpop.xlane.xlu0 %2323
  %v2325 = vsel %vm60, %v2303, 0.0
  %2326 = vadd.xlane.f32.xlu0 %v2325
  %v2327 = vpop.xlane.xlu0 %2326
  %v2328 = vmul.f32 %v2306, 0.03125
  %v2329 = vmul.f32 %v2309, 0.03125
  %v2330 = vmul.f32 %v2312, 0.03125
  %v2331 = vmul.f32 %v2315, 0.03125
  %v2332 = vmul.f32 %v2318, 0.03125
  %v2333 = vmul.f32 %v2321, 0.03125
  %v2334 = vmul.f32 %v2324, 0.03125
  %v2335 = vmul.f32 %v2327, 0.03125
  %v2336 = vmax.f32 %v1469, 0.0
  %v2337 = vmax.f32 %v1580, 0.0
  %v2338 = vmax.f32 %v1691, 0.0
  %v2339 = vmax.f32 %v1802, 0.0
  %v2340 = vmax.f32 %v1913, 0.0
  %v2341 = vmax.f32 %v2024, 0.0
  %v2342 = vmax.f32 %v2135, 0.0
  %v2343 = vmax.f32 %v2246, 0.0
  %v2344 = vmul.f32 %v2336, %v2288
  %v2345 = vmul.f32 %v2337, %v2289
  %v2346 = vmul.f32 %v2338, %v2290
  %v2347 = vmul.f32 %v2339, %v2291
  %v2348 = vmul.f32 %v2340, %v2292
  %v2349 = vmul.f32 %v2341, %v2293
  %v2350 = vmul.f32 %v2342, %v2294
  %v2351 = vmul.f32 %v2343, %v2295
  %v2352 = vmin.f32 %v1469, 0.0
  %v2353 = vmin.f32 %v1580, 0.0
  %v2354 = vmin.f32 %v1691, 0.0
  %v2355 = vmin.f32 %v1802, 0.0
  %v2356 = vmin.f32 %v1913, 0.0
  %v2357 = vmin.f32 %v2024, 0.0
  %v2358 = vmin.f32 %v2135, 0.0
  %v2359 = vmin.f32 %v2246, 0.0
  %v2360 = vmul.f32 %v2352, %v2328
  %v2361 = vmul.f32 %v2353, %v2329
  %v2362 = vmul.f32 %v2354, %v2330
  %v2363 = vmul.f32 %v2355, %v2331
  %v2364 = vmul.f32 %v2356, %v2332
  %v2365 = vmul.f32 %v2357, %v2333
  %v2366 = vmul.f32 %v2358, %v2334
  %v2367 = vmul.f32 %v2359, %v2335
  %v2368 = vadd.f32 %v2344, %v2360
  %v2369 = vadd.f32 %v2345, %v2361
  %v2370 = vadd.f32 %v2346, %v2362
  %v2371 = vadd.f32 %v2347, %v2363
  %v2372 = vadd.f32 %v2348, %v2364
  %v2373 = vadd.f32 %v2349, %v2365
  %v2374 = vadd.f32 %v2350, %v2366
  %v2375 = vadd.f32 %v2351, %v2367
  %v2376 = vmax.f32 %v2247, 0.0
  %v2377 = vmax.f32 %v2136, 0.0
  %v2378 = vmax.f32 %v2025, 0.0
  %v2379 = vmax.f32 %v1914, 0.0
  %v2380 = vmax.f32 %v1803, 0.0
  %v2381 = vmax.f32 %v1692, 0.0
  %v2382 = vmax.f32 %v1581, 0.0
  %v2383 = vmax.f32 %v1470, 0.0
  %v2384 = vmul.f32 %v2376, %v2288
  %v2385 = vmul.f32 %v2377, %v2289
  %v2386 = vmul.f32 %v2378, %v2290
  %v2387 = vmul.f32 %v2379, %v2291
  %v2388 = vmul.f32 %v2380, %v2292
  %v2389 = vmul.f32 %v2381, %v2293
  %v2390 = vmul.f32 %v2382, %v2294
  %v2391 = vmul.f32 %v2383, %v2295
  %v2392 = vmin.f32 %v2247, 0.0
  %v2393 = vmin.f32 %v2136, 0.0
  %v2394 = vmin.f32 %v2025, 0.0
  %v2395 = vmin.f32 %v1914, 0.0
  %v2396 = vmin.f32 %v1803, 0.0
  %v2397 = vmin.f32 %v1692, 0.0
  %v2398 = vmin.f32 %v1581, 0.0
  %v2399 = vmin.f32 %v1470, 0.0
  %v2400 = vmul.f32 %v2392, %v2328
  %v2401 = vmul.f32 %v2393, %v2329
  %v2402 = vmul.f32 %v2394, %v2330
  %v2403 = vmul.f32 %v2395, %v2331
  %v2404 = vmul.f32 %v2396, %v2332
  %v2405 = vmul.f32 %v2397, %v2333
  %v2406 = vmul.f32 %v2398, %v2334
  %v2407 = vmul.f32 %v2399, %v2335
  %v2408 = vadd.f32 %v2384, %v2400
  %v2409 = vadd.f32 %v2385, %v2401
  %v2410 = vadd.f32 %v2386, %v2402
  %v2411 = vadd.f32 %v2387, %v2403
  %v2412 = vadd.f32 %v2388, %v2404
  %v2413 = vadd.f32 %v2389, %v2405
  %v2414 = vadd.f32 %v2390, %v2406
  %v2415 = vadd.f32 %v2391, %v2407
  %v2416 = vpack.c.bf16 %v2369, %v2368
  %v2417 = vpack.c.bf16 %v2371, %v2370
  %v2418 = vpack.c.bf16 %v2373, %v2372
  %v2419 = vpack.c.bf16 %v2375, %v2374
  %v2420 = vld [vmem:[%s1 + $0xa0] sm:$0xf]
  %v2421 = vld [vmem:[%s1 + $0xa8] sm:$0xf]
  %v2422 = vld [vmem:[%s1 + $0xb0] sm:$0xf]
  %v2423 = vld [vmem:[%s1 + $0xb8] sm:$0xf]
  %v2424 = vpack.c.bf16 %v2409, %v2408
  %v2425 = vpack.c.bf16 %v2411, %v2410
  %v2426 = vpack.c.bf16 %v2413, %v2412
  %v2427 = vpack.c.bf16 %v2415, %v2414
  %v2428 = vld [vmem:[%s1 + $0xc0] sm:$0xf]
  %v2429 = vld [vmem:[%s1 + $0xc8] sm:$0xf]
  %v2430 = vld [vmem:[%s1 + $0xd0] sm:$0xf]
  %v2431 = vld [vmem:[%s1 + $0xd8] sm:$0xf]
  %2436 = vrot.lane.b32.xlu0 %v2424, 32
  %v2437 = vpop.permute.xlu0 %2436
  %2438 = vrot.lane.b32.xlu0 %v2425, 32
  %v2439 = vpop.permute.xlu0 %2438
  %2440 = vrot.lane.b32.xlu0 %v2426, 32
  %v2441 = vpop.permute.xlu0 %2440
  %2442 = vrot.lane.b32.xlu0 %v2427, 32
  %v2443 = vpop.permute.xlu0 %2442
  %v2448 = vunpack.c.l.b16 %v2428
  %v2449 = vunpack.c.l.b16 %v2429
  %v2450 = vunpack.c.l.b16 %v2430
  %v2451 = vunpack.c.l.b16 %v2431
  %v2452 = vpack.c.b16 %v2449, %v2448
  %v2453 = vpack.c.b16 %v2451, %v2450
  %v2457 = vsel %vm60, %v2437, 0
  %v2460 = vsel %vm60, %v2439, 0
  %v2463 = vsel %vm60, %v2441, 0
  %v2466 = vsel %vm60, %v2443, 0
  %2468 = vmatpush.bf16.msra.mxu0 0
  %2469 = vmatpush.bf16.msra.mxu0 0
  %2470 = vmatpush.bf16.msra.mxu0 0
  %2471 = vmatpush.bf16.msra.mxu0 0
  %2472 = vmatpush.bf16.msra.mxu0 0
  %2473 = vmatpush.bf16.msra.mxu0 0
  %2474 = vmatpush.bf16.msra.mxu0 %v2453
  %2475 = vmatpush.bf16.msra.mxu0 %v2452
  %2476 = vmatmul.bf16.gmra.mxu0 %v2457
  %v2477 = vpop.f32.mrf.mxu0
  %v2478 = vadd.f32 0.0, %v2477
  %v2479 = vpop.f32.mrf.mxu0
  %v2480 = vadd.f32 0.0, %v2479
  %2481 = vmatmul.bf16.gmra.mxu0 %v2460
  %v2482 = vpop.f32.mrf.mxu0
  %v2483 = vadd.f32 0.0, %v2482
  %v2484 = vpop.f32.mrf.mxu0
  %v2485 = vadd.f32 0.0, %v2484
  %2486 = vmatmul.bf16.gmra.mxu0 %v2463
  %v2487 = vpop.f32.mrf.mxu0
  %v2488 = vadd.f32 0.0, %v2487
  %v2489 = vpop.f32.mrf.mxu0
  %v2490 = vadd.f32 0.0, %v2489
  %2491 = vmatmul.bf16.gmra.mxu0 %v2466
  %v2492 = vpop.f32.mrf.mxu0
  %v2493 = vadd.f32 0.0, %v2492
  %v2494 = vpop.f32.mrf.mxu0
  %v2495 = vadd.f32 0.0, %v2494
  %2496 = vdwg.mxu0
  %2501 = vrot.lane.b32.xlu0 %v2416, 32
  %v2502 = vpop.permute.xlu0 %2501
  %2503 = vrot.lane.b32.xlu0 %v2417, 32
  %v2504 = vpop.permute.xlu0 %2503
  %2505 = vrot.lane.b32.xlu0 %v2418, 32
  %v2506 = vpop.permute.xlu0 %2505
  %2507 = vrot.lane.b32.xlu0 %v2419, 32
  %v2508 = vpop.permute.xlu0 %2507
  %v2513 = vunpack.c.l.b16 %v2420
  %v2514 = vunpack.c.l.b16 %v2421
  %v2515 = vunpack.c.l.b16 %v2422
  %v2516 = vunpack.c.l.b16 %v2423
  %v2517 = vpack.c.b16 %v2514, %v2513
  %v2518 = vpack.c.b16 %v2516, %v2515
  %v2522 = vsel %vm60, %v2502, 0
  %v2525 = vsel %vm60, %v2504, 0
  %v2528 = vsel %vm60, %v2506, 0
  %v2531 = vsel %vm60, %v2508, 0
  %2533 = vmatpush.bf16.msra.mxu0 0
  %2534 = vmatpush.bf16.msra.mxu0 0
  %2535 = vmatpush.bf16.msra.mxu0 0
  %2536 = vmatpush.bf16.msra.mxu0 0
  %2537 = vmatpush.bf16.msra.mxu0 0
  %2538 = vmatpush.bf16.msra.mxu0 0
  %2539 = vmatpush.bf16.msra.mxu0 %v2518
  %2540 = vmatpush.bf16.msra.mxu0 %v2517
  %2541 = vmatmul.bf16.gmra.mxu0 %v2522
  %v2542 = vpop.f32.mrf.mxu0
  %v2543 = vadd.f32 %v2478, %v2542
  %v2544 = vpop.f32.mrf.mxu0
  %v2545 = vadd.f32 %v2480, %v2544
  %2546 = vmatmul.bf16.gmra.mxu0 %v2525
  %v2547 = vpop.f32.mrf.mxu0
  %v2548 = vadd.f32 %v2483, %v2547
  %v2549 = vpop.f32.mrf.mxu0
  %v2550 = vadd.f32 %v2485, %v2549
  %2551 = vmatmul.bf16.gmra.mxu0 %v2528
  %v2552 = vpop.f32.mrf.mxu0
  %v2553 = vadd.f32 %v2488, %v2552
  %v2554 = vpop.f32.mrf.mxu0
  %v2555 = vadd.f32 %v2490, %v2554
  %2556 = vmatmul.bf16.gmra.mxu0 %v2531
  %v2557 = vpop.f32.mrf.mxu0
  %v2558 = vadd.f32 %v2493, %v2557
  %v2559 = vpop.f32.mrf.mxu0
  %v2560 = vadd.f32 %v2495, %v2559
  %2561 = vdwg.mxu0
  %v2562 = vld [vmem:[%s2 + $0x20] ss:$0 sm:$0xff]
  %v2563 = vadd.f32 %v2543, %v2562
  %v2564 = vadd.f32 %v2545, %v2562
  %v2565 = vadd.f32 %v2548, %v2562
  %v2566 = vadd.f32 %v2550, %v2562
  %v2567 = vadd.f32 %v2553, %v2562
  %v2568 = vadd.f32 %v2555, %v2562
  %v2569 = vadd.f32 %v2558, %v2562
  %v2570 = vadd.f32 %v2560, %v2562
  %v2571 = vmax.f32 %v2563, 0.0
  %v2572 = vmax.f32 %v2564, 0.0
  %v2573 = vmax.f32 %v2565, 0.0
  %v2574 = vmax.f32 %v2566, 0.0
  %v2575 = vmax.f32 %v2567, 0.0
  %v2576 = vmax.f32 %v2568, 0.0
  %v2577 = vmax.f32 %v2569, 0.0
  %v2578 = vmax.f32 %v2570, 0.0
  %v2579 = vpack.c.bf16 %v2572, %v2571
  %v2580 = vpack.c.bf16 %v2574, %v2573
  %v2581 = vpack.c.bf16 %v2576, %v2575
  %v2582 = vpack.c.bf16 %v2578, %v2577
  %v2583 = vld [vmem:[%s1 + $0xe0] sm:$0xf]
  %v2584 = vld [vmem:[%s1 + $0xe8] sm:$0xf]
  %v2585 = vld [vmem:[%s1 + $0xf0] sm:$0xf]
  %v2586 = vld [vmem:[%s1 + $0xf8] sm:$0xf]
  %v2587 = vld [vmem:[%s1 + $0x100] sm:$0xf]
  %v2588 = vld [vmem:[%s1 + $0x108] sm:$0xf]
  %v2589 = vld [vmem:[%s1 + $0x110] sm:$0xf]
  %v2590 = vld [vmem:[%s1 + $0x118] sm:$0xf]
  %v2591 = vld [vmem:[%s2 + $0x30] ss:$0 sm:$0xff]
  %v2600 = vunpack.c.l.b16 %v2583
  %v2601 = vunpack.c.l.b16 %v2584
  %v2602 = vunpack.c.l.b16 %v2585
  %v2603 = vunpack.c.l.b16 %v2586
  %v2604 = vunpack.c.l.b16 %v2587
  %v2605 = vunpack.c.l.b16 %v2588
  %v2606 = vunpack.c.l.b16 %v2589
  %v2607 = vunpack.c.l.b16 %v2590
  %v2608 = vpack.c.b16 %v2601, %v2600
  %v2609 = vpack.c.b16 %v2603, %v2602
  %v2610 = vpack.c.b16 %v2605, %v2604
  %v2611 = vpack.c.b16 %v2607, %v2606
  %vm2616 = vcmask 523264
  %v2618 = vsel %vm2616, %v2579, 0
  %v2621 = vsel %vm2616, %v2580, 0
  %v2624 = vsel %vm2616, %v2581, 0
  %v2627 = vsel %vm2616, %v2582, 0
  %2629 = vmatpush.bf16.msra.mxu0 0
  %2630 = vmatpush.bf16.msra.mxu0 0
  %2631 = vmatpush.bf16.msra.mxu0 0
  %2632 = vmatpush.bf16.msra.mxu0 0
  %2633 = vmatpush.bf16.msra.mxu0 %v2611
  %2634 = vmatpush.bf16.msra.mxu0 %v2610
  %2635 = vmatpush.bf16.msra.mxu0 %v2609
  %2636 = vmatpush.bf16.msra.mxu0 %v2608
  %2637 = vmatmul.bf16.gmra.mxu0 %v2618
  %v2638 = vpop.f32.mrf.mxu0
  %v2639 = vadd.f32 %v2591, %v2638
  %v2640 = vpop.f32.mrf.mxu0
  %v2641 = vadd.f32 %v2591, %v2640
  %2642 = vmatmul.bf16.gmra.mxu0 %v2621
  %v2643 = vpop.f32.mrf.mxu0
  %v2644 = vadd.f32 %v2591, %v2643
  %v2645 = vpop.f32.mrf.mxu0
  %v2646 = vadd.f32 %v2591, %v2645
  %2647 = vmatmul.bf16.gmra.mxu0 %v2624
  %v2648 = vpop.f32.mrf.mxu0
  %v2649 = vadd.f32 %v2591, %v2648
  %v2650 = vpop.f32.mrf.mxu0
  %v2651 = vadd.f32 %v2591, %v2650
  %2652 = vmatmul.bf16.gmra.mxu0 %v2627
  %v2653 = vpop.f32.mrf.mxu0
  %v2654 = vadd.f32 %v2591, %v2653
  %v2655 = vpop.f32.mrf.mxu0
  %v2656 = vadd.f32 %v2591, %v2655
  %2657 = vdwg.mxu0
  %2658 = vst [vmem:[%s4] sm:$0xff] %v2639
  %2659 = vst [vmem:[%s4 + $0x8] sm:$0xff] %v2641
  %2660 = vst [vmem:[%s4 + $0x10] sm:$0xff] %v2644
  %2661 = vst [vmem:[%s4 + $0x18] sm:$0xff] %v2646
  %2662 = vst [vmem:[%s4 + $0x20] sm:$0xff] %v2649
  %2663 = vst [vmem:[%s4 + $0x28] sm:$0xff] %v2651
  %2664 = vst [vmem:[%s4 + $0x30] sm:$0xff] %v2654
  %2665 = vst [vmem:[%s4 + $0x38] sm:$0xff] %v2656
  // Predicated region
  $region18: #{lstm_module_forward.1} parent=0 // pred_check
    _
  $region19: #{lstm_module_forward.1} parent=0 // pred_check_branch
    %2667 = sbr.rel (0) target = $region21
  $region20: #{lstm_module_forward.1} parent=0 // pred_region
    _
  $region21: #{lstm_module_forward.1} parent=0 // pred_fallthru
    _
  // Predicated region
  $region22: #{lstm_module_forward.1} parent=0 // pred_check
    _
  $region23: #{lstm_module_forward.1} parent=0 // pred_check_branch
    %2669 = sbr.rel (0) target = $region25
  $region24: #{lstm_module_forward.1} parent=0 // pred_region
    _
  $region25: #{lstm_module_forward.1} parent=0 // pred_fallthru
    _

</llo_original>
